<compile_context>
chip_gen: v7x
topology: tpu7x:2x2x1
jax: 0.10.0
libtpu: 0.0.40
codegen_flags: <defaults>
</compile_context>

<pallas_src>
import functools

import jax
import jax.numpy as jnp
import numpy as np
from jax import lax
from jax.experimental import pallas as pl
from jax.experimental.pallas import tpu as pltpu

WORD_DIM = 200  # hard-coded in the PyTorch module: Attention(200, hidden_dim)


def _round_up(x, m):
    return ((x + m - 1) // m) * m


# --------------------------------- kernel ----------------------------------

def decoder_kernel(prev_ref, h0_ref,
                   w_ir_ref, w_iz_ref, w_in_ref,
                   w_hr_ref, w_hz_ref, w_hn_ref,
                   b_r_ref, b_z_ref, b_in_ref, b_hn_ref,
                   proj_all_ref, out_all_ref,
                   w_lin_h_ref, b_lin_ref,
                   pose_ref,
                   *, prev_len, gen_len, enc_len):
    f32 = jnp.float32

    # Whole blocks are VMEM-resident (one pipelined step per batch block).
    w_ir = w_ir_ref[...]; w_iz = w_iz_ref[...]; w_in = w_in_ref[...]   # (OP, H)
    w_hr = w_hr_ref[...]; w_hz = w_hz_ref[...]; w_hn = w_hn_ref[...]   # (H, H)
    b_r = b_r_ref[...]; b_z = b_z_ref[...]                             # (1, H)
    b_in = b_in_ref[...]; b_hn = b_hn_ref[...]                         # (1, H)
    proj_all = proj_all_ref[...]     # (Bb, S+WL, H)  step-invariant (hoisted)
    out_all = out_all_ref[...]       # (Bb, S+WL, OP) pre-projected to O-dim
    w_lin_h = w_lin_h_ref[...]       # (H, OP)
    b_lin = b_lin_ref[...]           # (1, OP)

    bb, seq_all, _ = proj_all.shape
    # Static segment mask for the fused two-head softmax:
    #   columns [0, enc_len)    -> encoder-state head
    #   columns [enc_len, SA)   -> word-embedding head
    col = lax.broadcasted_iota(jnp.int32, (bb, seq_all), 1)
    enc_mask = col < enc_len
    neg_big = jnp.float32(-1e30)

    def gru(x, h):
        # PyTorch GRU cell, gate order (r, z, n); weights pre-split per gate
        # and pre-transposed -> every matmul / elementwise operand is at lane
        # offset 0 (no XLU relayouts on the serial recurrence path).
        r = jax.nn.sigmoid(jnp.dot(x, w_ir, preferred_element_type=f32)
                           + jnp.dot(h, w_hr, preferred_element_type=f32)
                           + b_r)
        z = jax.nn.sigmoid(jnp.dot(x, w_iz, preferred_element_type=f32)
                           + jnp.dot(h, w_hz, preferred_element_type=f32)
                           + b_z)
        gin = jnp.dot(x, w_in, preferred_element_type=f32) + b_in
        ghn = jnp.dot(h, w_hn, preferred_element_type=f32) + b_hn
        n = jnp.tanh(gin + r * ghn)
        return (1.0 - z) * n + z * h

    def seg_softmax(scores, mask):
        s = jnp.where(mask, scores, neg_big)
        m = jnp.max(s, axis=1, keepdims=True)
        e = jnp.exp(s - m)                         # exact 0 outside the segment
        return e * pl.reciprocal(jnp.sum(e, axis=1, keepdims=True), approx=True)

    # ---- prime the GRU on previous_poses (sequential recurrence) -----------
    # TODO(synk): for production prev_len/gen_len, bound unrolling (unroll=2..4
    # or pl.loop) to limit imem / vreg live ranges; full unroll is fine here.
    h = lax.fori_loop(0, prev_len,
                      lambda p, hh: gru(prev_ref[p], hh),
                      h0_ref[...], unroll=True)
    x = prev_ref[prev_len - 1]                     # start_pose (lane-padded)

    # ---- generation loop: serial latency chain, output stays VMEM-resident -
    def step(i, carry):
        h, x = carry
        h = gru(x, h)
        # Fused two-head attention scores over the concatenated sequence axis.
        # TODO(synk): at production S/H move this lane-reduce onto the MXU
        # (proj (S,H) @ h^T) instead of the VPU/XLU multiply-reduce.
        scores = jnp.sum(proj_all * h[:, None, :], axis=2)          # (Bb, SA)
        p = seg_softmax(scores, enc_mask) + seg_softmax(scores, ~enc_mask)
        # Softmax-weighted sum directly in the (padded) output dimension:
        # equals attention @ W_lin_attn + word_attention @ W_lin_wattn.
        attn_o = jnp.sum(out_all * p[:, :, None], axis=1)           # (Bb, OP)
        # TODO(synk): nn.Dropout(0.5) is eval-mode identity here (no RNG mask).
        pose = (jnp.dot(h, w_lin_h, preferred_element_type=f32)
                + attn_o + b_lin)                                   # (Bb, OP)
        pose_ref[i] = pose          # lane-dense (OP = multiple of 128) store
        return h, pose

    lax.fori_loop(0, gen_len, step, (h, x), unroll=True)


# -------------------------------- wrapper -----------------------------------

def decoder_forward(encoder_states, encoder_hidden, previous_poses, words,
                    params, real_poses_len, batch_blocks=1):
    # real_poses_len must be a static Python int: it fixes the output shape
    # and the unrolled in-kernel generation loop.
    if not isinstance(real_poses_len, (int, np.integer)):
        raise TypeError("real_poses_len must be a static Python int")

    S, B, E = encoder_states.shape
    P, _, O = previous_poses.shape
    H = params['w_hh'].shape[1]
    WL = words.shape[0]
    OP = _round_up(O, 128)          # lane-dense output width (exact zero pad)
    pad_o = OP - O
    SA = S + WL
    GEN = int(real_poses_len)

    assert B % batch_blocks == 0
    Bb = B // batch_blocks
    # For >1 batch blocks (v7x: one block per TensorCore) the per-block batch
    # must respect the (8, 128) sublane tiling; otherwise keep the default 1.
    assert batch_blocks == 1 or Bb % 8 == 0

    # glue: encoder_hidden (D*L, B, E//2) -> (B, E); mirrors the PyTorch
    # view / [-1:] / transpose(1,2) / reshape chain.  One-time work -> XLA.
    dh = encoder_hidden.reshape(-1, 2, B, E // 2)[-1:]          # (1, 2, B, E//2)
    dh = jnp.transpose(dh, (0, 2, 1, 3)).reshape(B, E)          # (B, E)
    h0 = dh @ params['w_e2d'].T + params['b_e2d']               # (B, H)

    # Hoisted, step-invariant attention projections, batch-major, fused along
    # the sequence axis (encoder segment first, word segment second).
    proj_enc = (jnp.einsum('sbe,he->bsh', encoder_states, params['w_att'])
                + params['b_att'])                              # (B, S, H)
    proj_words = (jnp.einsum('sbw,hw->bsh', words, params['w_watt'])
                  + params['b_watt'])                           # (B, WL, H)
    proj_all = jnp.concatenate([proj_enc, proj_words], axis=1)  # (B, SA, H)

    # Algebraic hoist of attention -> output projection: project the
    # step-invariant slabs through the attention slices of W_lin once; the
    # kernel's weighted sum then lands directly in the output dimension.
    w_lin = params['w_lin']                                     # (O, 3H)
    w_lin_h_t = w_lin[:, :H].T                                  # (H, O)
    enc_out = jnp.einsum('bsh,ho->bso', proj_enc, w_lin[:, H:2 * H].T)
    words_out = jnp.einsum('bsh,ho->bso', proj_words, w_lin[:, 2 * H:].T)
    out_all = jnp.concatenate([enc_out, words_out], axis=1)     # (B, SA, O)

    # Lane-dense zero padding of the output dimension (exact).
    out_all = jnp.pad(out_all, ((0, 0), (0, 0), (0, pad_o)))    # (B, SA, OP)
    w_lin_h_p = jnp.pad(w_lin_h_t, ((0, 0), (0, pad_o)))        # (H, OP)
    b_lin_p = jnp.pad(params['b_lin'].reshape(1, -1), ((0, 0), (0, pad_o)))
    prev_pad = jnp.pad(previous_poses, ((0, 0), (0, 0), (0, pad_o)))  # (P,B,OP)

    # GRU weights pre-split per gate (r, z, n), pre-transposed; input rows are
    # zero-padded to OP so the (padded) generated pose feeds straight back in.
    w_ih, w_hh = params['w_ih'], params['w_hh']                 # (3H,O),(3H,H)
    w_ir = jnp.pad(w_ih[:H].T, ((0, pad_o), (0, 0)))            # (OP, H)
    w_iz = jnp.pad(w_ih[H:2 * H].T, ((0, pad_o), (0, 0)))
    w_in = jnp.pad(w_ih[2 * H:].T, ((0, pad_o), (0, 0)))
    w_hr, w_hz, w_hn = w_hh[:H].T, w_hh[H:2 * H].T, w_hh[2 * H:].T   # (H, H)
    b_ih, b_hh = params['b_ih'], params['b_hh']
    b_r = (b_ih[:H] + b_hh[:H]).reshape(1, H)
    b_z = (b_ih[H:2 * H] + b_hh[H:2 * H]).reshape(1, H)
    b_in = b_ih[2 * H:].reshape(1, H)
    b_hn = b_hh[2 * H:].reshape(1, H)

    kernel = functools.partial(decoder_kernel, prev_len=P, gen_len=GEN,
                               enc_len=S)

    def rep(shape):
        n = len(shape)
        return pl.BlockSpec(shape, lambda b, _n=n: (0,) * _n)

    def batched(shape, axis):
        # block over the batch dimension `axis`; replicated elsewhere.
        def idx(b, _axis=axis, _n=len(shape)):
            return tuple(b if d == _axis else 0 for d in range(_n))
        return pl.BlockSpec(shape, idx)

    in_specs = [
        batched((P, Bb, OP), 1),       # previous_poses (lane-padded)
        batched((Bb, H), 0),           # h0 after enc_dec_linear
        rep((OP, H)), rep((OP, H)), rep((OP, H)),    # W_ih split (r, z, n)
        rep((H, H)), rep((H, H)), rep((H, H)),       # W_hh split (r, z, n)
        rep((1, H)), rep((1, H)), rep((1, H)), rep((1, H)),   # gate biases
        batched((Bb, SA, H), 0),       # fused attention projections
        batched((Bb, SA, OP), 0),      # fused O-projected slabs
        rep((H, OP)),                  # W_lin hidden slice (padded)
        rep((1, OP)),                  # b_lin (padded)
    ]
    out_spec = batched((GEN, Bb, OP), 1)

    # TODO(synk): at production S/WL on v7x (64 MiB VMEM), trim the resident
    # footprint (single-buffer the large slabs / set vmem_limit_bytes).
    out_pad = pl.pallas_call(
        kernel,
        out_shape=jax.ShapeDtypeStruct((GEN, B, OP), jnp.float32),
        grid=(batch_blocks,),   # batch-parallel axis (2 TCs on v7x); the time
                                # recurrence lives in in-kernel fori_loops
        in_specs=in_specs,
        out_specs=out_spec,
        compiler_params=pltpu.CompilerParams(
            dimension_semantics=("parallel",)),
    )(prev_pad, h0,
      w_ir, w_iz, w_in, w_hr, w_hz, w_hn,
      b_r, b_z, b_in, b_hn,
      proj_all, out_all, w_lin_h_p, b_lin_p)

    return out_pad[:, :, :O]


# ---------------------------- pure-JAX reference ----------------------------

def decoder_reference(encoder_states, encoder_hidden, previous_poses, words,
                      params, real_poses_len):
    S, B, E = encoder_states.shape
    H = params['w_hh'].shape[1]

    dh = encoder_hidden.reshape(-1, 2, B, E // 2)[-1:]
    dh = jnp.transpose(dh, (0, 2, 1, 3)).reshape(B, E)
    h = dh @ params['w_e2d'].T + params['b_e2d']

    def gru(x, h):
        gi = x @ params['w_ih'].T + params['b_ih']
        gh = h @ params['w_hh'].T + params['b_hh']
        r = jax.nn.sigmoid(gi[:, :H] + gh[:, :H])
        z = jax.nn.sigmoid(gi[:, H:2 * H] + gh[:, H:2 * H])
        n = jnp.tanh(gi[:, 2 * H:] + r * gh[:, 2 * H:])
        return (1.0 - z) * n + z * h

    for p in range(previous_poses.shape[0]):
        h = gru(previous_poses[p], h)

    def attn(states, h, w, b):
        proj = jnp.einsum('sbf,hf->bsh', states, w) + b
        sc = jax.nn.softmax(jnp.einsum('bsh,bh->bs', proj, h), axis=1)
        return jnp.einsum('bsh,bs->bh', proj, sc)

    x = previous_poses[-1]
    outs = []
    for _ in range(real_poses_len):
        h = gru(x, h)
        a = attn(encoder_states, h, params['w_att'], params['b_att'])
        wa = attn(words, h, params['w_watt'], params['b_watt'])
        cc = jnp.concatenate([h, a, wa], axis=1)
        x = cc @ params['w_lin'].T + params['b_lin']
        outs.append(x[None])
    return jnp.concatenate(outs, axis=0)


# ------------------------------ param init ----------------------------------

def init_params(key, output_dim, hidden_dim, enc_dim, word_dim=WORD_DIM):
    ks = jax.random.split(key, 12)

    def u(k, shape, fan_in):
        s = 1.0 / np.sqrt(fan_in)
        return jax.random.uniform(k, shape, jnp.float32, -s, s)

    return {
        'w_e2d': u(ks[0], (hidden_dim, enc_dim), enc_dim),
        'b_e2d': u(ks[1], (hidden_dim,), enc_dim),
        'w_ih': u(ks[2], (3 * hidden_dim, output_dim), hidden_dim),
        'w_hh': u(ks[3], (3 * hidden_dim, hidden_dim), hidden_dim),
        'b_ih': u(ks[4], (3 * hidden_dim,), hidden_dim),
        'b_hh': u(ks[5], (3 * hidden_dim,), hidden_dim),
        'w_att': u(ks[6], (hidden_dim, enc_dim), enc_dim),
        'b_att': u(ks[7], (hidden_dim,), enc_dim),
        'w_watt': u(ks[8], (hidden_dim, word_dim), word_dim),
        'b_watt': u(ks[9], (hidden_dim,), word_dim),
        'w_lin': u(ks[10], (output_dim, 3 * hidden_dim), 3 * hidden_dim),
        'b_lin': u(ks[11], (output_dim,), 3 * hidden_dim),
    }


# --------------------------------- main --------------------------------------

if __name__ == "__main__":
    # small deterministic shapes
    S, B, E = 8, 2, 16          # encoder seq, batch, enc_dim (enc_dim even)
    H = 32                      # hidden_dim
    O = 12                      # output_dim (pose dim)
    P = 4                       # previous_poses length
    WL = 6                      # word sequence length
    GEN = 5                     # real_poses_len

    key = jax.random.PRNGKey(0)
    k_es, k_eh, k_pp, k_w, k_par = jax.random.split(key, 5)

    encoder_states = jax.random.normal(k_es, (S, B, E), jnp.float32)
    encoder_hidden = jax.random.normal(k_eh, (2, B, E // 2), jnp.float32)
    previous_poses = jax.random.normal(k_pp, (P, B, O), jnp.float32)
    words = jax.random.normal(k_w, (WL, B, WORD_DIM), jnp.float32)
    params = init_params(k_par, O, H, E)

    poses = decoder_forward(encoder_states, encoder_hidden, previous_poses,
                            words, params, GEN)
    poses = jax.block_until_ready(poses)

    ref = jax.block_until_ready(
        decoder_reference(encoder_states, encoder_hidden, previous_poses,
                          words, params, GEN))

    assert poses.shape == (GEN, B, O), poses.shape
    np.testing.assert_allclose(np.asarray(poses), np.asarray(ref),
                               rtol=1e-2, atol=1e-2)
    print("KERNEL_OK")
</pallas_src>

<mosaic_0001>
module attributes {stable_mosaic.version = 11 : i64} {
  func.func @decoder_kernel(%arg0: i32, %arg1: memref<4x2x128xf32, #tpu.memory_space<vmem>>, %arg2: memref<2x32xf32, #tpu.memory_space<vmem>>, %arg3: memref<128x32xf32, #tpu.memory_space<vmem>>, %arg4: memref<128x32xf32, #tpu.memory_space<vmem>>, %arg5: memref<128x32xf32, #tpu.memory_space<vmem>>, %arg6: memref<32x32xf32, #tpu.memory_space<vmem>>, %arg7: memref<32x32xf32, #tpu.memory_space<vmem>>, %arg8: memref<32x32xf32, #tpu.memory_space<vmem>>, %arg9: memref<1x32xf32, #tpu.memory_space<vmem>>, %arg10: memref<1x32xf32, #tpu.memory_space<vmem>>, %arg11: memref<1x32xf32, #tpu.memory_space<vmem>>, %arg12: memref<1x32xf32, #tpu.memory_space<vmem>>, %arg13: memref<2x14x32xf32, #tpu.memory_space<vmem>>, %arg14: memref<2x14x128xf32, #tpu.memory_space<vmem>>, %arg15: memref<32x128xf32, #tpu.memory_space<vmem>>, %arg16: memref<1x128xf32, #tpu.memory_space<vmem>>, %arg17: memref<5x2x128xf32, #tpu.memory_space<vmem>>) attributes {dimension_semantics = [#tpu.dimension_semantics<parallel>], iteration_bounds = array<i64: 1>, scalar_prefetch = 0 : i64, scratch_operands = 0 : i64, tpu.core_type = #tpu.core_type<tc>, window_params = [{transform_indices = @transform_0, window_bounds = array<i64: 4, 2, 128>}, {transform_indices = @transform_1, window_bounds = array<i64: 2, 32>}, {pipeline_mode = #tpu.pipeline_mode<synchronous>, transform_indices = @transform_2, window_bounds = array<i64: 128, 32>}, {pipeline_mode = #tpu.pipeline_mode<synchronous>, transform_indices = @transform_3, window_bounds = array<i64: 128, 32>}, {pipeline_mode = #tpu.pipeline_mode<synchronous>, transform_indices = @transform_4, window_bounds = array<i64: 128, 32>}, {pipeline_mode = #tpu.pipeline_mode<synchronous>, transform_indices = @transform_5, window_bounds = array<i64: 32, 32>}, {pipeline_mode = #tpu.pipeline_mode<synchronous>, transform_indices = @transform_6, window_bounds = array<i64: 32, 32>}, {pipeline_mode = #tpu.pipeline_mode<synchronous>, transform_indices = @transform_7, window_bounds = array<i64: 32, 32>}, {pipeline_mode = #tpu.pipeline_mode<synchronous>, transform_indices = @transform_8, window_bounds = array<i64: 1, 32>}, {pipeline_mode = #tpu.pipeline_mode<synchronous>, transform_indices = @transform_9, window_bounds = array<i64: 1, 32>}, {pipeline_mode = #tpu.pipeline_mode<synchronous>, transform_indices = @transform_10, window_bounds = array<i64: 1, 32>}, {pipeline_mode = #tpu.pipeline_mode<synchronous>, transform_indices = @transform_11, window_bounds = array<i64: 1, 32>}, {transform_indices = @transform_12, window_bounds = array<i64: 2, 14, 32>}, {transform_indices = @transform_13, window_bounds = array<i64: 2, 14, 128>}, {pipeline_mode = #tpu.pipeline_mode<synchronous>, transform_indices = @transform_14, window_bounds = array<i64: 32, 128>}, {pipeline_mode = #tpu.pipeline_mode<synchronous>, transform_indices = @transform_15, window_bounds = array<i64: 1, 128>}, {transform_indices = @transform_16, window_bounds = array<i64: 5, 2, 128>}]} {
    %c0 = arith.constant 0 : index
    %c0_0 = arith.constant 0 : index
    %0 = vector.load %arg3[%c0, %c0_0] : memref<128x32xf32, #tpu.memory_space<vmem>>, vector<128x32xf32>
    %c0_1 = arith.constant 0 : index
    %c0_2 = arith.constant 0 : index
    %1 = vector.load %arg4[%c0_1, %c0_2] : memref<128x32xf32, #tpu.memory_space<vmem>>, vector<128x32xf32>
    %c0_3 = arith.constant 0 : index
    %c0_4 = arith.constant 0 : index
    %2 = vector.load %arg5[%c0_3, %c0_4] : memref<128x32xf32, #tpu.memory_space<vmem>>, vector<128x32xf32>
    %c0_5 = arith.constant 0 : index
    %c0_6 = arith.constant 0 : index
    %3 = vector.load %arg6[%c0_5, %c0_6] : memref<32x32xf32, #tpu.memory_space<vmem>>, vector<32x32xf32>
    %c0_7 = arith.constant 0 : index
    %c0_8 = arith.constant 0 : index
    %4 = vector.load %arg7[%c0_7, %c0_8] : memref<32x32xf32, #tpu.memory_space<vmem>>, vector<32x32xf32>
    %c0_9 = arith.constant 0 : index
    %c0_10 = arith.constant 0 : index
    %5 = vector.load %arg8[%c0_9, %c0_10] : memref<32x32xf32, #tpu.memory_space<vmem>>, vector<32x32xf32>
    %c0_11 = arith.constant 0 : index
    %c0_12 = arith.constant 0 : index
    %6 = vector.load %arg9[%c0_11, %c0_12] : memref<1x32xf32, #tpu.memory_space<vmem>>, vector<1x32xf32>
    %c0_13 = arith.constant 0 : index
    %c0_14 = arith.constant 0 : index
    %7 = vector.load %arg10[%c0_13, %c0_14] : memref<1x32xf32, #tpu.memory_space<vmem>>, vector<1x32xf32>
    %c0_15 = arith.constant 0 : index
    %c0_16 = arith.constant 0 : index
    %8 = vector.load %arg11[%c0_15, %c0_16] : memref<1x32xf32, #tpu.memory_space<vmem>>, vector<1x32xf32>
    %c0_17 = arith.constant 0 : index
    %c0_18 = arith.constant 0 : index
    %9 = vector.load %arg12[%c0_17, %c0_18] : memref<1x32xf32, #tpu.memory_space<vmem>>, vector<1x32xf32>
    %c0_19 = arith.constant 0 : index
    %c0_20 = arith.constant 0 : index
    %c0_21 = arith.constant 0 : index
    %10 = vector.load %arg13[%c0_19, %c0_20, %c0_21] : memref<2x14x32xf32, #tpu.memory_space<vmem>>, vector<2x14x32xf32>
    %c0_22 = arith.constant 0 : index
    %c0_23 = arith.constant 0 : index
    %c0_24 = arith.constant 0 : index
    %11 = vector.load %arg14[%c0_22, %c0_23, %c0_24] : memref<2x14x128xf32, #tpu.memory_space<vmem>>, vector<2x14x128xf32>
    %c0_25 = arith.constant 0 : index
    %c0_26 = arith.constant 0 : index
    %12 = vector.load %arg15[%c0_25, %c0_26] : memref<32x128xf32, #tpu.memory_space<vmem>>, vector<32x128xf32>
    %c0_27 = arith.constant 0 : index
    %c0_28 = arith.constant 0 : index
    %13 = vector.load %arg16[%c0_27, %c0_28] : memref<1x128xf32, #tpu.memory_space<vmem>>, vector<1x128xf32>
    %14 = tpu.iota {dimensions = array<i32: 1>} : vector<2x14xi32>
    %c8_i32 = arith.constant 8 : i32
    %15 = vector.broadcast %c8_i32 : i32 to vector<2x14xi32>
    %16 = arith.cmpi slt, %14, %15 : vector<2x14xi32>
    %c0_29 = arith.constant 0 : index
    %c0_30 = arith.constant 0 : index
    %17 = vector.load %arg2[%c0_29, %c0_30] : memref<2x32xf32, #tpu.memory_space<vmem>>, vector<2x32xf32>
    %c0_i32 = arith.constant 0 : i32
    %18 = arith.index_cast %c0_i32 : i32 to index
    %c0_31 = arith.constant 0 : index
    %c0_32 = arith.constant 0 : index
    %19 = vector.load %arg1[%18, %c0_31, %c0_32] : memref<4x2x128xf32, #tpu.memory_space<vmem>>, vector<1x2x128xf32>
    %20 = vector.shape_cast %19 : vector<1x2x128xf32> to vector<2x128xf32>
    %cst = arith.constant dense<0.000000e+00> : vector<2x32xf32>
    %21 = tpu.matmul %20, %0, %cst {dimension_numbers = #tpu.dot_dimension_numbers<[1], [0], [0], [1], [0, 0, 1, 1], [], []>} : vector<2x128xf32>, vector<128x32xf32>, vector<2x32xf32> -> vector<2x32xf32>
    %cst_33 = arith.constant dense<0.000000e+00> : vector<2x32xf32>
    %22 = tpu.matmul %17, %3, %cst_33 {dimension_numbers = #tpu.dot_dimension_numbers<[1], [0], [0], [1], [0, 0, 1, 1], [], []>} : vector<2x32xf32>, vector<32x32xf32>, vector<2x32xf32> -> vector<2x32xf32>
    %23 = arith.addf %21, %22 : vector<2x32xf32>
    %24 = vector.broadcast %6 : vector<1x32xf32> to vector<2x32xf32>
    %25 = arith.addf %23, %24 : vector<2x32xf32>
    %26 = arith.negf %25 : vector<2x32xf32>
    %27 = math.exp %26 : vector<2x32xf32>
    %cst_34 = arith.constant 1.000000e+00 : f32
    %28 = vector.broadcast %cst_34 : f32 to vector<2x32xf32>
    %29 = arith.addf %28, %27 : vector<2x32xf32>
    %30 = arith.divf %28, %29 : vector<2x32xf32>
    %cst_35 = arith.constant dense<0.000000e+00> : vector<2x32xf32>
    %31 = tpu.matmul %20, %1, %cst_35 {dimension_numbers = #tpu.dot_dimension_numbers<[1], [0], [0], [1], [0, 0, 1, 1], [], []>} : vector<2x128xf32>, vector<128x32xf32>, vector<2x32xf32> -> vector<2x32xf32>
    %cst_36 = arith.constant dense<0.000000e+00> : vector<2x32xf32>
    %32 = tpu.matmul %17, %4, %cst_36 {dimension_numbers = #tpu.dot_dimension_numbers<[1], [0], [0], [1], [0, 0, 1, 1], [], []>} : vector<2x32xf32>, vector<32x32xf32>, vector<2x32xf32> -> vector<2x32xf32>
    %33 = arith.addf %31, %32 : vector<2x32xf32>
    %34 = vector.broadcast %7 : vector<1x32xf32> to vector<2x32xf32>
    %35 = arith.addf %33, %34 : vector<2x32xf32>
    %36 = arith.negf %35 : vector<2x32xf32>
    %37 = math.exp %36 : vector<2x32xf32>
    %cst_37 = arith.constant 1.000000e+00 : f32
    %38 = vector.broadcast %cst_37 : f32 to vector<2x32xf32>
    %39 = arith.addf %38, %37 : vector<2x32xf32>
    %40 = arith.divf %38, %39 : vector<2x32xf32>
    %cst_38 = arith.constant dense<0.000000e+00> : vector<2x32xf32>
    %41 = tpu.matmul %20, %2, %cst_38 {dimension_numbers = #tpu.dot_dimension_numbers<[1], [0], [0], [1], [0, 0, 1, 1], [], []>} : vector<2x128xf32>, vector<128x32xf32>, vector<2x32xf32> -> vector<2x32xf32>
    %42 = vector.broadcast %8 : vector<1x32xf32> to vector<2x32xf32>
    %43 = arith.addf %41, %42 : vector<2x32xf32>
    %cst_39 = arith.constant dense<0.000000e+00> : vector<2x32xf32>
    %44 = tpu.matmul %17, %5, %cst_39 {dimension_numbers = #tpu.dot_dimension_numbers<[1], [0], [0], [1], [0, 0, 1, 1], [], []>} : vector<2x32xf32>, vector<32x32xf32>, vector<2x32xf32> -> vector<2x32xf32>
    %45 = vector.broadcast %9 : vector<1x32xf32> to vector<2x32xf32>
    %46 = arith.addf %44, %45 : vector<2x32xf32>
    %47 = arith.mulf %30, %46 : vector<2x32xf32>
    %48 = arith.addf %43, %47 : vector<2x32xf32>
    %49 = math.tanh %48 : vector<2x32xf32>
    %cst_40 = arith.constant 1.000000e+00 : f32
    %50 = vector.broadcast %cst_40 : f32 to vector<2x32xf32>
    %51 = arith.subf %50, %40 : vector<2x32xf32>
    %52 = arith.mulf %51, %49 : vector<2x32xf32>
    %53 = arith.mulf %40, %17 : vector<2x32xf32>
    %54 = arith.addf %52, %53 : vector<2x32xf32>
    %c1_i32 = arith.constant 1 : i32
    %55 = arith.index_cast %c1_i32 : i32 to index
    %c0_41 = arith.constant 0 : index
    %c0_42 = arith.constant 0 : index
    %56 = vector.load %arg1[%55, %c0_41, %c0_42] : memref<4x2x128xf32, #tpu.memory_space<vmem>>, vector<1x2x128xf32>
    %57 = vector.shape_cast %56 : vector<1x2x128xf32> to vector<2x128xf32>
    %cst_43 = arith.constant dense<0.000000e+00> : vector<2x32xf32>
    %58 = tpu.matmul %57, %0, %cst_43 {dimension_numbers = #tpu.dot_dimension_numbers<[1], [0], [0], [1], [0, 0, 1, 1], [], []>} : vector<2x128xf32>, vector<128x32xf32>, vector<2x32xf32> -> vector<2x32xf32>
    %cst_44 = arith.constant dense<0.000000e+00> : vector<2x32xf32>
    %59 = tpu.matmul %54, %3, %cst_44 {dimension_numbers = #tpu.dot_dimension_numbers<[1], [0], [0], [1], [0, 0, 1, 1], [], []>} : vector<2x32xf32>, vector<32x32xf32>, vector<2x32xf32> -> vector<2x32xf32>
    %60 = arith.addf %58, %59 : vector<2x32xf32>
    %61 = vector.broadcast %6 : vector<1x32xf32> to vector<2x32xf32>
    %62 = arith.addf %60, %61 : vector<2x32xf32>
    %63 = arith.negf %62 : vector<2x32xf32>
    %64 = math.exp %63 : vector<2x32xf32>
    %cst_45 = arith.constant 1.000000e+00 : f32
    %65 = vector.broadcast %cst_45 : f32 to vector<2x32xf32>
    %66 = arith.addf %65, %64 : vector<2x32xf32>
    %67 = arith.divf %65, %66 : vector<2x32xf32>
    %cst_46 = arith.constant dense<0.000000e+00> : vector<2x32xf32>
    %68 = tpu.matmul %57, %1, %cst_46 {dimension_numbers = #tpu.dot_dimension_numbers<[1], [0], [0], [1], [0, 0, 1, 1], [], []>} : vector<2x128xf32>, vector<128x32xf32>, vector<2x32xf32> -> vector<2x32xf32>
    %cst_47 = arith.constant dense<0.000000e+00> : vector<2x32xf32>
    %69 = tpu.matmul %54, %4, %cst_47 {dimension_numbers = #tpu.dot_dimension_numbers<[1], [0], [0], [1], [0, 0, 1, 1], [], []>} : vector<2x32xf32>, vector<32x32xf32>, vector<2x32xf32> -> vector<2x32xf32>
    %70 = arith.addf %68, %69 : vector<2x32xf32>
    %71 = vector.broadcast %7 : vector<1x32xf32> to vector<2x32xf32>
    %72 = arith.addf %70, %71 : vector<2x32xf32>
    %73 = arith.negf %72 : vector<2x32xf32>
    %74 = math.exp %73 : vector<2x32xf32>
    %cst_48 = arith.constant 1.000000e+00 : f32
    %75 = vector.broadcast %cst_48 : f32 to vector<2x32xf32>
    %76 = arith.addf %75, %74 : vector<2x32xf32>
    %77 = arith.divf %75, %76 : vector<2x32xf32>
    %cst_49 = arith.constant dense<0.000000e+00> : vector<2x32xf32>
    %78 = tpu.matmul %57, %2, %cst_49 {dimension_numbers = #tpu.dot_dimension_numbers<[1], [0], [0], [1], [0, 0, 1, 1], [], []>} : vector<2x128xf32>, vector<128x32xf32>, vector<2x32xf32> -> vector<2x32xf32>
    %79 = vector.broadcast %8 : vector<1x32xf32> to vector<2x32xf32>
    %80 = arith.addf %78, %79 : vector<2x32xf32>
    %cst_50 = arith.constant dense<0.000000e+00> : vector<2x32xf32>
    %81 = tpu.matmul %54, %5, %cst_50 {dimension_numbers = #tpu.dot_dimension_numbers<[1], [0], [0], [1], [0, 0, 1, 1], [], []>} : vector<2x32xf32>, vector<32x32xf32>, vector<2x32xf32> -> vector<2x32xf32>
    %82 = vector.broadcast %9 : vector<1x32xf32> to vector<2x32xf32>
    %83 = arith.addf %81, %82 : vector<2x32xf32>
    %84 = arith.mulf %67, %83 : vector<2x32xf32>
    %85 = arith.addf %80, %84 : vector<2x32xf32>
    %86 = math.tanh %85 : vector<2x32xf32>
    %cst_51 = arith.constant 1.000000e+00 : f32
    %87 = vector.broadcast %cst_51 : f32 to vector<2x32xf32>
    %88 = arith.subf %87, %77 : vector<2x32xf32>
    %89 = arith.mulf %88, %86 : vector<2x32xf32>
    %90 = arith.mulf %77, %54 : vector<2x32xf32>
    %91 = arith.addf %89, %90 : vector<2x32xf32>
    %c2_i32 = arith.constant 2 : i32
    %92 = arith.index_cast %c2_i32 : i32 to index
    %c0_52 = arith.constant 0 : index
    %c0_53 = arith.constant 0 : index
    %93 = vector.load %arg1[%92, %c0_52, %c0_53] : memref<4x2x128xf32, #tpu.memory_space<vmem>>, vector<1x2x128xf32>
    %94 = vector.shape_cast %93 : vector<1x2x128xf32> to vector<2x128xf32>
    %cst_54 = arith.constant dense<0.000000e+00> : vector<2x32xf32>
    %95 = tpu.matmul %94, %0, %cst_54 {dimension_numbers = #tpu.dot_dimension_numbers<[1], [0], [0], [1], [0, 0, 1, 1], [], []>} : vector<2x128xf32>, vector<128x32xf32>, vector<2x32xf32> -> vector<2x32xf32>
    %cst_55 = arith.constant dense<0.000000e+00> : vector<2x32xf32>
    %96 = tpu.matmul %91, %3, %cst_55 {dimension_numbers = #tpu.dot_dimension_numbers<[1], [0], [0], [1], [0, 0, 1, 1], [], []>} : vector<2x32xf32>, vector<32x32xf32>, vector<2x32xf32> -> vector<2x32xf32>
    %97 = arith.addf %95, %96 : vector<2x32xf32>
    %98 = vector.broadcast %6 : vector<1x32xf32> to vector<2x32xf32>
    %99 = arith.addf %97, %98 : vector<2x32xf32>
    %100 = arith.negf %99 : vector<2x32xf32>
    %101 = math.exp %100 : vector<2x32xf32>
    %cst_56 = arith.constant 1.000000e+00 : f32
    %102 = vector.broadcast %cst_56 : f32 to vector<2x32xf32>
    %103 = arith.addf %102, %101 : vector<2x32xf32>
    %104 = arith.divf %102, %103 : vector<2x32xf32>
    %cst_57 = arith.constant dense<0.000000e+00> : vector<2x32xf32>
    %105 = tpu.matmul %94, %1, %cst_57 {dimension_numbers = #tpu.dot_dimension_numbers<[1], [0], [0], [1], [0, 0, 1, 1], [], []>} : vector<2x128xf32>, vector<128x32xf32>, vector<2x32xf32> -> vector<2x32xf32>
    %cst_58 = arith.constant dense<0.000000e+00> : vector<2x32xf32>
    %106 = tpu.matmul %91, %4, %cst_58 {dimension_numbers = #tpu.dot_dimension_numbers<[1], [0], [0], [1], [0, 0, 1, 1], [], []>} : vector<2x32xf32>, vector<32x32xf32>, vector<2x32xf32> -> vector<2x32xf32>
    %107 = arith.addf %105, %106 : vector<2x32xf32>
    %108 = vector.broadcast %7 : vector<1x32xf32> to vector<2x32xf32>
    %109 = arith.addf %107, %108 : vector<2x32xf32>
    %110 = arith.negf %109 : vector<2x32xf32>
    %111 = math.exp %110 : vector<2x32xf32>
    %cst_59 = arith.constant 1.000000e+00 : f32
    %112 = vector.broadcast %cst_59 : f32 to vector<2x32xf32>
    %113 = arith.addf %112, %111 : vector<2x32xf32>
    %114 = arith.divf %112, %113 : vector<2x32xf32>
    %cst_60 = arith.constant dense<0.000000e+00> : vector<2x32xf32>
    %115 = tpu.matmul %94, %2, %cst_60 {dimension_numbers = #tpu.dot_dimension_numbers<[1], [0], [0], [1], [0, 0, 1, 1], [], []>} : vector<2x128xf32>, vector<128x32xf32>, vector<2x32xf32> -> vector<2x32xf32>
    %116 = vector.broadcast %8 : vector<1x32xf32> to vector<2x32xf32>
    %117 = arith.addf %115, %116 : vector<2x32xf32>
    %cst_61 = arith.constant dense<0.000000e+00> : vector<2x32xf32>
    %118 = tpu.matmul %91, %5, %cst_61 {dimension_numbers = #tpu.dot_dimension_numbers<[1], [0], [0], [1], [0, 0, 1, 1], [], []>} : vector<2x32xf32>, vector<32x32xf32>, vector<2x32xf32> -> vector<2x32xf32>
    %119 = vector.broadcast %9 : vector<1x32xf32> to vector<2x32xf32>
    %120 = arith.addf %118, %119 : vector<2x32xf32>
    %121 = arith.mulf %104, %120 : vector<2x32xf32>
    %122 = arith.addf %117, %121 : vector<2x32xf32>
    %123 = math.tanh %122 : vector<2x32xf32>
    %cst_62 = arith.constant 1.000000e+00 : f32
    %124 = vector.broadcast %cst_62 : f32 to vector<2x32xf32>
    %125 = arith.subf %124, %114 : vector<2x32xf32>
    %126 = arith.mulf %125, %123 : vector<2x32xf32>
    %127 = arith.mulf %114, %91 : vector<2x32xf32>
    %128 = arith.addf %126, %127 : vector<2x32xf32>
    %c3_i32 = arith.constant 3 : i32
    %129 = arith.index_cast %c3_i32 : i32 to index
    %c0_63 = arith.constant 0 : index
    %c0_64 = arith.constant 0 : index
    %130 = vector.load %arg1[%129, %c0_63, %c0_64] : memref<4x2x128xf32, #tpu.memory_space<vmem>>, vector<1x2x128xf32>
    %131 = vector.shape_cast %130 : vector<1x2x128xf32> to vector<2x128xf32>
    %cst_65 = arith.constant dense<0.000000e+00> : vector<2x32xf32>
    %132 = tpu.matmul %131, %0, %cst_65 {dimension_numbers = #tpu.dot_dimension_numbers<[1], [0], [0], [1], [0, 0, 1, 1], [], []>} : vector<2x128xf32>, vector<128x32xf32>, vector<2x32xf32> -> vector<2x32xf32>
    %cst_66 = arith.constant dense<0.000000e+00> : vector<2x32xf32>
    %133 = tpu.matmul %128, %3, %cst_66 {dimension_numbers = #tpu.dot_dimension_numbers<[1], [0], [0], [1], [0, 0, 1, 1], [], []>} : vector<2x32xf32>, vector<32x32xf32>, vector<2x32xf32> -> vector<2x32xf32>
    %134 = arith.addf %132, %133 : vector<2x32xf32>
    %135 = vector.broadcast %6 : vector<1x32xf32> to vector<2x32xf32>
    %136 = arith.addf %134, %135 : vector<2x32xf32>
    %137 = arith.negf %136 : vector<2x32xf32>
    %138 = math.exp %137 : vector<2x32xf32>
    %cst_67 = arith.constant 1.000000e+00 : f32
    %139 = vector.broadcast %cst_67 : f32 to vector<2x32xf32>
    %140 = arith.addf %139, %138 : vector<2x32xf32>
    %141 = arith.divf %139, %140 : vector<2x32xf32>
    %cst_68 = arith.constant dense<0.000000e+00> : vector<2x32xf32>
    %142 = tpu.matmul %131, %1, %cst_68 {dimension_numbers = #tpu.dot_dimension_numbers<[1], [0], [0], [1], [0, 0, 1, 1], [], []>} : vector<2x128xf32>, vector<128x32xf32>, vector<2x32xf32> -> vector<2x32xf32>
    %cst_69 = arith.constant dense<0.000000e+00> : vector<2x32xf32>
    %143 = tpu.matmul %128, %4, %cst_69 {dimension_numbers = #tpu.dot_dimension_numbers<[1], [0], [0], [1], [0, 0, 1, 1], [], []>} : vector<2x32xf32>, vector<32x32xf32>, vector<2x32xf32> -> vector<2x32xf32>
    %144 = arith.addf %142, %143 : vector<2x32xf32>
    %145 = vector.broadcast %7 : vector<1x32xf32> to vector<2x32xf32>
    %146 = arith.addf %144, %145 : vector<2x32xf32>
    %147 = arith.negf %146 : vector<2x32xf32>
    %148 = math.exp %147 : vector<2x32xf32>
    %cst_70 = arith.constant 1.000000e+00 : f32
    %149 = vector.broadcast %cst_70 : f32 to vector<2x32xf32>
    %150 = arith.addf %149, %148 : vector<2x32xf32>
    %151 = arith.divf %149, %150 : vector<2x32xf32>
    %cst_71 = arith.constant dense<0.000000e+00> : vector<2x32xf32>
    %152 = tpu.matmul %131, %2, %cst_71 {dimension_numbers = #tpu.dot_dimension_numbers<[1], [0], [0], [1], [0, 0, 1, 1], [], []>} : vector<2x128xf32>, vector<128x32xf32>, vector<2x32xf32> -> vector<2x32xf32>
    %153 = vector.broadcast %8 : vector<1x32xf32> to vector<2x32xf32>
    %154 = arith.addf %152, %153 : vector<2x32xf32>
    %cst_72 = arith.constant dense<0.000000e+00> : vector<2x32xf32>
    %155 = tpu.matmul %128, %5, %cst_72 {dimension_numbers = #tpu.dot_dimension_numbers<[1], [0], [0], [1], [0, 0, 1, 1], [], []>} : vector<2x32xf32>, vector<32x32xf32>, vector<2x32xf32> -> vector<2x32xf32>
    %156 = vector.broadcast %9 : vector<1x32xf32> to vector<2x32xf32>
    %157 = arith.addf %155, %156 : vector<2x32xf32>
    %158 = arith.mulf %141, %157 : vector<2x32xf32>
    %159 = arith.addf %154, %158 : vector<2x32xf32>
    %160 = math.tanh %159 : vector<2x32xf32>
    %cst_73 = arith.constant 1.000000e+00 : f32
    %161 = vector.broadcast %cst_73 : f32 to vector<2x32xf32>
    %162 = arith.subf %161, %151 : vector<2x32xf32>
    %163 = arith.mulf %162, %160 : vector<2x32xf32>
    %164 = arith.mulf %151, %128 : vector<2x32xf32>
    %165 = arith.addf %163, %164 : vector<2x32xf32>
    %c4_i32 = arith.constant 4 : i32
    %c3 = arith.constant 3 : index
    %c0_74 = arith.constant 0 : index
    %c0_75 = arith.constant 0 : index
    %166 = vector.load %arg1[%c3, %c0_74, %c0_75] : memref<4x2x128xf32, #tpu.memory_space<vmem>>, vector<1x2x128xf32>
    %167 = vector.shape_cast %166 : vector<1x2x128xf32> to vector<2x128xf32>
    %cst_76 = arith.constant -1.000000e+30 : f32
    %c0_i32_77 = arith.constant 0 : i32
    %cst_78 = arith.constant dense<0.000000e+00> : vector<2x32xf32>
    %168 = tpu.matmul %167, %0, %cst_78 {dimension_numbers = #tpu.dot_dimension_numbers<[1], [0], [0], [1], [0, 0, 1, 1], [], []>} : vector<2x128xf32>, vector<128x32xf32>, vector<2x32xf32> -> vector<2x32xf32>
    %cst_79 = arith.constant dense<0.000000e+00> : vector<2x32xf32>
    %169 = tpu.matmul %165, %3, %cst_79 {dimension_numbers = #tpu.dot_dimension_numbers<[1], [0], [0], [1], [0, 0, 1, 1], [], []>} : vector<2x32xf32>, vector<32x32xf32>, vector<2x32xf32> -> vector<2x32xf32>
    %170 = arith.addf %168, %169 : vector<2x32xf32>
    %171 = vector.broadcast %6 : vector<1x32xf32> to vector<2x32xf32>
    %172 = arith.addf %170, %171 : vector<2x32xf32>
    %173 = arith.negf %172 : vector<2x32xf32>
    %174 = math.exp %173 : vector<2x32xf32>
    %cst_80 = arith.constant 1.000000e+00 : f32
    %175 = vector.broadcast %cst_80 : f32 to vector<2x32xf32>
    %176 = arith.addf %175, %174 : vector<2x32xf32>
    %177 = arith.divf %175, %176 : vector<2x32xf32>
    %cst_81 = arith.constant dense<0.000000e+00> : vector<2x32xf32>
    %178 = tpu.matmul %167, %1, %cst_81 {dimension_numbers = #tpu.dot_dimension_numbers<[1], [0], [0], [1], [0, 0, 1, 1], [], []>} : vector<2x128xf32>, vector<128x32xf32>, vector<2x32xf32> -> vector<2x32xf32>
    %cst_82 = arith.constant dense<0.000000e+00> : vector<2x32xf32>
    %179 = tpu.matmul %165, %4, %cst_82 {dimension_numbers = #tpu.dot_dimension_numbers<[1], [0], [0], [1], [0, 0, 1, 1], [], []>} : vector<2x32xf32>, vector<32x32xf32>, vector<2x32xf32> -> vector<2x32xf32>
    %180 = arith.addf %178, %179 : vector<2x32xf32>
    %181 = vector.broadcast %7 : vector<1x32xf32> to vector<2x32xf32>
    %182 = arith.addf %180, %181 : vector<2x32xf32>
    %183 = arith.negf %182 : vector<2x32xf32>
    %184 = math.exp %183 : vector<2x32xf32>
    %cst_83 = arith.constant 1.000000e+00 : f32
    %185 = vector.broadcast %cst_83 : f32 to vector<2x32xf32>
    %186 = arith.addf %185, %184 : vector<2x32xf32>
    %187 = arith.divf %185, %186 : vector<2x32xf32>
    %cst_84 = arith.constant dense<0.000000e+00> : vector<2x32xf32>
    %188 = tpu.matmul %167, %2, %cst_84 {dimension_numbers = #tpu.dot_dimension_numbers<[1], [0], [0], [1], [0, 0, 1, 1], [], []>} : vector<2x128xf32>, vector<128x32xf32>, vector<2x32xf32> -> vector<2x32xf32>
    %189 = vector.broadcast %8 : vector<1x32xf32> to vector<2x32xf32>
    %190 = arith.addf %188, %189 : vector<2x32xf32>
    %cst_85 = arith.constant dense<0.000000e+00> : vector<2x32xf32>
    %191 = tpu.matmul %165, %5, %cst_85 {dimension_numbers = #tpu.dot_dimension_numbers<[1], [0], [0], [1], [0, 0, 1, 1], [], []>} : vector<2x32xf32>, vector<32x32xf32>, vector<2x32xf32> -> vector<2x32xf32>
    %192 = vector.broadcast %9 : vector<1x32xf32> to vector<2x32xf32>
    %193 = arith.addf %191, %192 : vector<2x32xf32>
    %194 = arith.mulf %177, %193 : vector<2x32xf32>
    %195 = arith.addf %190, %194 : vector<2x32xf32>
    %196 = math.tanh %195 : vector<2x32xf32>
    %cst_86 = arith.constant 1.000000e+00 : f32
    %197 = vector.broadcast %cst_86 : f32 to vector<2x32xf32>
    %198 = arith.subf %197, %187 : vector<2x32xf32>
    %199 = arith.mulf %198, %196 : vector<2x32xf32>
    %200 = arith.mulf %187, %165 : vector<2x32xf32>
    %201 = arith.addf %199, %200 : vector<2x32xf32>
    %202 = vector.shape_cast %201 : vector<2x32xf32> to vector<2x1x32xf32>
    %203 = vector.broadcast %202 : vector<2x1x32xf32> to vector<2x14x32xf32>
    %204 = arith.mulf %10, %203 : vector<2x14x32xf32>
    %cst_87 = arith.constant dense<0.000000e+00> : vector<2x14xf32>
    %205 = vector.multi_reduction <add>, %204, %cst_87 [2] : vector<2x14x32xf32> to vector<2x14xf32>
    %206 = vector.broadcast %cst_76 : f32 to vector<2x14xf32>
    %207 = arith.select %16, %205, %206 : vector<2x14xi1>, vector<2x14xf32>
    %cst_88 = arith.constant dense<0xFF800000> : vector<2xf32>
    %208 = vector.multi_reduction <maximumf>, %207, %cst_88 [1] : vector<2x14xf32> to vector<2xf32>
    %209 = vector.shape_cast %208 : vector<2xf32> to vector<2x1xf32>
    %210 = vector.broadcast %209 : vector<2x1xf32> to vector<2x14xf32>
    %211 = arith.subf %207, %210 : vector<2x14xf32>
    %212 = math.exp %211 : vector<2x14xf32>
    %cst_89 = arith.constant dense<0.000000e+00> : vector<2xf32>
    %213 = vector.multi_reduction <add>, %212, %cst_89 [1] : vector<2x14xf32> to vector<2xf32>
    %214 = vector.shape_cast %213 : vector<2xf32> to vector<2x1xf32>
    %215 = tpu.reciprocal %214 {approx = true} : vector<2x1xf32> -> vector<2x1xf32>
    %216 = vector.broadcast %215 : vector<2x1xf32> to vector<2x14xf32>
    %217 = arith.mulf %212, %216 : vector<2x14xf32>
    %cst_90 = arith.constant dense<true> : vector<2x14xi1>
    %218 = arith.xori %16, %cst_90 : vector<2x14xi1>
    %219 = vector.broadcast %cst_76 : f32 to vector<2x14xf32>
    %220 = arith.select %218, %205, %219 : vector<2x14xi1>, vector<2x14xf32>
    %cst_91 = arith.constant dense<0xFF800000> : vector<2xf32>
    %221 = vector.multi_reduction <maximumf>, %220, %cst_91 [1] : vector<2x14xf32> to vector<2xf32>
    %222 = vector.shape_cast %221 : vector<2xf32> to vector<2x1xf32>
    %223 = vector.broadcast %222 : vector<2x1xf32> to vector<2x14xf32>
    %224 = arith.subf %220, %223 : vector<2x14xf32>
    %225 = math.exp %224 : vector<2x14xf32>
    %cst_92 = arith.constant dense<0.000000e+00> : vector<2xf32>
    %226 = vector.multi_reduction <add>, %225, %cst_92 [1] : vector<2x14xf32> to vector<2xf32>
    %227 = vector.shape_cast %226 : vector<2xf32> to vector<2x1xf32>
    %228 = tpu.reciprocal %227 {approx = true} : vector<2x1xf32> -> vector<2x1xf32>
    %229 = vector.broadcast %228 : vector<2x1xf32> to vector<2x14xf32>
    %230 = arith.mulf %225, %229 : vector<2x14xf32>
    %231 = arith.addf %217, %230 : vector<2x14xf32>
    %232 = vector.shape_cast %231 : vector<2x14xf32> to vector<2x14x1xf32>
    %233 = vector.broadcast %232 : vector<2x14x1xf32> to vector<2x14x128xf32>
    %234 = arith.mulf %11, %233 : vector<2x14x128xf32>
    %cst_93 = arith.constant dense<0.000000e+00> : vector<2x128xf32>
    %235 = vector.multi_reduction <add>, %234, %cst_93 [1] : vector<2x14x128xf32> to vector<2x128xf32>
    %cst_94 = arith.constant dense<0.000000e+00> : vector<2x128xf32>
    %236 = tpu.matmul %201, %12, %cst_94 {dimension_numbers = #tpu.dot_dimension_numbers<[1], [0], [0], [1], [0, 0, 1, 1], [], []>} : vector<2x32xf32>, vector<32x128xf32>, vector<2x128xf32> -> vector<2x128xf32>
    %237 = arith.addf %236, %235 : vector<2x128xf32>
    %238 = vector.broadcast %13 : vector<1x128xf32> to vector<2x128xf32>
    %239 = arith.addf %237, %238 : vector<2x128xf32>
    %240 = arith.index_cast %c0_i32_77 : i32 to index
    %c0_95 = arith.constant 0 : index
    %c0_96 = arith.constant 0 : index
    %241 = vector.load %arg17[%240, %c0_95, %c0_96] : memref<5x2x128xf32, #tpu.memory_space<vmem>>, vector<1x2x128xf32>
    %242 = vector.shape_cast %241 : vector<1x2x128xf32> to vector<2x128xf32>
    %243 = vector.shape_cast %239 : vector<2x128xf32> to vector<1x2x128xf32>
    tpu.vector_store %arg17[%240, %c0_95, %c0_96], %243 {strides = array<i32>} : memref<5x2x128xf32, #tpu.memory_space<vmem>>, vector<1x2x128xf32>,
    %c1_i32_97 = arith.constant 1 : i32
    %cst_98 = arith.constant dense<0.000000e+00> : vector<2x32xf32>
    %244 = tpu.matmul %239, %0, %cst_98 {dimension_numbers = #tpu.dot_dimension_numbers<[1], [0], [0], [1], [0, 0, 1, 1], [], []>} : vector<2x128xf32>, vector<128x32xf32>, vector<2x32xf32> -> vector<2x32xf32>
    %cst_99 = arith.constant dense<0.000000e+00> : vector<2x32xf32>
    %245 = tpu.matmul %201, %3, %cst_99 {dimension_numbers = #tpu.dot_dimension_numbers<[1], [0], [0], [1], [0, 0, 1, 1], [], []>} : vector<2x32xf32>, vector<32x32xf32>, vector<2x32xf32> -> vector<2x32xf32>
    %246 = arith.addf %244, %245 : vector<2x32xf32>
    %247 = vector.broadcast %6 : vector<1x32xf32> to vector<2x32xf32>
    %248 = arith.addf %246, %247 : vector<2x32xf32>
    %249 = arith.negf %248 : vector<2x32xf32>
    %250 = math.exp %249 : vector<2x32xf32>
    %cst_100 = arith.constant 1.000000e+00 : f32
    %251 = vector.broadcast %cst_100 : f32 to vector<2x32xf32>
    %252 = arith.addf %251, %250 : vector<2x32xf32>
    %253 = arith.divf %251, %252 : vector<2x32xf32>
    %cst_101 = arith.constant dense<0.000000e+00> : vector<2x32xf32>
    %254 = tpu.matmul %239, %1, %cst_101 {dimension_numbers = #tpu.dot_dimension_numbers<[1], [0], [0], [1], [0, 0, 1, 1], [], []>} : vector<2x128xf32>, vector<128x32xf32>, vector<2x32xf32> -> vector<2x32xf32>
    %cst_102 = arith.constant dense<0.000000e+00> : vector<2x32xf32>
    %255 = tpu.matmul %201, %4, %cst_102 {dimension_numbers = #tpu.dot_dimension_numbers<[1], [0], [0], [1], [0, 0, 1, 1], [], []>} : vector<2x32xf32>, vector<32x32xf32>, vector<2x32xf32> -> vector<2x32xf32>
    %256 = arith.addf %254, %255 : vector<2x32xf32>
    %257 = vector.broadcast %7 : vector<1x32xf32> to vector<2x32xf32>
    %258 = arith.addf %256, %257 : vector<2x32xf32>
    %259 = arith.negf %258 : vector<2x32xf32>
    %260 = math.exp %259 : vector<2x32xf32>
    %cst_103 = arith.constant 1.000000e+00 : f32
    %261 = vector.broadcast %cst_103 : f32 to vector<2x32xf32>
    %262 = arith.addf %261, %260 : vector<2x32xf32>
    %263 = arith.divf %261, %262 : vector<2x32xf32>
    %cst_104 = arith.constant dense<0.000000e+00> : vector<2x32xf32>
    %264 = tpu.matmul %239, %2, %cst_104 {dimension_numbers = #tpu.dot_dimension_numbers<[1], [0], [0], [1], [0, 0, 1, 1], [], []>} : vector<2x128xf32>, vector<128x32xf32>, vector<2x32xf32> -> vector<2x32xf32>
    %265 = vector.broadcast %8 : vector<1x32xf32> to vector<2x32xf32>
    %266 = arith.addf %264, %265 : vector<2x32xf32>
    %cst_105 = arith.constant dense<0.000000e+00> : vector<2x32xf32>
    %267 = tpu.matmul %201, %5, %cst_105 {dimension_numbers = #tpu.dot_dimension_numbers<[1], [0], [0], [1], [0, 0, 1, 1], [], []>} : vector<2x32xf32>, vector<32x32xf32>, vector<2x32xf32> -> vector<2x32xf32>
    %268 = vector.broadcast %9 : vector<1x32xf32> to vector<2x32xf32>
    %269 = arith.addf %267, %268 : vector<2x32xf32>
    %270 = arith.mulf %253, %269 : vector<2x32xf32>
    %271 = arith.addf %266, %270 : vector<2x32xf32>
    %272 = math.tanh %271 : vector<2x32xf32>
    %cst_106 = arith.constant 1.000000e+00 : f32
    %273 = vector.broadcast %cst_106 : f32 to vector<2x32xf32>
    %274 = arith.subf %273, %263 : vector<2x32xf32>
    %275 = arith.mulf %274, %272 : vector<2x32xf32>
    %276 = arith.mulf %263, %201 : vector<2x32xf32>
    %277 = arith.addf %275, %276 : vector<2x32xf32>
    %278 = vector.shape_cast %277 : vector<2x32xf32> to vector<2x1x32xf32>
    %279 = vector.broadcast %278 : vector<2x1x32xf32> to vector<2x14x32xf32>
    %280 = arith.mulf %10, %279 : vector<2x14x32xf32>
    %cst_107 = arith.constant dense<0.000000e+00> : vector<2x14xf32>
    %281 = vector.multi_reduction <add>, %280, %cst_107 [2] : vector<2x14x32xf32> to vector<2x14xf32>
    %282 = vector.broadcast %cst_76 : f32 to vector<2x14xf32>
    %283 = arith.select %16, %281, %282 : vector<2x14xi1>, vector<2x14xf32>
    %cst_108 = arith.constant dense<0xFF800000> : vector<2xf32>
    %284 = vector.multi_reduction <maximumf>, %283, %cst_108 [1] : vector<2x14xf32> to vector<2xf32>
    %285 = vector.shape_cast %284 : vector<2xf32> to vector<2x1xf32>
    %286 = vector.broadcast %285 : vector<2x1xf32> to vector<2x14xf32>
    %287 = arith.subf %283, %286 : vector<2x14xf32>
    %288 = math.exp %287 : vector<2x14xf32>
    %cst_109 = arith.constant dense<0.000000e+00> : vector<2xf32>
    %289 = vector.multi_reduction <add>, %288, %cst_109 [1] : vector<2x14xf32> to vector<2xf32>
    %290 = vector.shape_cast %289 : vector<2xf32> to vector<2x1xf32>
    %291 = tpu.reciprocal %290 {approx = true} : vector<2x1xf32> -> vector<2x1xf32>
    %292 = vector.broadcast %291 : vector<2x1xf32> to vector<2x14xf32>
    %293 = arith.mulf %288, %292 : vector<2x14xf32>
    %cst_110 = arith.constant dense<true> : vector<2x14xi1>
    %294 = arith.xori %16, %cst_110 : vector<2x14xi1>
    %295 = vector.broadcast %cst_76 : f32 to vector<2x14xf32>
    %296 = arith.select %294, %281, %295 : vector<2x14xi1>, vector<2x14xf32>
    %cst_111 = arith.constant dense<0xFF800000> : vector<2xf32>
    %297 = vector.multi_reduction <maximumf>, %296, %cst_111 [1] : vector<2x14xf32> to vector<2xf32>
    %298 = vector.shape_cast %297 : vector<2xf32> to vector<2x1xf32>
    %299 = vector.broadcast %298 : vector<2x1xf32> to vector<2x14xf32>
    %300 = arith.subf %296, %299 : vector<2x14xf32>
    %301 = math.exp %300 : vector<2x14xf32>
    %cst_112 = arith.constant dense<0.000000e+00> : vector<2xf32>
    %302 = vector.multi_reduction <add>, %301, %cst_112 [1] : vector<2x14xf32> to vector<2xf32>
    %303 = vector.shape_cast %302 : vector<2xf32> to vector<2x1xf32>
    %304 = tpu.reciprocal %303 {approx = true} : vector<2x1xf32> -> vector<2x1xf32>
    %305 = vector.broadcast %304 : vector<2x1xf32> to vector<2x14xf32>
    %306 = arith.mulf %301, %305 : vector<2x14xf32>
    %307 = arith.addf %293, %306 : vector<2x14xf32>
    %308 = vector.shape_cast %307 : vector<2x14xf32> to vector<2x14x1xf32>
    %309 = vector.broadcast %308 : vector<2x14x1xf32> to vector<2x14x128xf32>
    %310 = arith.mulf %11, %309 : vector<2x14x128xf32>
    %cst_113 = arith.constant dense<0.000000e+00> : vector<2x128xf32>
    %311 = vector.multi_reduction <add>, %310, %cst_113 [1] : vector<2x14x128xf32> to vector<2x128xf32>
    %cst_114 = arith.constant dense<0.000000e+00> : vector<2x128xf32>
    %312 = tpu.matmul %277, %12, %cst_114 {dimension_numbers = #tpu.dot_dimension_numbers<[1], [0], [0], [1], [0, 0, 1, 1], [], []>} : vector<2x32xf32>, vector<32x128xf32>, vector<2x128xf32> -> vector<2x128xf32>
    %313 = arith.addf %312, %311 : vector<2x128xf32>
    %314 = vector.broadcast %13 : vector<1x128xf32> to vector<2x128xf32>
    %315 = arith.addf %313, %314 : vector<2x128xf32>
    %316 = arith.index_cast %c1_i32_97 : i32 to index
    %c0_115 = arith.constant 0 : index
    %c0_116 = arith.constant 0 : index
    %317 = vector.load %arg17[%316, %c0_115, %c0_116] : memref<5x2x128xf32, #tpu.memory_space<vmem>>, vector<1x2x128xf32>
    %318 = vector.shape_cast %317 : vector<1x2x128xf32> to vector<2x128xf32>
    %319 = vector.shape_cast %315 : vector<2x128xf32> to vector<1x2x128xf32>
    tpu.vector_store %arg17[%316, %c0_115, %c0_116], %319 {strides = array<i32>} : memref<5x2x128xf32, #tpu.memory_space<vmem>>, vector<1x2x128xf32>,
    %c2_i32_117 = arith.constant 2 : i32
    %cst_118 = arith.constant dense<0.000000e+00> : vector<2x32xf32>
    %320 = tpu.matmul %315, %0, %cst_118 {dimension_numbers = #tpu.dot_dimension_numbers<[1], [0], [0], [1], [0, 0, 1, 1], [], []>} : vector<2x128xf32>, vector<128x32xf32>, vector<2x32xf32> -> vector<2x32xf32>
    %cst_119 = arith.constant dense<0.000000e+00> : vector<2x32xf32>
    %321 = tpu.matmul %277, %3, %cst_119 {dimension_numbers = #tpu.dot_dimension_numbers<[1], [0], [0], [1], [0, 0, 1, 1], [], []>} : vector<2x32xf32>, vector<32x32xf32>, vector<2x32xf32> -> vector<2x32xf32>
    %322 = arith.addf %320, %321 : vector<2x32xf32>
    %323 = vector.broadcast %6 : vector<1x32xf32> to vector<2x32xf32>
    %324 = arith.addf %322, %323 : vector<2x32xf32>
    %325 = arith.negf %324 : vector<2x32xf32>
    %326 = math.exp %325 : vector<2x32xf32>
    %cst_120 = arith.constant 1.000000e+00 : f32
    %327 = vector.broadcast %cst_120 : f32 to vector<2x32xf32>
    %328 = arith.addf %327, %326 : vector<2x32xf32>
    %329 = arith.divf %327, %328 : vector<2x32xf32>
    %cst_121 = arith.constant dense<0.000000e+00> : vector<2x32xf32>
    %330 = tpu.matmul %315, %1, %cst_121 {dimension_numbers = #tpu.dot_dimension_numbers<[1], [0], [0], [1], [0, 0, 1, 1], [], []>} : vector<2x128xf32>, vector<128x32xf32>, vector<2x32xf32> -> vector<2x32xf32>
    %cst_122 = arith.constant dense<0.000000e+00> : vector<2x32xf32>
    %331 = tpu.matmul %277, %4, %cst_122 {dimension_numbers = #tpu.dot_dimension_numbers<[1], [0], [0], [1], [0, 0, 1, 1], [], []>} : vector<2x32xf32>, vector<32x32xf32>, vector<2x32xf32> -> vector<2x32xf32>
    %332 = arith.addf %330, %331 : vector<2x32xf32>
    %333 = vector.broadcast %7 : vector<1x32xf32> to vector<2x32xf32>
    %334 = arith.addf %332, %333 : vector<2x32xf32>
    %335 = arith.negf %334 : vector<2x32xf32>
    %336 = math.exp %335 : vector<2x32xf32>
    %cst_123 = arith.constant 1.000000e+00 : f32
    %337 = vector.broadcast %cst_123 : f32 to vector<2x32xf32>
    %338 = arith.addf %337, %336 : vector<2x32xf32>
    %339 = arith.divf %337, %338 : vector<2x32xf32>
    %cst_124 = arith.constant dense<0.000000e+00> : vector<2x32xf32>
    %340 = tpu.matmul %315, %2, %cst_124 {dimension_numbers = #tpu.dot_dimension_numbers<[1], [0], [0], [1], [0, 0, 1, 1], [], []>} : vector<2x128xf32>, vector<128x32xf32>, vector<2x32xf32> -> vector<2x32xf32>
    %341 = vector.broadcast %8 : vector<1x32xf32> to vector<2x32xf32>
    %342 = arith.addf %340, %341 : vector<2x32xf32>
    %cst_125 = arith.constant dense<0.000000e+00> : vector<2x32xf32>
    %343 = tpu.matmul %277, %5, %cst_125 {dimension_numbers = #tpu.dot_dimension_numbers<[1], [0], [0], [1], [0, 0, 1, 1], [], []>} : vector<2x32xf32>, vector<32x32xf32>, vector<2x32xf32> -> vector<2x32xf32>
    %344 = vector.broadcast %9 : vector<1x32xf32> to vector<2x32xf32>
    %345 = arith.addf %343, %344 : vector<2x32xf32>
    %346 = arith.mulf %329, %345 : vector<2x32xf32>
    %347 = arith.addf %342, %346 : vector<2x32xf32>
    %348 = math.tanh %347 : vector<2x32xf32>
    %cst_126 = arith.constant 1.000000e+00 : f32
    %349 = vector.broadcast %cst_126 : f32 to vector<2x32xf32>
    %350 = arith.subf %349, %339 : vector<2x32xf32>
    %351 = arith.mulf %350, %348 : vector<2x32xf32>
    %352 = arith.mulf %339, %277 : vector<2x32xf32>
    %353 = arith.addf %351, %352 : vector<2x32xf32>
    %354 = vector.shape_cast %353 : vector<2x32xf32> to vector<2x1x32xf32>
    %355 = vector.broadcast %354 : vector<2x1x32xf32> to vector<2x14x32xf32>
    %356 = arith.mulf %10, %355 : vector<2x14x32xf32>
    %cst_127 = arith.constant dense<0.000000e+00> : vector<2x14xf32>
    %357 = vector.multi_reduction <add>, %356, %cst_127 [2] : vector<2x14x32xf32> to vector<2x14xf32>
    %358 = vector.broadcast %cst_76 : f32 to vector<2x14xf32>
    %359 = arith.select %16, %357, %358 : vector<2x14xi1>, vector<2x14xf32>
    %cst_128 = arith.constant dense<0xFF800000> : vector<2xf32>
    %360 = vector.multi_reduction <maximumf>, %359, %cst_128 [1] : vector<2x14xf32> to vector<2xf32>
    %361 = vector.shape_cast %360 : vector<2xf32> to vector<2x1xf32>
    %362 = vector.broadcast %361 : vector<2x1xf32> to vector<2x14xf32>
    %363 = arith.subf %359, %362 : vector<2x14xf32>
    %364 = math.exp %363 : vector<2x14xf32>
    %cst_129 = arith.constant dense<0.000000e+00> : vector<2xf32>
    %365 = vector.multi_reduction <add>, %364, %cst_129 [1] : vector<2x14xf32> to vector<2xf32>
    %366 = vector.shape_cast %365 : vector<2xf32> to vector<2x1xf32>
    %367 = tpu.reciprocal %366 {approx = true} : vector<2x1xf32> -> vector<2x1xf32>
    %368 = vector.broadcast %367 : vector<2x1xf32> to vector<2x14xf32>
    %369 = arith.mulf %364, %368 : vector<2x14xf32>
    %cst_130 = arith.constant dense<true> : vector<2x14xi1>
    %370 = arith.xori %16, %cst_130 : vector<2x14xi1>
    %371 = vector.broadcast %cst_76 : f32 to vector<2x14xf32>
    %372 = arith.select %370, %357, %371 : vector<2x14xi1>, vector<2x14xf32>
    %cst_131 = arith.constant dense<0xFF800000> : vector<2xf32>
    %373 = vector.multi_reduction <maximumf>, %372, %cst_131 [1] : vector<2x14xf32> to vector<2xf32>
    %374 = vector.shape_cast %373 : vector<2xf32> to vector<2x1xf32>
    %375 = vector.broadcast %374 : vector<2x1xf32> to vector<2x14xf32>
    %376 = arith.subf %372, %375 : vector<2x14xf32>
    %377 = math.exp %376 : vector<2x14xf32>
    %cst_132 = arith.constant dense<0.000000e+00> : vector<2xf32>
    %378 = vector.multi_reduction <add>, %377, %cst_132 [1] : vector<2x14xf32> to vector<2xf32>
    %379 = vector.shape_cast %378 : vector<2xf32> to vector<2x1xf32>
    %380 = tpu.reciprocal %379 {approx = true} : vector<2x1xf32> -> vector<2x1xf32>
    %381 = vector.broadcast %380 : vector<2x1xf32> to vector<2x14xf32>
    %382 = arith.mulf %377, %381 : vector<2x14xf32>
    %383 = arith.addf %369, %382 : vector<2x14xf32>
    %384 = vector.shape_cast %383 : vector<2x14xf32> to vector<2x14x1xf32>
    %385 = vector.broadcast %384 : vector<2x14x1xf32> to vector<2x14x128xf32>
    %386 = arith.mulf %11, %385 : vector<2x14x128xf32>
    %cst_133 = arith.constant dense<0.000000e+00> : vector<2x128xf32>
    %387 = vector.multi_reduction <add>, %386, %cst_133 [1] : vector<2x14x128xf32> to vector<2x128xf32>
    %cst_134 = arith.constant dense<0.000000e+00> : vector<2x128xf32>
    %388 = tpu.matmul %353, %12, %cst_134 {dimension_numbers = #tpu.dot_dimension_numbers<[1], [0], [0], [1], [0, 0, 1, 1], [], []>} : vector<2x32xf32>, vector<32x128xf32>, vector<2x128xf32> -> vector<2x128xf32>
    %389 = arith.addf %388, %387 : vector<2x128xf32>
    %390 = vector.broadcast %13 : vector<1x128xf32> to vector<2x128xf32>
    %391 = arith.addf %389, %390 : vector<2x128xf32>
    %392 = arith.index_cast %c2_i32_117 : i32 to index
    %c0_135 = arith.constant 0 : index
    %c0_136 = arith.constant 0 : index
    %393 = vector.load %arg17[%392, %c0_135, %c0_136] : memref<5x2x128xf32, #tpu.memory_space<vmem>>, vector<1x2x128xf32>
    %394 = vector.shape_cast %393 : vector<1x2x128xf32> to vector<2x128xf32>
    %395 = vector.shape_cast %391 : vector<2x128xf32> to vector<1x2x128xf32>
    tpu.vector_store %arg17[%392, %c0_135, %c0_136], %395 {strides = array<i32>} : memref<5x2x128xf32, #tpu.memory_space<vmem>>, vector<1x2x128xf32>,
    %c3_i32_137 = arith.constant 3 : i32
    %cst_138 = arith.constant dense<0.000000e+00> : vector<2x32xf32>
    %396 = tpu.matmul %391, %0, %cst_138 {dimension_numbers = #tpu.dot_dimension_numbers<[1], [0], [0], [1], [0, 0, 1, 1], [], []>} : vector<2x128xf32>, vector<128x32xf32>, vector<2x32xf32> -> vector<2x32xf32>
    %cst_139 = arith.constant dense<0.000000e+00> : vector<2x32xf32>
    %397 = tpu.matmul %353, %3, %cst_139 {dimension_numbers = #tpu.dot_dimension_numbers<[1], [0], [0], [1], [0, 0, 1, 1], [], []>} : vector<2x32xf32>, vector<32x32xf32>, vector<2x32xf32> -> vector<2x32xf32>
    %398 = arith.addf %396, %397 : vector<2x32xf32>
    %399 = vector.broadcast %6 : vector<1x32xf32> to vector<2x32xf32>
    %400 = arith.addf %398, %399 : vector<2x32xf32>
    %401 = arith.negf %400 : vector<2x32xf32>
    %402 = math.exp %401 : vector<2x32xf32>
    %cst_140 = arith.constant 1.000000e+00 : f32
    %403 = vector.broadcast %cst_140 : f32 to vector<2x32xf32>
    %404 = arith.addf %403, %402 : vector<2x32xf32>
    %405 = arith.divf %403, %404 : vector<2x32xf32>
    %cst_141 = arith.constant dense<0.000000e+00> : vector<2x32xf32>
    %406 = tpu.matmul %391, %1, %cst_141 {dimension_numbers = #tpu.dot_dimension_numbers<[1], [0], [0], [1], [0, 0, 1, 1], [], []>} : vector<2x128xf32>, vector<128x32xf32>, vector<2x32xf32> -> vector<2x32xf32>
    %cst_142 = arith.constant dense<0.000000e+00> : vector<2x32xf32>
    %407 = tpu.matmul %353, %4, %cst_142 {dimension_numbers = #tpu.dot_dimension_numbers<[1], [0], [0], [1], [0, 0, 1, 1], [], []>} : vector<2x32xf32>, vector<32x32xf32>, vector<2x32xf32> -> vector<2x32xf32>
    %408 = arith.addf %406, %407 : vector<2x32xf32>
    %409 = vector.broadcast %7 : vector<1x32xf32> to vector<2x32xf32>
    %410 = arith.addf %408, %409 : vector<2x32xf32>
    %411 = arith.negf %410 : vector<2x32xf32>
    %412 = math.exp %411 : vector<2x32xf32>
    %cst_143 = arith.constant 1.000000e+00 : f32
    %413 = vector.broadcast %cst_143 : f32 to vector<2x32xf32>
    %414 = arith.addf %413, %412 : vector<2x32xf32>
    %415 = arith.divf %413, %414 : vector<2x32xf32>
    %cst_144 = arith.constant dense<0.000000e+00> : vector<2x32xf32>
    %416 = tpu.matmul %391, %2, %cst_144 {dimension_numbers = #tpu.dot_dimension_numbers<[1], [0], [0], [1], [0, 0, 1, 1], [], []>} : vector<2x128xf32>, vector<128x32xf32>, vector<2x32xf32> -> vector<2x32xf32>
    %417 = vector.broadcast %8 : vector<1x32xf32> to vector<2x32xf32>
    %418 = arith.addf %416, %417 : vector<2x32xf32>
    %cst_145 = arith.constant dense<0.000000e+00> : vector<2x32xf32>
    %419 = tpu.matmul %353, %5, %cst_145 {dimension_numbers = #tpu.dot_dimension_numbers<[1], [0], [0], [1], [0, 0, 1, 1], [], []>} : vector<2x32xf32>, vector<32x32xf32>, vector<2x32xf32> -> vector<2x32xf32>
    %420 = vector.broadcast %9 : vector<1x32xf32> to vector<2x32xf32>
    %421 = arith.addf %419, %420 : vector<2x32xf32>
    %422 = arith.mulf %405, %421 : vector<2x32xf32>
    %423 = arith.addf %418, %422 : vector<2x32xf32>
    %424 = math.tanh %423 : vector<2x32xf32>
    %cst_146 = arith.constant 1.000000e+00 : f32
    %425 = vector.broadcast %cst_146 : f32 to vector<2x32xf32>
    %426 = arith.subf %425, %415 : vector<2x32xf32>
    %427 = arith.mulf %426, %424 : vector<2x32xf32>
    %428 = arith.mulf %415, %353 : vector<2x32xf32>
    %429 = arith.addf %427, %428 : vector<2x32xf32>
    %430 = vector.shape_cast %429 : vector<2x32xf32> to vector<2x1x32xf32>
    %431 = vector.broadcast %430 : vector<2x1x32xf32> to vector<2x14x32xf32>
    %432 = arith.mulf %10, %431 : vector<2x14x32xf32>
    %cst_147 = arith.constant dense<0.000000e+00> : vector<2x14xf32>
    %433 = vector.multi_reduction <add>, %432, %cst_147 [2] : vector<2x14x32xf32> to vector<2x14xf32>
    %434 = vector.broadcast %cst_76 : f32 to vector<2x14xf32>
    %435 = arith.select %16, %433, %434 : vector<2x14xi1>, vector<2x14xf32>
    %cst_148 = arith.constant dense<0xFF800000> : vector<2xf32>
    %436 = vector.multi_reduction <maximumf>, %435, %cst_148 [1] : vector<2x14xf32> to vector<2xf32>
    %437 = vector.shape_cast %436 : vector<2xf32> to vector<2x1xf32>
    %438 = vector.broadcast %437 : vector<2x1xf32> to vector<2x14xf32>
    %439 = arith.subf %435, %438 : vector<2x14xf32>
    %440 = math.exp %439 : vector<2x14xf32>
    %cst_149 = arith.constant dense<0.000000e+00> : vector<2xf32>
    %441 = vector.multi_reduction <add>, %440, %cst_149 [1] : vector<2x14xf32> to vector<2xf32>
    %442 = vector.shape_cast %441 : vector<2xf32> to vector<2x1xf32>
    %443 = tpu.reciprocal %442 {approx = true} : vector<2x1xf32> -> vector<2x1xf32>
    %444 = vector.broadcast %443 : vector<2x1xf32> to vector<2x14xf32>
    %445 = arith.mulf %440, %444 : vector<2x14xf32>
    %cst_150 = arith.constant dense<true> : vector<2x14xi1>
    %446 = arith.xori %16, %cst_150 : vector<2x14xi1>
    %447 = vector.broadcast %cst_76 : f32 to vector<2x14xf32>
    %448 = arith.select %446, %433, %447 : vector<2x14xi1>, vector<2x14xf32>
    %cst_151 = arith.constant dense<0xFF800000> : vector<2xf32>
    %449 = vector.multi_reduction <maximumf>, %448, %cst_151 [1] : vector<2x14xf32> to vector<2xf32>
    %450 = vector.shape_cast %449 : vector<2xf32> to vector<2x1xf32>
    %451 = vector.broadcast %450 : vector<2x1xf32> to vector<2x14xf32>
    %452 = arith.subf %448, %451 : vector<2x14xf32>
    %453 = math.exp %452 : vector<2x14xf32>
    %cst_152 = arith.constant dense<0.000000e+00> : vector<2xf32>
    %454 = vector.multi_reduction <add>, %453, %cst_152 [1] : vector<2x14xf32> to vector<2xf32>
    %455 = vector.shape_cast %454 : vector<2xf32> to vector<2x1xf32>
    %456 = tpu.reciprocal %455 {approx = true} : vector<2x1xf32> -> vector<2x1xf32>
    %457 = vector.broadcast %456 : vector<2x1xf32> to vector<2x14xf32>
    %458 = arith.mulf %453, %457 : vector<2x14xf32>
    %459 = arith.addf %445, %458 : vector<2x14xf32>
    %460 = vector.shape_cast %459 : vector<2x14xf32> to vector<2x14x1xf32>
    %461 = vector.broadcast %460 : vector<2x14x1xf32> to vector<2x14x128xf32>
    %462 = arith.mulf %11, %461 : vector<2x14x128xf32>
    %cst_153 = arith.constant dense<0.000000e+00> : vector<2x128xf32>
    %463 = vector.multi_reduction <add>, %462, %cst_153 [1] : vector<2x14x128xf32> to vector<2x128xf32>
    %cst_154 = arith.constant dense<0.000000e+00> : vector<2x128xf32>
    %464 = tpu.matmul %429, %12, %cst_154 {dimension_numbers = #tpu.dot_dimension_numbers<[1], [0], [0], [1], [0, 0, 1, 1], [], []>} : vector<2x32xf32>, vector<32x128xf32>, vector<2x128xf32> -> vector<2x128xf32>
    %465 = arith.addf %464, %463 : vector<2x128xf32>
    %466 = vector.broadcast %13 : vector<1x128xf32> to vector<2x128xf32>
    %467 = arith.addf %465, %466 : vector<2x128xf32>
    %468 = arith.index_cast %c3_i32_137 : i32 to index
    %c0_155 = arith.constant 0 : index
    %c0_156 = arith.constant 0 : index
    %469 = vector.load %arg17[%468, %c0_155, %c0_156] : memref<5x2x128xf32, #tpu.memory_space<vmem>>, vector<1x2x128xf32>
    %470 = vector.shape_cast %469 : vector<1x2x128xf32> to vector<2x128xf32>
    %471 = vector.shape_cast %467 : vector<2x128xf32> to vector<1x2x128xf32>
    tpu.vector_store %arg17[%468, %c0_155, %c0_156], %471 {strides = array<i32>} : memref<5x2x128xf32, #tpu.memory_space<vmem>>, vector<1x2x128xf32>,
    %c4_i32_157 = arith.constant 4 : i32
    %cst_158 = arith.constant dense<0.000000e+00> : vector<2x32xf32>
    %472 = tpu.matmul %467, %0, %cst_158 {dimension_numbers = #tpu.dot_dimension_numbers<[1], [0], [0], [1], [0, 0, 1, 1], [], []>} : vector<2x128xf32>, vector<128x32xf32>, vector<2x32xf32> -> vector<2x32xf32>
    %cst_159 = arith.constant dense<0.000000e+00> : vector<2x32xf32>
    %473 = tpu.matmul %429, %3, %cst_159 {dimension_numbers = #tpu.dot_dimension_numbers<[1], [0], [0], [1], [0, 0, 1, 1], [], []>} : vector<2x32xf32>, vector<32x32xf32>, vector<2x32xf32> -> vector<2x32xf32>
    %474 = arith.addf %472, %473 : vector<2x32xf32>
    %475 = vector.broadcast %6 : vector<1x32xf32> to vector<2x32xf32>
    %476 = arith.addf %474, %475 : vector<2x32xf32>
    %477 = arith.negf %476 : vector<2x32xf32>
    %478 = math.exp %477 : vector<2x32xf32>
    %cst_160 = arith.constant 1.000000e+00 : f32
    %479 = vector.broadcast %cst_160 : f32 to vector<2x32xf32>
    %480 = arith.addf %479, %478 : vector<2x32xf32>
    %481 = arith.divf %479, %480 : vector<2x32xf32>
    %cst_161 = arith.constant dense<0.000000e+00> : vector<2x32xf32>
    %482 = tpu.matmul %467, %1, %cst_161 {dimension_numbers = #tpu.dot_dimension_numbers<[1], [0], [0], [1], [0, 0, 1, 1], [], []>} : vector<2x128xf32>, vector<128x32xf32>, vector<2x32xf32> -> vector<2x32xf32>
    %cst_162 = arith.constant dense<0.000000e+00> : vector<2x32xf32>
    %483 = tpu.matmul %429, %4, %cst_162 {dimension_numbers = #tpu.dot_dimension_numbers<[1], [0], [0], [1], [0, 0, 1, 1], [], []>} : vector<2x32xf32>, vector<32x32xf32>, vector<2x32xf32> -> vector<2x32xf32>
    %484 = arith.addf %482, %483 : vector<2x32xf32>
    %485 = vector.broadcast %7 : vector<1x32xf32> to vector<2x32xf32>
    %486 = arith.addf %484, %485 : vector<2x32xf32>
    %487 = arith.negf %486 : vector<2x32xf32>
    %488 = math.exp %487 : vector<2x32xf32>
    %cst_163 = arith.constant 1.000000e+00 : f32
    %489 = vector.broadcast %cst_163 : f32 to vector<2x32xf32>
    %490 = arith.addf %489, %488 : vector<2x32xf32>
    %491 = arith.divf %489, %490 : vector<2x32xf32>
    %cst_164 = arith.constant dense<0.000000e+00> : vector<2x32xf32>
    %492 = tpu.matmul %467, %2, %cst_164 {dimension_numbers = #tpu.dot_dimension_numbers<[1], [0], [0], [1], [0, 0, 1, 1], [], []>} : vector<2x128xf32>, vector<128x32xf32>, vector<2x32xf32> -> vector<2x32xf32>
    %493 = vector.broadcast %8 : vector<1x32xf32> to vector<2x32xf32>
    %494 = arith.addf %492, %493 : vector<2x32xf32>
    %cst_165 = arith.constant dense<0.000000e+00> : vector<2x32xf32>
    %495 = tpu.matmul %429, %5, %cst_165 {dimension_numbers = #tpu.dot_dimension_numbers<[1], [0], [0], [1], [0, 0, 1, 1], [], []>} : vector<2x32xf32>, vector<32x32xf32>, vector<2x32xf32> -> vector<2x32xf32>
    %496 = vector.broadcast %9 : vector<1x32xf32> to vector<2x32xf32>
    %497 = arith.addf %495, %496 : vector<2x32xf32>
    %498 = arith.mulf %481, %497 : vector<2x32xf32>
    %499 = arith.addf %494, %498 : vector<2x32xf32>
    %500 = math.tanh %499 : vector<2x32xf32>
    %cst_166 = arith.constant 1.000000e+00 : f32
    %501 = vector.broadcast %cst_166 : f32 to vector<2x32xf32>
    %502 = arith.subf %501, %491 : vector<2x32xf32>
    %503 = arith.mulf %502, %500 : vector<2x32xf32>
    %504 = arith.mulf %491, %429 : vector<2x32xf32>
    %505 = arith.addf %503, %504 : vector<2x32xf32>
    %506 = vector.shape_cast %505 : vector<2x32xf32> to vector<2x1x32xf32>
    %507 = vector.broadcast %506 : vector<2x1x32xf32> to vector<2x14x32xf32>
    %508 = arith.mulf %10, %507 : vector<2x14x32xf32>
    %cst_167 = arith.constant dense<0.000000e+00> : vector<2x14xf32>
    %509 = vector.multi_reduction <add>, %508, %cst_167 [2] : vector<2x14x32xf32> to vector<2x14xf32>
    %510 = vector.broadcast %cst_76 : f32 to vector<2x14xf32>
    %511 = arith.select %16, %509, %510 : vector<2x14xi1>, vector<2x14xf32>
    %cst_168 = arith.constant dense<0xFF800000> : vector<2xf32>
    %512 = vector.multi_reduction <maximumf>, %511, %cst_168 [1] : vector<2x14xf32> to vector<2xf32>
    %513 = vector.shape_cast %512 : vector<2xf32> to vector<2x1xf32>
    %514 = vector.broadcast %513 : vector<2x1xf32> to vector<2x14xf32>
    %515 = arith.subf %511, %514 : vector<2x14xf32>
    %516 = math.exp %515 : vector<2x14xf32>
    %cst_169 = arith.constant dense<0.000000e+00> : vector<2xf32>
    %517 = vector.multi_reduction <add>, %516, %cst_169 [1] : vector<2x14xf32> to vector<2xf32>
    %518 = vector.shape_cast %517 : vector<2xf32> to vector<2x1xf32>
    %519 = tpu.reciprocal %518 {approx = true} : vector<2x1xf32> -> vector<2x1xf32>
    %520 = vector.broadcast %519 : vector<2x1xf32> to vector<2x14xf32>
    %521 = arith.mulf %516, %520 : vector<2x14xf32>
    %cst_170 = arith.constant dense<true> : vector<2x14xi1>
    %522 = arith.xori %16, %cst_170 : vector<2x14xi1>
    %523 = vector.broadcast %cst_76 : f32 to vector<2x14xf32>
    %524 = arith.select %522, %509, %523 : vector<2x14xi1>, vector<2x14xf32>
    %cst_171 = arith.constant dense<0xFF800000> : vector<2xf32>
    %525 = vector.multi_reduction <maximumf>, %524, %cst_171 [1] : vector<2x14xf32> to vector<2xf32>
    %526 = vector.shape_cast %525 : vector<2xf32> to vector<2x1xf32>
    %527 = vector.broadcast %526 : vector<2x1xf32> to vector<2x14xf32>
    %528 = arith.subf %524, %527 : vector<2x14xf32>
    %529 = math.exp %528 : vector<2x14xf32>
    %cst_172 = arith.constant dense<0.000000e+00> : vector<2xf32>
    %530 = vector.multi_reduction <add>, %529, %cst_172 [1] : vector<2x14xf32> to vector<2xf32>
    %531 = vector.shape_cast %530 : vector<2xf32> to vector<2x1xf32>
    %532 = tpu.reciprocal %531 {approx = true} : vector<2x1xf32> -> vector<2x1xf32>
    %533 = vector.broadcast %532 : vector<2x1xf32> to vector<2x14xf32>
    %534 = arith.mulf %529, %533 : vector<2x14xf32>
    %535 = arith.addf %521, %534 : vector<2x14xf32>
    %536 = vector.shape_cast %535 : vector<2x14xf32> to vector<2x14x1xf32>
    %537 = vector.broadcast %536 : vector<2x14x1xf32> to vector<2x14x128xf32>
    %538 = arith.mulf %11, %537 : vector<2x14x128xf32>
    %cst_173 = arith.constant dense<0.000000e+00> : vector<2x128xf32>
    %539 = vector.multi_reduction <add>, %538, %cst_173 [1] : vector<2x14x128xf32> to vector<2x128xf32>
    %cst_174 = arith.constant dense<0.000000e+00> : vector<2x128xf32>
    %540 = tpu.matmul %505, %12, %cst_174 {dimension_numbers = #tpu.dot_dimension_numbers<[1], [0], [0], [1], [0, 0, 1, 1], [], []>} : vector<2x32xf32>, vector<32x128xf32>, vector<2x128xf32> -> vector<2x128xf32>
    %541 = arith.addf %540, %539 : vector<2x128xf32>
    %542 = vector.broadcast %13 : vector<1x128xf32> to vector<2x128xf32>
    %543 = arith.addf %541, %542 : vector<2x128xf32>
    %544 = arith.index_cast %c4_i32_157 : i32 to index
    %c0_175 = arith.constant 0 : index
    %c0_176 = arith.constant 0 : index
    %545 = vector.load %arg17[%544, %c0_175, %c0_176] : memref<5x2x128xf32, #tpu.memory_space<vmem>>, vector<1x2x128xf32>
    %546 = vector.shape_cast %545 : vector<1x2x128xf32> to vector<2x128xf32>
    %547 = vector.shape_cast %543 : vector<2x128xf32> to vector<1x2x128xf32>
    tpu.vector_store %arg17[%544, %c0_175, %c0_176], %547 {strides = array<i32>} : memref<5x2x128xf32, #tpu.memory_space<vmem>>, vector<1x2x128xf32>,
    %c5_i32 = arith.constant 5 : i32
    return
  }
  func.func @transform_0(%arg0: i32) -> (i32, i32, i32) {
    %c0_i32 = arith.constant 0 : i32
    %c0_i32_0 = arith.constant 0 : i32
    %c0_i32_1 = arith.constant 0 : i32
    return %c0_i32, %arg0, %c0_i32_0 : i32, i32, i32
  }
  func.func @transform_1(%arg0: i32) -> (i32, i32) {
    %c0_i32 = arith.constant 0 : i32
    %c0_i32_0 = arith.constant 0 : i32
    return %arg0, %c0_i32 : i32, i32
  }
  func.func @transform_2(%arg0: i32) -> (i32, i32) {
    %c0_i32 = arith.constant 0 : i32
    %c0_i32_0 = arith.constant 0 : i32
    %c0_i32_1 = arith.constant 0 : i32
    return %c0_i32, %c0_i32_0 : i32, i32
  }
  func.func @transform_3(%arg0: i32) -> (i32, i32) {
    %c0_i32 = arith.constant 0 : i32
    %c0_i32_0 = arith.constant 0 : i32
    %c0_i32_1 = arith.constant 0 : i32
    return %c0_i32, %c0_i32_0 : i32, i32
  }
  func.func @transform_4(%arg0: i32) -> (i32, i32) {
    %c0_i32 = arith.constant 0 : i32
    %c0_i32_0 = arith.constant 0 : i32
    %c0_i32_1 = arith.constant 0 : i32
    return %c0_i32, %c0_i32_0 : i32, i32
  }
  func.func @transform_5(%arg0: i32) -> (i32, i32) {
    %c0_i32 = arith.constant 0 : i32
    %c0_i32_0 = arith.constant 0 : i32
    %c0_i32_1 = arith.constant 0 : i32
    return %c0_i32, %c0_i32_0 : i32, i32
  }
  func.func @transform_6(%arg0: i32) -> (i32, i32) {
    %c0_i32 = arith.constant 0 : i32
    %c0_i32_0 = arith.constant 0 : i32
    %c0_i32_1 = arith.constant 0 : i32
    return %c0_i32, %c0_i32_0 : i32, i32
  }
  func.func @transform_7(%arg0: i32) -> (i32, i32) {
    %c0_i32 = arith.constant 0 : i32
    %c0_i32_0 = arith.constant 0 : i32
    %c0_i32_1 = arith.constant 0 : i32
    return %c0_i32, %c0_i32_0 : i32, i32
  }
  func.func @transform_8(%arg0: i32) -> (i32, i32) {
    %c0_i32 = arith.constant 0 : i32
    %c0_i32_0 = arith.constant 0 : i32
    %c0_i32_1 = arith.constant 0 : i32
    return %c0_i32, %c0_i32_0 : i32, i32
  }
  func.func @transform_9(%arg0: i32) -> (i32, i32) {
    %c0_i32 = arith.constant 0 : i32
    %c0_i32_0 = arith.constant 0 : i32
    %c0_i32_1 = arith.constant 0 : i32
    return %c0_i32, %c0_i32_0 : i32, i32
  }
  func.func @transform_10(%arg0: i32) -> (i32, i32) {
    %c0_i32 = arith.constant 0 : i32
    %c0_i32_0 = arith.constant 0 : i32
    %c0_i32_1 = arith.constant 0 : i32
    return %c0_i32, %c0_i32_0 : i32, i32
  }
  func.func @transform_11(%arg0: i32) -> (i32, i32) {
    %c0_i32 = arith.constant 0 : i32
    %c0_i32_0 = arith.constant 0 : i32
    %c0_i32_1 = arith.constant 0 : i32
    return %c0_i32, %c0_i32_0 : i32, i32
  }
  func.func @transform_12(%arg0: i32) -> (i32, i32, i32) {
    %c0_i32 = arith.constant 0 : i32
    %c0_i32_0 = arith.constant 0 : i32
    %c0_i32_1 = arith.constant 0 : i32
    return %arg0, %c0_i32, %c0_i32_0 : i32, i32, i32
  }
  func.func @transform_13(%arg0: i32) -> (i32, i32, i32) {
    %c0_i32 = arith.constant 0 : i32
    %c0_i32_0 = arith.constant 0 : i32
    %c0_i32_1 = arith.constant 0 : i32
    return %arg0, %c0_i32, %c0_i32_0 : i32, i32, i32
  }
  func.func @transform_14(%arg0: i32) -> (i32, i32) {
    %c0_i32 = arith.constant 0 : i32
    %c0_i32_0 = arith.constant 0 : i32
    %c0_i32_1 = arith.constant 0 : i32
    return %c0_i32, %c0_i32_0 : i32, i32
  }
  func.func @transform_15(%arg0: i32) -> (i32, i32) {
    %c0_i32 = arith.constant 0 : i32
    %c0_i32_0 = arith.constant 0 : i32
    %c0_i32_1 = arith.constant 0 : i32
    return %c0_i32, %c0_i32_0 : i32, i32
  }
  func.func @transform_16(%arg0: i32) -> (i32, i32, i32) {
    %c0_i32 = arith.constant 0 : i32
    %c0_i32_0 = arith.constant 0 : i32
    %c0_i32_1 = arith.constant 0 : i32
    return %c0_i32, %arg0, %c0_i32_0 : i32, i32, i32
  }
}

</mosaic_0001>

<llo_original>
// kernel: tpu_custom_call.1
$region0: #{tpu_custom_call.1}
  #allocation0 [shape = 'u32[]', space=smem, size = 0x4, offset = 0x4, fixed_abs, tag = 'smem constant byte address 0x4 - core index']
  #allocation1 [shape = 'u32[144,128]{1,0:T(1,128)}', space=vmem, size = 0x12000, scoped, tag = 'internal scratch']
  %s0 = inlined_call_operand.vmem [shape: f32[4,2,128], index: 0, kind: input, shape index: {}]
  %s1 = inlined_call_operand.vmem [shape: f32[2,32], index: 1, kind: input, shape index: {}]
  %s2 = inlined_call_operand.vmem [shape: f32[128,32], index: 2, kind: input, shape index: {}]
  %s3 = inlined_call_operand.vmem [shape: f32[128,32], index: 3, kind: input, shape index: {}]
  %s4 = inlined_call_operand.vmem [shape: f32[128,32], index: 4, kind: input, shape index: {}]
  %s5 = inlined_call_operand.vmem [shape: f32[32,32], index: 5, kind: input, shape index: {}]
  %s6 = inlined_call_operand.vmem [shape: f32[32,32], index: 6, kind: input, shape index: {}]
  %s7 = inlined_call_operand.vmem [shape: f32[32,32], index: 7, kind: input, shape index: {}]
  %s8 = inlined_call_operand.vmem [shape: f32[1,32], index: 8, kind: input, shape index: {}]
  %s9 = inlined_call_operand.vmem [shape: f32[1,32], index: 9, kind: input, shape index: {}]
  %s10 = inlined_call_operand.vmem [shape: f32[1,32], index: 10, kind: input, shape index: {}]
  %s11 = inlined_call_operand.vmem [shape: f32[1,32], index: 11, kind: input, shape index: {}]
  %s12 = inlined_call_operand.vmem [shape: f32[2,14,32], index: 12, kind: input, shape index: {}]
  %s13 = inlined_call_operand.vmem [shape: f32[2,14,128], index: 13, kind: input, shape index: {}]
  %s14 = inlined_call_operand.vmem [shape: f32[32,128], index: 14, kind: input, shape index: {}]
  %s15 = inlined_call_operand.vmem [shape: f32[1,128], index: 15, kind: input, shape index: {}]
  %s16 = inlined_call_operand.hbm [shape: f32[5,2,128], index: 16, kind: output, shape index: {}]
  %s17 = sld [smem:[#allocation0]]
  $region74: #{tpu_custom_call.1} parent=0
    _
  %s19 = ssub.s32 1, %s17
  %s20 = scalar_select 0, %s19, %s17
  $region1: #{tpu_custom_call.1} parent=0
    #allocation2 [shape = 'u8[5120]{0}', space=vmem, size = 0x1400, scoped, tag = 'output window, operand 0, single buffered']
    #allocation3 [shape = 's32[1]{0}', space=sflag, size = 0x4, scoped, tag = 'scoped memory for tpu_custom_call.1']
    %21 = vsyncpa [#allocation3], 0
    // Predicated region
    $region2: #{tpu_custom_call.1} parent=1 // pred_check
      _
    $region3: #{tpu_custom_call.1} parent=1 // pred_check_branch
      %23 = sbr.rel (0) target = $region5
    $region4: #{tpu_custom_call.1} parent=1 // pred_region
      _
    $region5: #{tpu_custom_call.1} parent=1 // pred_fallthru
      _
    // Predicated region
    $region6: #{tpu_custom_call.1} parent=1 // pred_check
      _
    $region7: #{tpu_custom_call.1} parent=1 // pred_check_branch
      %25 = sbr.rel (0) target = $region9
    $region8: #{tpu_custom_call.1} parent=1 // pred_region
      _
    $region9: #{tpu_custom_call.1} parent=1 // pred_fallthru
      _
    // Predicated region
    $region10: #{tpu_custom_call.1} parent=1 // pred_check
      _
    $region11: #{tpu_custom_call.1} parent=1 // pred_check_branch
      %27 = sbr.rel (0) target = $region13
    $region12: #{tpu_custom_call.1} parent=1 // pred_region
      _
    $region13: #{tpu_custom_call.1} parent=1 // pred_fallthru
      _
    // Predicated region
    $region14: #{tpu_custom_call.1} parent=1 // pred_check
      _
    $region15: #{tpu_custom_call.1} parent=1 // pred_check_branch
      %29 = sbr.rel (0) target = $region17
    $region16: #{tpu_custom_call.1} parent=1 // pred_region
      _
    $region17: #{tpu_custom_call.1} parent=1 // pred_fallthru
      _
    // Predicated region
    $region18: #{tpu_custom_call.1} parent=1 // pred_check
      _
    $region19: #{tpu_custom_call.1} parent=1 // pred_check_branch
      %31 = sbr.rel (0) target = $region21
    $region20: #{tpu_custom_call.1} parent=1 // pred_region
      _
    $region21: #{tpu_custom_call.1} parent=1 // pred_fallthru
      _
    // Predicated region
    $region22: #{tpu_custom_call.1} parent=1 // pred_check
      _
    $region23: #{tpu_custom_call.1} parent=1 // pred_check_branch
      %33 = sbr.rel (0) target = $region25
    $region24: #{tpu_custom_call.1} parent=1 // pred_region
      _
    $region25: #{tpu_custom_call.1} parent=1 // pred_fallthru
      _
    // Predicated region
    $region26: #{tpu_custom_call.1} parent=1 // pred_check
      _
    $region27: #{tpu_custom_call.1} parent=1 // pred_check_branch
      %35 = sbr.rel (0) target = $region29
    $region28: #{tpu_custom_call.1} parent=1 // pred_region
      _
    $region29: #{tpu_custom_call.1} parent=1 // pred_fallthru
      _
    // Predicated region
    $region30: #{tpu_custom_call.1} parent=1 // pred_check
      _
    $region31: #{tpu_custom_call.1} parent=1 // pred_check_branch
      %37 = sbr.rel (0) target = $region33
    $region32: #{tpu_custom_call.1} parent=1 // pred_region
      _
    $region33: #{tpu_custom_call.1} parent=1 // pred_fallthru
      _
    // Predicated region
    $region34: #{tpu_custom_call.1} parent=1 // pred_check
      _
    $region35: #{tpu_custom_call.1} parent=1 // pred_check_branch
      %39 = sbr.rel (0) target = $region37
    $region36: #{tpu_custom_call.1} parent=1 // pred_region
      _
    $region37: #{tpu_custom_call.1} parent=1 // pred_fallthru
      _
    // Predicated region
    $region38: #{tpu_custom_call.1} parent=1 // pred_check
      _
    $region39: #{tpu_custom_call.1} parent=1 // pred_check_branch
      %41 = sbr.rel (0) target = $region41
    $region40: #{tpu_custom_call.1} parent=1 // pred_region
      _
    $region41: #{tpu_custom_call.1} parent=1 // pred_fallthru
      _
    // Predicated region
    $region42: #{tpu_custom_call.1} parent=1 // pred_check
      _
    $region43: #{tpu_custom_call.1} parent=1 // pred_check_branch
      %43 = sbr.rel (0) target = $region45
    $region44: #{tpu_custom_call.1} parent=1 // pred_region
      _
    $region45: #{tpu_custom_call.1} parent=1 // pred_fallthru
      _
    // Predicated region
    $region46: #{tpu_custom_call.1} parent=1 // pred_check
      _
    $region47: #{tpu_custom_call.1} parent=1 // pred_check_branch
      %45 = sbr.rel (0) target = $region49
    $region48: #{tpu_custom_call.1} parent=1 // pred_region
      _
    $region49: #{tpu_custom_call.1} parent=1 // pred_fallthru
      _
    // Predicated region
    $region50: #{tpu_custom_call.1} parent=1 // pred_check
      _
    $region51: #{tpu_custom_call.1} parent=1 // pred_check_branch
      %47 = sbr.rel (0) target = $region53
    $region52: #{tpu_custom_call.1} parent=1 // pred_region
      _
    $region53: #{tpu_custom_call.1} parent=1 // pred_fallthru
      _
    // Predicated region
    $region54: #{tpu_custom_call.1} parent=1 // pred_check
      _
    $region55: #{tpu_custom_call.1} parent=1 // pred_check_branch
      %49 = sbr.rel (0) target = $region57
    $region56: #{tpu_custom_call.1} parent=1 // pred_region
      _
    $region57: #{tpu_custom_call.1} parent=1 // pred_fallthru
      _
    // Predicated region
    $region58: #{tpu_custom_call.1} parent=1 // pred_check
      _
    $region59: #{tpu_custom_call.1} parent=1 // pred_check_branch
      %51 = sbr.rel (0) target = $region61
    $region60: #{tpu_custom_call.1} parent=1 // pred_region
      _
    $region61: #{tpu_custom_call.1} parent=1 // pred_fallthru
      _
    // Predicated region
    $region62: #{tpu_custom_call.1} parent=1 // pred_check
      _
    $region63: #{tpu_custom_call.1} parent=1 // pred_check_branch
      %53 = sbr.rel (0) target = $region65
    $region64: #{tpu_custom_call.1} parent=1 // pred_region
      _
    $region65: #{tpu_custom_call.1} parent=1 // pred_fallthru
      _
    %v54 = vld [vmem:[%s2] sm:$0xff]
    %v55 = vld [vmem:[%s2 + $0x8] sm:$0xff]
    %v56 = vld [vmem:[%s2 + $0x10] sm:$0xff]
    %v57 = vld [vmem:[%s2 + $0x18] sm:$0xff]
    %v58 = vld [vmem:[%s2 + $0x20] sm:$0xff]
    %v59 = vld [vmem:[%s2 + $0x28] sm:$0xff]
    %v60 = vld [vmem:[%s2 + $0x30] sm:$0xff]
    %v61 = vld [vmem:[%s2 + $0x38] sm:$0xff]
    %v62 = vld [vmem:[%s2 + $0x40] sm:$0xff]
    %v63 = vld [vmem:[%s2 + $0x48] sm:$0xff]
    %v64 = vld [vmem:[%s2 + $0x50] sm:$0xff]
    %v65 = vld [vmem:[%s2 + $0x58] sm:$0xff]
    %v66 = vld [vmem:[%s2 + $0x60] sm:$0xff]
    %v67 = vld [vmem:[%s2 + $0x68] sm:$0xff]
    %v68 = vld [vmem:[%s2 + $0x70] sm:$0xff]
    %v69 = vld [vmem:[%s2 + $0x78] sm:$0xff]
    %v70 = vld [vmem:[%s3] sm:$0xff]
    %v71 = vld [vmem:[%s3 + $0x8] sm:$0xff]
    %v72 = vld [vmem:[%s3 + $0x10] sm:$0xff]
    %v73 = vld [vmem:[%s3 + $0x18] sm:$0xff]
    %v74 = vld [vmem:[%s3 + $0x20] sm:$0xff]
    %v75 = vld [vmem:[%s3 + $0x28] sm:$0xff]
    %v76 = vld [vmem:[%s3 + $0x30] sm:$0xff]
    %v77 = vld [vmem:[%s3 + $0x38] sm:$0xff]
    %v78 = vld [vmem:[%s3 + $0x40] sm:$0xff]
    %v79 = vld [vmem:[%s3 + $0x48] sm:$0xff]
    %v80 = vld [vmem:[%s3 + $0x50] sm:$0xff]
    %v81 = vld [vmem:[%s3 + $0x58] sm:$0xff]
    %v82 = vld [vmem:[%s3 + $0x60] sm:$0xff]
    %v83 = vld [vmem:[%s3 + $0x68] sm:$0xff]
    %v84 = vld [vmem:[%s3 + $0x70] sm:$0xff]
    %v85 = vld [vmem:[%s3 + $0x78] sm:$0xff]
    %v86 = vld [vmem:[%s4] sm:$0xff]
    %v87 = vld [vmem:[%s4 + $0x8] sm:$0xff]
    %v88 = vld [vmem:[%s4 + $0x10] sm:$0xff]
    %v89 = vld [vmem:[%s4 + $0x18] sm:$0xff]
    %v90 = vld [vmem:[%s4 + $0x20] sm:$0xff]
    %v91 = vld [vmem:[%s4 + $0x28] sm:$0xff]
    %v92 = vld [vmem:[%s4 + $0x30] sm:$0xff]
    %v93 = vld [vmem:[%s4 + $0x38] sm:$0xff]
    %v94 = vld [vmem:[%s4 + $0x40] sm:$0xff]
    %v95 = vld [vmem:[%s4 + $0x48] sm:$0xff]
    %v96 = vld [vmem:[%s4 + $0x50] sm:$0xff]
    %v97 = vld [vmem:[%s4 + $0x58] sm:$0xff]
    %v98 = vld [vmem:[%s4 + $0x60] sm:$0xff]
    %v99 = vld [vmem:[%s4 + $0x68] sm:$0xff]
    %v100 = vld [vmem:[%s4 + $0x70] sm:$0xff]
    %v101 = vld [vmem:[%s4 + $0x78] sm:$0xff]
    %v102 = vld [vmem:[%s5] sm:$0xff]
    %v103 = vld [vmem:[%s5 + $0x8] sm:$0xff]
    %v104 = vld [vmem:[%s5 + $0x10] sm:$0xff]
    %v105 = vld [vmem:[%s5 + $0x18] sm:$0xff]
    %v106 = vld [vmem:[%s6] sm:$0xff]
    %v107 = vld [vmem:[%s6 + $0x8] sm:$0xff]
    %v108 = vld [vmem:[%s6 + $0x10] sm:$0xff]
    %v109 = vld [vmem:[%s6 + $0x18] sm:$0xff]
    %v110 = vld [vmem:[%s7] sm:$0xff]
    %v111 = vld [vmem:[%s7 + $0x8] sm:$0xff]
    %v112 = vld [vmem:[%s7 + $0x10] sm:$0xff]
    %v113 = vld [vmem:[%s7 + $0x18] sm:$0xff]
    %v114 = vld [vmem:[%s8] sm:$0x1]
    %v115 = vld [vmem:[%s9] sm:$0x1]
    %v116 = vld [vmem:[%s10] sm:$0x1]
    %v117 = vld [vmem:[%s11] sm:$0x1]
    %v118 = vld [vmem:[%s12] sm:$0xff]
    %v119 = vld [vmem:[%s12 + $0x8] sm:$0x3f]
    %v120 = vld [vmem:[%s12 + $0x10] sm:$0xff]
    %v121 = vld [vmem:[%s12 + $0x18] sm:$0x3f]
    %v122 = vld [vmem:[%s13] sm:$0xff]
    %v123 = vld [vmem:[%s13 + $0x8] sm:$0x3f]
    %v124 = vld [vmem:[%s13 + $0x10] sm:$0xff]
    %v125 = vld [vmem:[%s13 + $0x18] sm:$0x3f]
    %v126 = vld [vmem:[%s14] sm:$0xff]
    %v127 = vld [vmem:[%s14 + $0x8] sm:$0xff]
    %v128 = vld [vmem:[%s14 + $0x10] sm:$0xff]
    %v129 = vld [vmem:[%s14 + $0x18] sm:$0xff]
    %v130 = vld [vmem:[%s15] sm:$0x1]
    %v131 = vlaneseq
    %v132 = vand.u32 %v131, 127
    %vm133 = vcmp.lt.s32.totalorder %v132, 8
    %v134 = vld [vmem:[%s1] sm:$0x3]
    %v135 = vld [vmem:[%s0] sm:$0x3]
    %vm136 = vcmask 261120
    %v138 = vsel %vm136, %v134, 0
    %140 = vmatprep.subr.mxu0 0.0
    %141 = vmatpush1.msra.mxu0 %v102
    %142 = vmatprep.subr.mxu0 0.0
    %143 = vmatpush1.msra.mxu0 %v103
    %144 = vmatprep.subr.mxu0 0.0
    %145 = vmatpush1.msra.mxu0 %v104
    %146 = vmatprep.subr.mxu0 0.0
    %147 = vmatpush1.msra.mxu0 %v105
    %148 = vmatprep.subr.mxu0 0.0
    %149 = vmatpush1.msra.mxu0 0.0
    %150 = vmatprep.subr.mxu0 0.0
    %151 = vmatpush1.msra.mxu0 0.0
    %152 = vmatprep.subr.mxu0 0.0
    %153 = vmatpush1.msra.mxu0 0.0
    %154 = vmatprep.subr.mxu0 0.0
    %155 = vmatpush1.msra.mxu0 0.0
    %156 = vmatprep.subr.mxu0 0.0
    %157 = vmatpush1.msra.mxu0 0.0
    %158 = vmatprep.subr.mxu0 0.0
    %159 = vmatpush1.msra.mxu0 0.0
    %160 = vmatprep.subr.mxu0 0.0
    %161 = vmatpush1.msra.mxu0 0.0
    %162 = vmatprep.subr.mxu0 0.0
    %163 = vmatpush1.msra.mxu0 0.0
    %164 = vmatprep.subr.mxu0 0.0
    %165 = vmatpush1.msra.mxu0 0.0
    %166 = vmatprep.subr.mxu0 0.0
    %167 = vmatpush1.msra.mxu0 0.0
    %168 = vmatprep.subr.mxu0 0.0
    %169 = vmatpush1.msra.mxu0 0.0
    %170 = vmatprep.subr.mxu0 0.0
    %171 = vmatpush1.msra.mxu0 0.0
    %172 = vmatprep.subr.mxu0 0.0
    %173 = vmatpush1.msra.mxu0 0.0
    %174 = vmatprep.subr.mxu0 0.0
    %175 = vmatpush1.msra.mxu0 0.0
    %176 = vmatprep.subr.mxu0 0.0
    %177 = vmatpush1.msra.mxu0 0.0
    %178 = vmatprep.subr.mxu0 0.0
    %179 = vmatpush1.msra.mxu0 0.0
    %180 = vmatprep.subr.mxu0 0.0
    %181 = vmatpush1.msra.mxu0 0.0
    %182 = vmatprep.subr.mxu0 0.0
    %183 = vmatpush1.msra.mxu0 0.0
    %184 = vmatprep.subr.mxu0 0.0
    %185 = vmatpush1.msra.mxu0 0.0
    %186 = vmatprep.subr.mxu0 0.0
    %187 = vmatpush1.msra.mxu0 0.0
    %188 = vmatprep.subr.mxu0 0.0
    %189 = vmatpush1.msra.mxu0 0.0
    %190 = vmatprep.subr.mxu0 0.0
    %191 = vmatpush1.msra.mxu0 0.0
    %192 = vmatprep.subr.mxu0 0.0
    %193 = vmatpush1.msra.mxu0 0.0
    %194 = vmatprep.subr.mxu0 0.0
    %195 = vmatpush1.msra.mxu0 0.0
    %196 = vmatprep.subr.mxu0 0.0
    %197 = vmatpush1.msra.mxu0 0.0
    %198 = vmatprep.subr.mxu0 0.0
    %199 = vmatpush1.msra.mxu0 0.0
    %200 = vmatprep.subr.mxu0 0.0
    %201 = vmatpush1.msra.mxu0 0.0
    %202 = vmatprep.subr.mxu0 0.0
    %203 = vmatpush1.msra.mxu0 0.0
    %204 = vmatprep.mubr.f32.mxu0 0.0
    %205 = vmatmul.mubr.f32.gmra.mrb[0].mxu0 %v138
    %v206 = vpop.f32.mrb[0].mxu0
    %v207 = vadd.f32 0.0, %v206
    %v208 = vpop.f32.mrb[0].mxu0
    %209 = vdwg.mxu0
    %210 = vmatprep.subr.mxu0 0.0
    %211 = vmatpush1.msra.mxu0 %v54
    %212 = vmatprep.subr.mxu0 0.0
    %213 = vmatpush1.msra.mxu0 %v55
    %214 = vmatprep.subr.mxu0 0.0
    %215 = vmatpush1.msra.mxu0 %v56
    %216 = vmatprep.subr.mxu0 0.0
    %217 = vmatpush1.msra.mxu0 %v57
    %218 = vmatprep.subr.mxu0 0.0
    %219 = vmatpush1.msra.mxu0 %v58
    %220 = vmatprep.subr.mxu0 0.0
    %221 = vmatpush1.msra.mxu0 %v59
    %222 = vmatprep.subr.mxu0 0.0
    %223 = vmatpush1.msra.mxu0 %v60
    %224 = vmatprep.subr.mxu0 0.0
    %225 = vmatpush1.msra.mxu0 %v61
    %226 = vmatprep.subr.mxu0 0.0
    %227 = vmatpush1.msra.mxu0 %v62
    %228 = vmatprep.subr.mxu0 0.0
    %229 = vmatpush1.msra.mxu0 %v63
    %230 = vmatprep.subr.mxu0 0.0
    %231 = vmatpush1.msra.mxu0 %v64
    %232 = vmatprep.subr.mxu0 0.0
    %233 = vmatpush1.msra.mxu0 %v65
    %234 = vmatprep.subr.mxu0 0.0
    %235 = vmatpush1.msra.mxu0 %v66
    %236 = vmatprep.subr.mxu0 0.0
    %237 = vmatpush1.msra.mxu0 %v67
    %238 = vmatprep.subr.mxu0 0.0
    %239 = vmatpush1.msra.mxu0 %v68
    %240 = vmatprep.subr.mxu0 0.0
    %241 = vmatpush1.msra.mxu0 %v69
    %242 = vmatprep.subr.mxu0 0.0
    %243 = vmatpush1.msra.mxu0 0.0
    %244 = vmatprep.subr.mxu0 0.0
    %245 = vmatpush1.msra.mxu0 0.0
    %246 = vmatprep.subr.mxu0 0.0
    %247 = vmatpush1.msra.mxu0 0.0
    %248 = vmatprep.subr.mxu0 0.0
    %249 = vmatpush1.msra.mxu0 0.0
    %250 = vmatprep.subr.mxu0 0.0
    %251 = vmatpush1.msra.mxu0 0.0
    %252 = vmatprep.subr.mxu0 0.0
    %253 = vmatpush1.msra.mxu0 0.0
    %254 = vmatprep.subr.mxu0 0.0
    %255 = vmatpush1.msra.mxu0 0.0
    %256 = vmatprep.subr.mxu0 0.0
    %257 = vmatpush1.msra.mxu0 0.0
    %258 = vmatprep.subr.mxu0 0.0
    %259 = vmatpush1.msra.mxu0 0.0
    %260 = vmatprep.subr.mxu0 0.0
    %261 = vmatpush1.msra.mxu0 0.0
    %262 = vmatprep.subr.mxu0 0.0
    %263 = vmatpush1.msra.mxu0 0.0
    %264 = vmatprep.subr.mxu0 0.0
    %265 = vmatpush1.msra.mxu0 0.0
    %266 = vmatprep.subr.mxu0 0.0
    %267 = vmatpush1.msra.mxu0 0.0
    %268 = vmatprep.subr.mxu0 0.0
    %269 = vmatpush1.msra.mxu0 0.0
    %270 = vmatprep.subr.mxu0 0.0
    %271 = vmatpush1.msra.mxu0 0.0
    %272 = vmatprep.subr.mxu0 0.0
    %273 = vmatpush1.msra.mxu0 0.0
    %274 = vmatprep.mubr.f32.mxu0 0.0
    %275 = vmatmul.mubr.f32.gmra.mrb[0].mxu0 %v135
    %v276 = vpop.f32.mrb[0].mxu0
    %v277 = vadd.f32 %v207, %v276
    %v278 = vpop.f32.mrb[0].mxu0
    %279 = vdwg.mxu0
    %v281 = vlaneseq
    %v282 = vshrl.u32 %v281, 7
    %v283 = vsub.s32 0, %v282
    %v284 = vrot.slane %v114, %v283
    %v286 = vadd.f32 %v277, %v284
    %v287 = vxor.u32 %v286, 2147483648
    %v288 = vmul.f32 %v287, 1.442695
    %v289 = vpow.pop %v288
    %v290 = vadd.f32 %v289, 1.0
    %v291 = vrcp.pop %v290
    %v292 = vmul.f32 1.0, %v291
    %293 = vmatprep.subr.mxu0 0.0
    %294 = vmatpush1.msra.mxu0 %v106
    %295 = vmatprep.subr.mxu0 0.0
    %296 = vmatpush1.msra.mxu0 %v107
    %297 = vmatprep.subr.mxu0 0.0
    %298 = vmatpush1.msra.mxu0 %v108
    %299 = vmatprep.subr.mxu0 0.0
    %300 = vmatpush1.msra.mxu0 %v109
    %301 = vmatprep.subr.mxu0 0.0
    %302 = vmatpush1.msra.mxu0 0.0
    %303 = vmatprep.subr.mxu0 0.0
    %304 = vmatpush1.msra.mxu0 0.0
    %305 = vmatprep.subr.mxu0 0.0
    %306 = vmatpush1.msra.mxu0 0.0
    %307 = vmatprep.subr.mxu0 0.0
    %308 = vmatpush1.msra.mxu0 0.0
    %309 = vmatprep.subr.mxu0 0.0
    %310 = vmatpush1.msra.mxu0 0.0
    %311 = vmatprep.subr.mxu0 0.0
    %312 = vmatpush1.msra.mxu0 0.0
    %313 = vmatprep.subr.mxu0 0.0
    %314 = vmatpush1.msra.mxu0 0.0
    %315 = vmatprep.subr.mxu0 0.0
    %316 = vmatpush1.msra.mxu0 0.0
    %317 = vmatprep.subr.mxu0 0.0
    %318 = vmatpush1.msra.mxu0 0.0
    %319 = vmatprep.subr.mxu0 0.0
    %320 = vmatpush1.msra.mxu0 0.0
    %321 = vmatprep.subr.mxu0 0.0
    %322 = vmatpush1.msra.mxu0 0.0
    %323 = vmatprep.subr.mxu0 0.0
    %324 = vmatpush1.msra.mxu0 0.0
    %325 = vmatprep.subr.mxu0 0.0
    %326 = vmatpush1.msra.mxu0 0.0
    %327 = vmatprep.subr.mxu0 0.0
    %328 = vmatpush1.msra.mxu0 0.0
    %329 = vmatprep.subr.mxu0 0.0
    %330 = vmatpush1.msra.mxu0 0.0
    %331 = vmatprep.subr.mxu0 0.0
    %332 = vmatpush1.msra.mxu0 0.0
    %333 = vmatprep.subr.mxu0 0.0
    %334 = vmatpush1.msra.mxu0 0.0
    %335 = vmatprep.subr.mxu0 0.0
    %336 = vmatpush1.msra.mxu0 0.0
    %337 = vmatprep.subr.mxu0 0.0
    %338 = vmatpush1.msra.mxu0 0.0
    %339 = vmatprep.subr.mxu0 0.0
    %340 = vmatpush1.msra.mxu0 0.0
    %341 = vmatprep.subr.mxu0 0.0
    %342 = vmatpush1.msra.mxu0 0.0
    %343 = vmatprep.subr.mxu0 0.0
    %344 = vmatpush1.msra.mxu0 0.0
    %345 = vmatprep.subr.mxu0 0.0
    %346 = vmatpush1.msra.mxu0 0.0
    %347 = vmatprep.subr.mxu0 0.0
    %348 = vmatpush1.msra.mxu0 0.0
    %349 = vmatprep.subr.mxu0 0.0
    %350 = vmatpush1.msra.mxu0 0.0
    %351 = vmatprep.subr.mxu0 0.0
    %352 = vmatpush1.msra.mxu0 0.0
    %353 = vmatprep.subr.mxu0 0.0
    %354 = vmatpush1.msra.mxu0 0.0
    %355 = vmatprep.subr.mxu0 0.0
    %356 = vmatpush1.msra.mxu0 0.0
    %357 = vmatprep.mubr.f32.mxu0 0.0
    %358 = vmatmul.mubr.f32.gmra.mrb[0].mxu0 %v138
    %v359 = vpop.f32.mrb[0].mxu0
    %v360 = vadd.f32 0.0, %v359
    %v361 = vpop.f32.mrb[0].mxu0
    %362 = vdwg.mxu0
    %363 = vmatprep.subr.mxu0 0.0
    %364 = vmatpush1.msra.mxu0 %v70
    %365 = vmatprep.subr.mxu0 0.0
    %366 = vmatpush1.msra.mxu0 %v71
    %367 = vmatprep.subr.mxu0 0.0
    %368 = vmatpush1.msra.mxu0 %v72
    %369 = vmatprep.subr.mxu0 0.0
    %370 = vmatpush1.msra.mxu0 %v73
    %371 = vmatprep.subr.mxu0 0.0
    %372 = vmatpush1.msra.mxu0 %v74
    %373 = vmatprep.subr.mxu0 0.0
    %374 = vmatpush1.msra.mxu0 %v75
    %375 = vmatprep.subr.mxu0 0.0
    %376 = vmatpush1.msra.mxu0 %v76
    %377 = vmatprep.subr.mxu0 0.0
    %378 = vmatpush1.msra.mxu0 %v77
    %379 = vmatprep.subr.mxu0 0.0
    %380 = vmatpush1.msra.mxu0 %v78
    %381 = vmatprep.subr.mxu0 0.0
    %382 = vmatpush1.msra.mxu0 %v79
    %383 = vmatprep.subr.mxu0 0.0
    %384 = vmatpush1.msra.mxu0 %v80
    %385 = vmatprep.subr.mxu0 0.0
    %386 = vmatpush1.msra.mxu0 %v81
    %387 = vmatprep.subr.mxu0 0.0
    %388 = vmatpush1.msra.mxu0 %v82
    %389 = vmatprep.subr.mxu0 0.0
    %390 = vmatpush1.msra.mxu0 %v83
    %391 = vmatprep.subr.mxu0 0.0
    %392 = vmatpush1.msra.mxu0 %v84
    %393 = vmatprep.subr.mxu0 0.0
    %394 = vmatpush1.msra.mxu0 %v85
    %395 = vmatprep.subr.mxu0 0.0
    %396 = vmatpush1.msra.mxu0 0.0
    %397 = vmatprep.subr.mxu0 0.0
    %398 = vmatpush1.msra.mxu0 0.0
    %399 = vmatprep.subr.mxu0 0.0
    %400 = vmatpush1.msra.mxu0 0.0
    %401 = vmatprep.subr.mxu0 0.0
    %402 = vmatpush1.msra.mxu0 0.0
    %403 = vmatprep.subr.mxu0 0.0
    %404 = vmatpush1.msra.mxu0 0.0
    %405 = vmatprep.subr.mxu0 0.0
    %406 = vmatpush1.msra.mxu0 0.0
    %407 = vmatprep.subr.mxu0 0.0
    %408 = vmatpush1.msra.mxu0 0.0
    %409 = vmatprep.subr.mxu0 0.0
    %410 = vmatpush1.msra.mxu0 0.0
    %411 = vmatprep.subr.mxu0 0.0
    %412 = vmatpush1.msra.mxu0 0.0
    %413 = vmatprep.subr.mxu0 0.0
    %414 = vmatpush1.msra.mxu0 0.0
    %415 = vmatprep.subr.mxu0 0.0
    %416 = vmatpush1.msra.mxu0 0.0
    %417 = vmatprep.subr.mxu0 0.0
    %418 = vmatpush1.msra.mxu0 0.0
    %419 = vmatprep.subr.mxu0 0.0
    %420 = vmatpush1.msra.mxu0 0.0
    %421 = vmatprep.subr.mxu0 0.0
    %422 = vmatpush1.msra.mxu0 0.0
    %423 = vmatprep.subr.mxu0 0.0
    %424 = vmatpush1.msra.mxu0 0.0
    %425 = vmatprep.subr.mxu0 0.0
    %426 = vmatpush1.msra.mxu0 0.0
    %427 = vmatprep.mubr.f32.mxu0 0.0
    %428 = vmatmul.mubr.f32.gmra.mrb[0].mxu0 %v135
    %v429 = vpop.f32.mrb[0].mxu0
    %v430 = vadd.f32 %v360, %v429
    %v431 = vpop.f32.mrb[0].mxu0
    %432 = vdwg.mxu0
    %v434 = vlaneseq
    %v435 = vshrl.u32 %v434, 7
    %v436 = vsub.s32 0, %v435
    %v437 = vrot.slane %v115, %v436
    %v439 = vadd.f32 %v430, %v437
    %v440 = vxor.u32 %v439, 2147483648
    %v441 = vmul.f32 %v440, 1.442695
    %v442 = vpow.pop %v441
    %v443 = vadd.f32 %v442, 1.0
    %v444 = vrcp.pop %v443
    %v445 = vmul.f32 1.0, %v444
    %v447 = vlaneseq
    %v448 = vshrl.u32 %v447, 7
    %v449 = vsub.s32 0, %v448
    %v450 = vrot.slane %v116, %v449
    %452 = vmatprep.subr.mxu0 0.0
    %453 = vmatpush1.msra.mxu0 %v86
    %454 = vmatprep.subr.mxu0 0.0
    %455 = vmatpush1.msra.mxu0 %v87
    %456 = vmatprep.subr.mxu0 0.0
    %457 = vmatpush1.msra.mxu0 %v88
    %458 = vmatprep.subr.mxu0 0.0
    %459 = vmatpush1.msra.mxu0 %v89
    %460 = vmatprep.subr.mxu0 0.0
    %461 = vmatpush1.msra.mxu0 %v90
    %462 = vmatprep.subr.mxu0 0.0
    %463 = vmatpush1.msra.mxu0 %v91
    %464 = vmatprep.subr.mxu0 0.0
    %465 = vmatpush1.msra.mxu0 %v92
    %466 = vmatprep.subr.mxu0 0.0
    %467 = vmatpush1.msra.mxu0 %v93
    %468 = vmatprep.subr.mxu0 0.0
    %469 = vmatpush1.msra.mxu0 %v94
    %470 = vmatprep.subr.mxu0 0.0
    %471 = vmatpush1.msra.mxu0 %v95
    %472 = vmatprep.subr.mxu0 0.0
    %473 = vmatpush1.msra.mxu0 %v96
    %474 = vmatprep.subr.mxu0 0.0
    %475 = vmatpush1.msra.mxu0 %v97
    %476 = vmatprep.subr.mxu0 0.0
    %477 = vmatpush1.msra.mxu0 %v98
    %478 = vmatprep.subr.mxu0 0.0
    %479 = vmatpush1.msra.mxu0 %v99
    %480 = vmatprep.subr.mxu0 0.0
    %481 = vmatpush1.msra.mxu0 %v100
    %482 = vmatprep.subr.mxu0 0.0
    %483 = vmatpush1.msra.mxu0 %v101
    %484 = vmatprep.subr.mxu0 0.0
    %485 = vmatpush1.msra.mxu0 0.0
    %486 = vmatprep.subr.mxu0 0.0
    %487 = vmatpush1.msra.mxu0 0.0
    %488 = vmatprep.subr.mxu0 0.0
    %489 = vmatpush1.msra.mxu0 0.0
    %490 = vmatprep.subr.mxu0 0.0
    %491 = vmatpush1.msra.mxu0 0.0
    %492 = vmatprep.subr.mxu0 0.0
    %493 = vmatpush1.msra.mxu0 0.0
    %494 = vmatprep.subr.mxu0 0.0
    %495 = vmatpush1.msra.mxu0 0.0
    %496 = vmatprep.subr.mxu0 0.0
    %497 = vmatpush1.msra.mxu0 0.0
    %498 = vmatprep.subr.mxu0 0.0
    %499 = vmatpush1.msra.mxu0 0.0
    %500 = vmatprep.subr.mxu0 0.0
    %501 = vmatpush1.msra.mxu0 0.0
    %502 = vmatprep.subr.mxu0 0.0
    %503 = vmatpush1.msra.mxu0 0.0
    %504 = vmatprep.subr.mxu0 0.0
    %505 = vmatpush1.msra.mxu0 0.0
    %506 = vmatprep.subr.mxu0 0.0
    %507 = vmatpush1.msra.mxu0 0.0
    %508 = vmatprep.subr.mxu0 0.0
    %509 = vmatpush1.msra.mxu0 0.0
    %510 = vmatprep.subr.mxu0 0.0
    %511 = vmatpush1.msra.mxu0 0.0
    %512 = vmatprep.subr.mxu0 0.0
    %513 = vmatpush1.msra.mxu0 0.0
    %514 = vmatprep.subr.mxu0 0.0
    %515 = vmatpush1.msra.mxu0 0.0
    %516 = vmatprep.mubr.f32.mxu0 0.0
    %517 = vmatmul.mubr.f32.gmra.mrb[0].mxu0 %v135
    %v518 = vpop.f32.mrb[0].mxu0
    %v519 = vadd.f32 %v450, %v518
    %v520 = vpop.f32.mrb[0].mxu0
    %521 = vdwg.mxu0
    %v523 = vlaneseq
    %v524 = vshrl.u32 %v523, 7
    %v525 = vsub.s32 0, %v524
    %v526 = vrot.slane %v117, %v525
    %528 = vmatprep.subr.mxu0 0.0
    %529 = vmatpush1.msra.mxu0 %v110
    %530 = vmatprep.subr.mxu0 0.0
    %531 = vmatpush1.msra.mxu0 %v111
    %532 = vmatprep.subr.mxu0 0.0
    %533 = vmatpush1.msra.mxu0 %v112
    %534 = vmatprep.subr.mxu0 0.0
    %535 = vmatpush1.msra.mxu0 %v113
    %536 = vmatprep.subr.mxu0 0.0
    %537 = vmatpush1.msra.mxu0 0.0
    %538 = vmatprep.subr.mxu0 0.0
    %539 = vmatpush1.msra.mxu0 0.0
    %540 = vmatprep.subr.mxu0 0.0
    %541 = vmatpush1.msra.mxu0 0.0
    %542 = vmatprep.subr.mxu0 0.0
    %543 = vmatpush1.msra.mxu0 0.0
    %544 = vmatprep.subr.mxu0 0.0
    %545 = vmatpush1.msra.mxu0 0.0
    %546 = vmatprep.subr.mxu0 0.0
    %547 = vmatpush1.msra.mxu0 0.0
    %548 = vmatprep.subr.mxu0 0.0
    %549 = vmatpush1.msra.mxu0 0.0
    %550 = vmatprep.subr.mxu0 0.0
    %551 = vmatpush1.msra.mxu0 0.0
    %552 = vmatprep.subr.mxu0 0.0
    %553 = vmatpush1.msra.mxu0 0.0
    %554 = vmatprep.subr.mxu0 0.0
    %555 = vmatpush1.msra.mxu0 0.0
    %556 = vmatprep.subr.mxu0 0.0
    %557 = vmatpush1.msra.mxu0 0.0
    %558 = vmatprep.subr.mxu0 0.0
    %559 = vmatpush1.msra.mxu0 0.0
    %560 = vmatprep.subr.mxu0 0.0
    %561 = vmatpush1.msra.mxu0 0.0
    %562 = vmatprep.subr.mxu0 0.0
    %563 = vmatpush1.msra.mxu0 0.0
    %564 = vmatprep.subr.mxu0 0.0
    %565 = vmatpush1.msra.mxu0 0.0
    %566 = vmatprep.subr.mxu0 0.0
    %567 = vmatpush1.msra.mxu0 0.0
    %568 = vmatprep.subr.mxu0 0.0
    %569 = vmatpush1.msra.mxu0 0.0
    %570 = vmatprep.subr.mxu0 0.0
    %571 = vmatpush1.msra.mxu0 0.0
    %572 = vmatprep.subr.mxu0 0.0
    %573 = vmatpush1.msra.mxu0 0.0
    %574 = vmatprep.subr.mxu0 0.0
    %575 = vmatpush1.msra.mxu0 0.0
    %576 = vmatprep.subr.mxu0 0.0
    %577 = vmatpush1.msra.mxu0 0.0
    %578 = vmatprep.subr.mxu0 0.0
    %579 = vmatpush1.msra.mxu0 0.0
    %580 = vmatprep.subr.mxu0 0.0
    %581 = vmatpush1.msra.mxu0 0.0
    %582 = vmatprep.subr.mxu0 0.0
    %583 = vmatpush1.msra.mxu0 0.0
    %584 = vmatprep.subr.mxu0 0.0
    %585 = vmatpush1.msra.mxu0 0.0
    %586 = vmatprep.subr.mxu0 0.0
    %587 = vmatpush1.msra.mxu0 0.0
    %588 = vmatprep.subr.mxu0 0.0
    %589 = vmatpush1.msra.mxu0 0.0
    %590 = vmatprep.subr.mxu0 0.0
    %591 = vmatpush1.msra.mxu0 0.0
    %592 = vmatprep.mubr.f32.mxu0 0.0
    %593 = vmatmul.mubr.f32.gmra.mrb[0].mxu0 %v138
    %v594 = vpop.f32.mrb[0].mxu0
    %v595 = vadd.f32 %v526, %v594
    %v596 = vpop.f32.mrb[0].mxu0
    %597 = vdwg.mxu0
    %v598 = vmul.f32 %v292, %v595
    %v599 = vadd.f32 %v519, %v598
    %v600 = vtanh.pop %v599
    %v601 = vsub.f32 1.0, %v445
    %v602 = vmul.f32 %v601, %v600
    %v603 = vmul.f32 %v445, %v134
    %v604 = vadd.f32 %v602, %v603
    %s605 = scalar_lea.vmem %s0, 2
    %v606 = vld [vmem:[%s605] sm:$0x3]
    %v608 = vsel %vm136, %v604, 0
    %610 = vmatprep.subr.mxu0 0.0
    %611 = vmatpush1.msra.mxu0 %v102
    %612 = vmatprep.subr.mxu0 0.0
    %613 = vmatpush1.msra.mxu0 %v103
    %614 = vmatprep.subr.mxu0 0.0
    %615 = vmatpush1.msra.mxu0 %v104
    %616 = vmatprep.subr.mxu0 0.0
    %617 = vmatpush1.msra.mxu0 %v105
    %618 = vmatprep.subr.mxu0 0.0
    %619 = vmatpush1.msra.mxu0 0.0
    %620 = vmatprep.subr.mxu0 0.0
    %621 = vmatpush1.msra.mxu0 0.0
    %622 = vmatprep.subr.mxu0 0.0
    %623 = vmatpush1.msra.mxu0 0.0
    %624 = vmatprep.subr.mxu0 0.0
    %625 = vmatpush1.msra.mxu0 0.0
    %626 = vmatprep.subr.mxu0 0.0
    %627 = vmatpush1.msra.mxu0 0.0
    %628 = vmatprep.subr.mxu0 0.0
    %629 = vmatpush1.msra.mxu0 0.0
    %630 = vmatprep.subr.mxu0 0.0
    %631 = vmatpush1.msra.mxu0 0.0
    %632 = vmatprep.subr.mxu0 0.0
    %633 = vmatpush1.msra.mxu0 0.0
    %634 = vmatprep.subr.mxu0 0.0
    %635 = vmatpush1.msra.mxu0 0.0
    %636 = vmatprep.subr.mxu0 0.0
    %637 = vmatpush1.msra.mxu0 0.0
    %638 = vmatprep.subr.mxu0 0.0
    %639 = vmatpush1.msra.mxu0 0.0
    %640 = vmatprep.subr.mxu0 0.0
    %641 = vmatpush1.msra.mxu0 0.0
    %642 = vmatprep.subr.mxu0 0.0
    %643 = vmatpush1.msra.mxu0 0.0
    %644 = vmatprep.subr.mxu0 0.0
    %645 = vmatpush1.msra.mxu0 0.0
    %646 = vmatprep.subr.mxu0 0.0
    %647 = vmatpush1.msra.mxu0 0.0
    %648 = vmatprep.subr.mxu0 0.0
    %649 = vmatpush1.msra.mxu0 0.0
    %650 = vmatprep.subr.mxu0 0.0
    %651 = vmatpush1.msra.mxu0 0.0
    %652 = vmatprep.subr.mxu0 0.0
    %653 = vmatpush1.msra.mxu0 0.0
    %654 = vmatprep.subr.mxu0 0.0
    %655 = vmatpush1.msra.mxu0 0.0
    %656 = vmatprep.subr.mxu0 0.0
    %657 = vmatpush1.msra.mxu0 0.0
    %658 = vmatprep.subr.mxu0 0.0
    %659 = vmatpush1.msra.mxu0 0.0
    %660 = vmatprep.subr.mxu0 0.0
    %661 = vmatpush1.msra.mxu0 0.0
    %662 = vmatprep.subr.mxu0 0.0
    %663 = vmatpush1.msra.mxu0 0.0
    %664 = vmatprep.subr.mxu0 0.0
    %665 = vmatpush1.msra.mxu0 0.0
    %666 = vmatprep.subr.mxu0 0.0
    %667 = vmatpush1.msra.mxu0 0.0
    %668 = vmatprep.subr.mxu0 0.0
    %669 = vmatpush1.msra.mxu0 0.0
    %670 = vmatprep.subr.mxu0 0.0
    %671 = vmatpush1.msra.mxu0 0.0
    %672 = vmatprep.subr.mxu0 0.0
    %673 = vmatpush1.msra.mxu0 0.0
    %674 = vmatprep.mubr.f32.mxu0 0.0
    %675 = vmatmul.mubr.f32.gmra.mrb[0].mxu0 %v608
    %v676 = vpop.f32.mrb[0].mxu0
    %v677 = vadd.f32 0.0, %v676
    %v678 = vpop.f32.mrb[0].mxu0
    %679 = vdwg.mxu0
    %680 = vmatprep.subr.mxu0 0.0
    %681 = vmatpush1.msra.mxu0 %v54
    %682 = vmatprep.subr.mxu0 0.0
    %683 = vmatpush1.msra.mxu0 %v55
    %684 = vmatprep.subr.mxu0 0.0
    %685 = vmatpush1.msra.mxu0 %v56
    %686 = vmatprep.subr.mxu0 0.0
    %687 = vmatpush1.msra.mxu0 %v57
    %688 = vmatprep.subr.mxu0 0.0
    %689 = vmatpush1.msra.mxu0 %v58
    %690 = vmatprep.subr.mxu0 0.0
    %691 = vmatpush1.msra.mxu0 %v59
    %692 = vmatprep.subr.mxu0 0.0
    %693 = vmatpush1.msra.mxu0 %v60
    %694 = vmatprep.subr.mxu0 0.0
    %695 = vmatpush1.msra.mxu0 %v61
    %696 = vmatprep.subr.mxu0 0.0
    %697 = vmatpush1.msra.mxu0 %v62
    %698 = vmatprep.subr.mxu0 0.0
    %699 = vmatpush1.msra.mxu0 %v63
    %700 = vmatprep.subr.mxu0 0.0
    %701 = vmatpush1.msra.mxu0 %v64
    %702 = vmatprep.subr.mxu0 0.0
    %703 = vmatpush1.msra.mxu0 %v65
    %704 = vmatprep.subr.mxu0 0.0
    %705 = vmatpush1.msra.mxu0 %v66
    %706 = vmatprep.subr.mxu0 0.0
    %707 = vmatpush1.msra.mxu0 %v67
    %708 = vmatprep.subr.mxu0 0.0
    %709 = vmatpush1.msra.mxu0 %v68
    %710 = vmatprep.subr.mxu0 0.0
    %711 = vmatpush1.msra.mxu0 %v69
    %712 = vmatprep.subr.mxu0 0.0
    %713 = vmatpush1.msra.mxu0 0.0
    %714 = vmatprep.subr.mxu0 0.0
    %715 = vmatpush1.msra.mxu0 0.0
    %716 = vmatprep.subr.mxu0 0.0
    %717 = vmatpush1.msra.mxu0 0.0
    %718 = vmatprep.subr.mxu0 0.0
    %719 = vmatpush1.msra.mxu0 0.0
    %720 = vmatprep.subr.mxu0 0.0
    %721 = vmatpush1.msra.mxu0 0.0
    %722 = vmatprep.subr.mxu0 0.0
    %723 = vmatpush1.msra.mxu0 0.0
    %724 = vmatprep.subr.mxu0 0.0
    %725 = vmatpush1.msra.mxu0 0.0
    %726 = vmatprep.subr.mxu0 0.0
    %727 = vmatpush1.msra.mxu0 0.0
    %728 = vmatprep.subr.mxu0 0.0
    %729 = vmatpush1.msra.mxu0 0.0
    %730 = vmatprep.subr.mxu0 0.0
    %731 = vmatpush1.msra.mxu0 0.0
    %732 = vmatprep.subr.mxu0 0.0
    %733 = vmatpush1.msra.mxu0 0.0
    %734 = vmatprep.subr.mxu0 0.0
    %735 = vmatpush1.msra.mxu0 0.0
    %736 = vmatprep.subr.mxu0 0.0
    %737 = vmatpush1.msra.mxu0 0.0
    %738 = vmatprep.subr.mxu0 0.0
    %739 = vmatpush1.msra.mxu0 0.0
    %740 = vmatprep.subr.mxu0 0.0
    %741 = vmatpush1.msra.mxu0 0.0
    %742 = vmatprep.subr.mxu0 0.0
    %743 = vmatpush1.msra.mxu0 0.0
    %744 = vmatprep.mubr.f32.mxu0 0.0
    %745 = vmatmul.mubr.f32.gmra.mrb[0].mxu0 %v606
    %v746 = vpop.f32.mrb[0].mxu0
    %v747 = vadd.f32 %v677, %v746
    %v748 = vpop.f32.mrb[0].mxu0
    %749 = vdwg.mxu0
    %v750 = vadd.f32 %v747, %v284
    %v751 = vxor.u32 %v750, 2147483648
    %v752 = vmul.f32 %v751, 1.442695
    %v753 = vpow.pop %v752
    %v754 = vadd.f32 %v753, 1.0
    %v755 = vrcp.pop %v754
    %v756 = vmul.f32 1.0, %v755
    %757 = vmatprep.subr.mxu0 0.0
    %758 = vmatpush1.msra.mxu0 %v106
    %759 = vmatprep.subr.mxu0 0.0
    %760 = vmatpush1.msra.mxu0 %v107
    %761 = vmatprep.subr.mxu0 0.0
    %762 = vmatpush1.msra.mxu0 %v108
    %763 = vmatprep.subr.mxu0 0.0
    %764 = vmatpush1.msra.mxu0 %v109
    %765 = vmatprep.subr.mxu0 0.0
    %766 = vmatpush1.msra.mxu0 0.0
    %767 = vmatprep.subr.mxu0 0.0
    %768 = vmatpush1.msra.mxu0 0.0
    %769 = vmatprep.subr.mxu0 0.0
    %770 = vmatpush1.msra.mxu0 0.0
    %771 = vmatprep.subr.mxu0 0.0
    %772 = vmatpush1.msra.mxu0 0.0
    %773 = vmatprep.subr.mxu0 0.0
    %774 = vmatpush1.msra.mxu0 0.0
    %775 = vmatprep.subr.mxu0 0.0
    %776 = vmatpush1.msra.mxu0 0.0
    %777 = vmatprep.subr.mxu0 0.0
    %778 = vmatpush1.msra.mxu0 0.0
    %779 = vmatprep.subr.mxu0 0.0
    %780 = vmatpush1.msra.mxu0 0.0
    %781 = vmatprep.subr.mxu0 0.0
    %782 = vmatpush1.msra.mxu0 0.0
    %783 = vmatprep.subr.mxu0 0.0
    %784 = vmatpush1.msra.mxu0 0.0
    %785 = vmatprep.subr.mxu0 0.0
    %786 = vmatpush1.msra.mxu0 0.0
    %787 = vmatprep.subr.mxu0 0.0
    %788 = vmatpush1.msra.mxu0 0.0
    %789 = vmatprep.subr.mxu0 0.0
    %790 = vmatpush1.msra.mxu0 0.0
    %791 = vmatprep.subr.mxu0 0.0
    %792 = vmatpush1.msra.mxu0 0.0
    %793 = vmatprep.subr.mxu0 0.0
    %794 = vmatpush1.msra.mxu0 0.0
    %795 = vmatprep.subr.mxu0 0.0
    %796 = vmatpush1.msra.mxu0 0.0
    %797 = vmatprep.subr.mxu0 0.0
    %798 = vmatpush1.msra.mxu0 0.0
    %799 = vmatprep.subr.mxu0 0.0
    %800 = vmatpush1.msra.mxu0 0.0
    %801 = vmatprep.subr.mxu0 0.0
    %802 = vmatpush1.msra.mxu0 0.0
    %803 = vmatprep.subr.mxu0 0.0
    %804 = vmatpush1.msra.mxu0 0.0
    %805 = vmatprep.subr.mxu0 0.0
    %806 = vmatpush1.msra.mxu0 0.0
    %807 = vmatprep.subr.mxu0 0.0
    %808 = vmatpush1.msra.mxu0 0.0
    %809 = vmatprep.subr.mxu0 0.0
    %810 = vmatpush1.msra.mxu0 0.0
    %811 = vmatprep.subr.mxu0 0.0
    %812 = vmatpush1.msra.mxu0 0.0
    %813 = vmatprep.subr.mxu0 0.0
    %814 = vmatpush1.msra.mxu0 0.0
    %815 = vmatprep.subr.mxu0 0.0
    %816 = vmatpush1.msra.mxu0 0.0
    %817 = vmatprep.subr.mxu0 0.0
    %818 = vmatpush1.msra.mxu0 0.0
    %819 = vmatprep.subr.mxu0 0.0
    %820 = vmatpush1.msra.mxu0 0.0
    %821 = vmatprep.mubr.f32.mxu0 0.0
    %822 = vmatmul.mubr.f32.gmra.mrb[0].mxu0 %v608
    %v823 = vpop.f32.mrb[0].mxu0
    %v824 = vadd.f32 0.0, %v823
    %v825 = vpop.f32.mrb[0].mxu0
    %826 = vdwg.mxu0
    %827 = vmatprep.subr.mxu0 0.0
    %828 = vmatpush1.msra.mxu0 %v70
    %829 = vmatprep.subr.mxu0 0.0
    %830 = vmatpush1.msra.mxu0 %v71
    %831 = vmatprep.subr.mxu0 0.0
    %832 = vmatpush1.msra.mxu0 %v72
    %833 = vmatprep.subr.mxu0 0.0
    %834 = vmatpush1.msra.mxu0 %v73
    %835 = vmatprep.subr.mxu0 0.0
    %836 = vmatpush1.msra.mxu0 %v74
    %837 = vmatprep.subr.mxu0 0.0
    %838 = vmatpush1.msra.mxu0 %v75
    %839 = vmatprep.subr.mxu0 0.0
    %840 = vmatpush1.msra.mxu0 %v76
    %841 = vmatprep.subr.mxu0 0.0
    %842 = vmatpush1.msra.mxu0 %v77
    %843 = vmatprep.subr.mxu0 0.0
    %844 = vmatpush1.msra.mxu0 %v78
    %845 = vmatprep.subr.mxu0 0.0
    %846 = vmatpush1.msra.mxu0 %v79
    %847 = vmatprep.subr.mxu0 0.0
    %848 = vmatpush1.msra.mxu0 %v80
    %849 = vmatprep.subr.mxu0 0.0
    %850 = vmatpush1.msra.mxu0 %v81
    %851 = vmatprep.subr.mxu0 0.0
    %852 = vmatpush1.msra.mxu0 %v82
    %853 = vmatprep.subr.mxu0 0.0
    %854 = vmatpush1.msra.mxu0 %v83
    %855 = vmatprep.subr.mxu0 0.0
    %856 = vmatpush1.msra.mxu0 %v84
    %857 = vmatprep.subr.mxu0 0.0
    %858 = vmatpush1.msra.mxu0 %v85
    %859 = vmatprep.subr.mxu0 0.0
    %860 = vmatpush1.msra.mxu0 0.0
    %861 = vmatprep.subr.mxu0 0.0
    %862 = vmatpush1.msra.mxu0 0.0
    %863 = vmatprep.subr.mxu0 0.0
    %864 = vmatpush1.msra.mxu0 0.0
    %865 = vmatprep.subr.mxu0 0.0
    %866 = vmatpush1.msra.mxu0 0.0
    %867 = vmatprep.subr.mxu0 0.0
    %868 = vmatpush1.msra.mxu0 0.0
    %869 = vmatprep.subr.mxu0 0.0
    %870 = vmatpush1.msra.mxu0 0.0
    %871 = vmatprep.subr.mxu0 0.0
    %872 = vmatpush1.msra.mxu0 0.0
    %873 = vmatprep.subr.mxu0 0.0
    %874 = vmatpush1.msra.mxu0 0.0
    %875 = vmatprep.subr.mxu0 0.0
    %876 = vmatpush1.msra.mxu0 0.0
    %877 = vmatprep.subr.mxu0 0.0
    %878 = vmatpush1.msra.mxu0 0.0
    %879 = vmatprep.subr.mxu0 0.0
    %880 = vmatpush1.msra.mxu0 0.0
    %881 = vmatprep.subr.mxu0 0.0
    %882 = vmatpush1.msra.mxu0 0.0
    %883 = vmatprep.subr.mxu0 0.0
    %884 = vmatpush1.msra.mxu0 0.0
    %885 = vmatprep.subr.mxu0 0.0
    %886 = vmatpush1.msra.mxu0 0.0
    %887 = vmatprep.subr.mxu0 0.0
    %888 = vmatpush1.msra.mxu0 0.0
    %889 = vmatprep.subr.mxu0 0.0
    %890 = vmatpush1.msra.mxu0 0.0
    %891 = vmatprep.mubr.f32.mxu0 0.0
    %892 = vmatmul.mubr.f32.gmra.mrb[0].mxu0 %v606
    %v893 = vpop.f32.mrb[0].mxu0
    %v894 = vadd.f32 %v824, %v893
    %v895 = vpop.f32.mrb[0].mxu0
    %896 = vdwg.mxu0
    %v897 = vadd.f32 %v894, %v437
    %v898 = vxor.u32 %v897, 2147483648
    %v899 = vmul.f32 %v898, 1.442695
    %v900 = vpow.pop %v899
    %v901 = vadd.f32 %v900, 1.0
    %v902 = vrcp.pop %v901
    %v903 = vmul.f32 1.0, %v902
    %904 = vmatprep.subr.mxu0 0.0
    %905 = vmatpush1.msra.mxu0 %v86
    %906 = vmatprep.subr.mxu0 0.0
    %907 = vmatpush1.msra.mxu0 %v87
    %908 = vmatprep.subr.mxu0 0.0
    %909 = vmatpush1.msra.mxu0 %v88
    %910 = vmatprep.subr.mxu0 0.0
    %911 = vmatpush1.msra.mxu0 %v89
    %912 = vmatprep.subr.mxu0 0.0
    %913 = vmatpush1.msra.mxu0 %v90
    %914 = vmatprep.subr.mxu0 0.0
    %915 = vmatpush1.msra.mxu0 %v91
    %916 = vmatprep.subr.mxu0 0.0
    %917 = vmatpush1.msra.mxu0 %v92
    %918 = vmatprep.subr.mxu0 0.0
    %919 = vmatpush1.msra.mxu0 %v93
    %920 = vmatprep.subr.mxu0 0.0
    %921 = vmatpush1.msra.mxu0 %v94
    %922 = vmatprep.subr.mxu0 0.0
    %923 = vmatpush1.msra.mxu0 %v95
    %924 = vmatprep.subr.mxu0 0.0
    %925 = vmatpush1.msra.mxu0 %v96
    %926 = vmatprep.subr.mxu0 0.0
    %927 = vmatpush1.msra.mxu0 %v97
    %928 = vmatprep.subr.mxu0 0.0
    %929 = vmatpush1.msra.mxu0 %v98
    %930 = vmatprep.subr.mxu0 0.0
    %931 = vmatpush1.msra.mxu0 %v99
    %932 = vmatprep.subr.mxu0 0.0
    %933 = vmatpush1.msra.mxu0 %v100
    %934 = vmatprep.subr.mxu0 0.0
    %935 = vmatpush1.msra.mxu0 %v101
    %936 = vmatprep.subr.mxu0 0.0
    %937 = vmatpush1.msra.mxu0 0.0
    %938 = vmatprep.subr.mxu0 0.0
    %939 = vmatpush1.msra.mxu0 0.0
    %940 = vmatprep.subr.mxu0 0.0
    %941 = vmatpush1.msra.mxu0 0.0
    %942 = vmatprep.subr.mxu0 0.0
    %943 = vmatpush1.msra.mxu0 0.0
    %944 = vmatprep.subr.mxu0 0.0
    %945 = vmatpush1.msra.mxu0 0.0
    %946 = vmatprep.subr.mxu0 0.0
    %947 = vmatpush1.msra.mxu0 0.0
    %948 = vmatprep.subr.mxu0 0.0
    %949 = vmatpush1.msra.mxu0 0.0
    %950 = vmatprep.subr.mxu0 0.0
    %951 = vmatpush1.msra.mxu0 0.0
    %952 = vmatprep.subr.mxu0 0.0
    %953 = vmatpush1.msra.mxu0 0.0
    %954 = vmatprep.subr.mxu0 0.0
    %955 = vmatpush1.msra.mxu0 0.0
    %956 = vmatprep.subr.mxu0 0.0
    %957 = vmatpush1.msra.mxu0 0.0
    %958 = vmatprep.subr.mxu0 0.0
    %959 = vmatpush1.msra.mxu0 0.0
    %960 = vmatprep.subr.mxu0 0.0
    %961 = vmatpush1.msra.mxu0 0.0
    %962 = vmatprep.subr.mxu0 0.0
    %963 = vmatpush1.msra.mxu0 0.0
    %964 = vmatprep.subr.mxu0 0.0
    %965 = vmatpush1.msra.mxu0 0.0
    %966 = vmatprep.subr.mxu0 0.0
    %967 = vmatpush1.msra.mxu0 0.0
    %968 = vmatprep.mubr.f32.mxu0 0.0
    %969 = vmatmul.mubr.f32.gmra.mrb[0].mxu0 %v606
    %v970 = vpop.f32.mrb[0].mxu0
    %v971 = vadd.f32 %v450, %v970
    %v972 = vpop.f32.mrb[0].mxu0
    %973 = vdwg.mxu0
    %974 = vmatprep.subr.mxu0 0.0
    %975 = vmatpush1.msra.mxu0 %v110
    %976 = vmatprep.subr.mxu0 0.0
    %977 = vmatpush1.msra.mxu0 %v111
    %978 = vmatprep.subr.mxu0 0.0
    %979 = vmatpush1.msra.mxu0 %v112
    %980 = vmatprep.subr.mxu0 0.0
    %981 = vmatpush1.msra.mxu0 %v113
    %982 = vmatprep.subr.mxu0 0.0
    %983 = vmatpush1.msra.mxu0 0.0
    %984 = vmatprep.subr.mxu0 0.0
    %985 = vmatpush1.msra.mxu0 0.0
    %986 = vmatprep.subr.mxu0 0.0
    %987 = vmatpush1.msra.mxu0 0.0
    %988 = vmatprep.subr.mxu0 0.0
    %989 = vmatpush1.msra.mxu0 0.0
    %990 = vmatprep.subr.mxu0 0.0
    %991 = vmatpush1.msra.mxu0 0.0
    %992 = vmatprep.subr.mxu0 0.0
    %993 = vmatpush1.msra.mxu0 0.0
    %994 = vmatprep.subr.mxu0 0.0
    %995 = vmatpush1.msra.mxu0 0.0
    %996 = vmatprep.subr.mxu0 0.0
    %997 = vmatpush1.msra.mxu0 0.0
    %998 = vmatprep.subr.mxu0 0.0
    %999 = vmatpush1.msra.mxu0 0.0
    %1000 = vmatprep.subr.mxu0 0.0
    %1001 = vmatpush1.msra.mxu0 0.0
    %1002 = vmatprep.subr.mxu0 0.0
    %1003 = vmatpush1.msra.mxu0 0.0
    %1004 = vmatprep.subr.mxu0 0.0
    %1005 = vmatpush1.msra.mxu0 0.0
    %1006 = vmatprep.subr.mxu0 0.0
    %1007 = vmatpush1.msra.mxu0 0.0
    %1008 = vmatprep.subr.mxu0 0.0
    %1009 = vmatpush1.msra.mxu0 0.0
    %1010 = vmatprep.subr.mxu0 0.0
    %1011 = vmatpush1.msra.mxu0 0.0
    %1012 = vmatprep.subr.mxu0 0.0
    %1013 = vmatpush1.msra.mxu0 0.0
    %1014 = vmatprep.subr.mxu0 0.0
    %1015 = vmatpush1.msra.mxu0 0.0
    %1016 = vmatprep.subr.mxu0 0.0
    %1017 = vmatpush1.msra.mxu0 0.0
    %1018 = vmatprep.subr.mxu0 0.0
    %1019 = vmatpush1.msra.mxu0 0.0
    %1020 = vmatprep.subr.mxu0 0.0
    %1021 = vmatpush1.msra.mxu0 0.0
    %1022 = vmatprep.subr.mxu0 0.0
    %1023 = vmatpush1.msra.mxu0 0.0
    %1024 = vmatprep.subr.mxu0 0.0
    %1025 = vmatpush1.msra.mxu0 0.0
    %1026 = vmatprep.subr.mxu0 0.0
    %1027 = vmatpush1.msra.mxu0 0.0
    %1028 = vmatprep.subr.mxu0 0.0
    %1029 = vmatpush1.msra.mxu0 0.0
    %1030 = vmatprep.subr.mxu0 0.0
    %1031 = vmatpush1.msra.mxu0 0.0
    %1032 = vmatprep.subr.mxu0 0.0
    %1033 = vmatpush1.msra.mxu0 0.0
    %1034 = vmatprep.subr.mxu0 0.0
    %1035 = vmatpush1.msra.mxu0 0.0
    %1036 = vmatprep.subr.mxu0 0.0
    %1037 = vmatpush1.msra.mxu0 0.0
    %1038 = vmatprep.mubr.f32.mxu0 0.0
    %1039 = vmatmul.mubr.f32.gmra.mrb[0].mxu0 %v608
    %v1040 = vpop.f32.mrb[0].mxu0
    %v1041 = vadd.f32 %v526, %v1040
    %v1042 = vpop.f32.mrb[0].mxu0
    %1043 = vdwg.mxu0
    %v1044 = vmul.f32 %v756, %v1041
    %v1045 = vadd.f32 %v971, %v1044
    %v1046 = vtanh.pop %v1045
    %v1047 = vsub.f32 1.0, %v903
    %v1048 = vmul.f32 %v1047, %v1046
    %v1049 = vmul.f32 %v903, %v604
    %v1050 = vadd.f32 %v1048, %v1049
    %s1051 = scalar_lea.vmem %s0, 4
    %v1052 = vld [vmem:[%s1051] sm:$0x3]
    %v1054 = vsel %vm136, %v1050, 0
    %1056 = vmatprep.subr.mxu0 0.0
    %1057 = vmatpush1.msra.mxu0 %v102
    %1058 = vmatprep.subr.mxu0 0.0
    %1059 = vmatpush1.msra.mxu0 %v103
    %1060 = vmatprep.subr.mxu0 0.0
    %1061 = vmatpush1.msra.mxu0 %v104
    %1062 = vmatprep.subr.mxu0 0.0
    %1063 = vmatpush1.msra.mxu0 %v105
    %1064 = vmatprep.subr.mxu0 0.0
    %1065 = vmatpush1.msra.mxu0 0.0
    %1066 = vmatprep.subr.mxu0 0.0
    %1067 = vmatpush1.msra.mxu0 0.0
    %1068 = vmatprep.subr.mxu0 0.0
    %1069 = vmatpush1.msra.mxu0 0.0
    %1070 = vmatprep.subr.mxu0 0.0
    %1071 = vmatpush1.msra.mxu0 0.0
    %1072 = vmatprep.subr.mxu0 0.0
    %1073 = vmatpush1.msra.mxu0 0.0
    %1074 = vmatprep.subr.mxu0 0.0
    %1075 = vmatpush1.msra.mxu0 0.0
    %1076 = vmatprep.subr.mxu0 0.0
    %1077 = vmatpush1.msra.mxu0 0.0
    %1078 = vmatprep.subr.mxu0 0.0
    %1079 = vmatpush1.msra.mxu0 0.0
    %1080 = vmatprep.subr.mxu0 0.0
    %1081 = vmatpush1.msra.mxu0 0.0
    %1082 = vmatprep.subr.mxu0 0.0
    %1083 = vmatpush1.msra.mxu0 0.0
    %1084 = vmatprep.subr.mxu0 0.0
    %1085 = vmatpush1.msra.mxu0 0.0
    %1086 = vmatprep.subr.mxu0 0.0
    %1087 = vmatpush1.msra.mxu0 0.0
    %1088 = vmatprep.subr.mxu0 0.0
    %1089 = vmatpush1.msra.mxu0 0.0
    %1090 = vmatprep.subr.mxu0 0.0
    %1091 = vmatpush1.msra.mxu0 0.0
    %1092 = vmatprep.subr.mxu0 0.0
    %1093 = vmatpush1.msra.mxu0 0.0
    %1094 = vmatprep.subr.mxu0 0.0
    %1095 = vmatpush1.msra.mxu0 0.0
    %1096 = vmatprep.subr.mxu0 0.0
    %1097 = vmatpush1.msra.mxu0 0.0
    %1098 = vmatprep.subr.mxu0 0.0
    %1099 = vmatpush1.msra.mxu0 0.0
    %1100 = vmatprep.subr.mxu0 0.0
    %1101 = vmatpush1.msra.mxu0 0.0
    %1102 = vmatprep.subr.mxu0 0.0
    %1103 = vmatpush1.msra.mxu0 0.0
    %1104 = vmatprep.subr.mxu0 0.0
    %1105 = vmatpush1.msra.mxu0 0.0
    %1106 = vmatprep.subr.mxu0 0.0
    %1107 = vmatpush1.msra.mxu0 0.0
    %1108 = vmatprep.subr.mxu0 0.0
    %1109 = vmatpush1.msra.mxu0 0.0
    %1110 = vmatprep.subr.mxu0 0.0
    %1111 = vmatpush1.msra.mxu0 0.0
    %1112 = vmatprep.subr.mxu0 0.0
    %1113 = vmatpush1.msra.mxu0 0.0
    %1114 = vmatprep.subr.mxu0 0.0
    %1115 = vmatpush1.msra.mxu0 0.0
    %1116 = vmatprep.subr.mxu0 0.0
    %1117 = vmatpush1.msra.mxu0 0.0
    %1118 = vmatprep.subr.mxu0 0.0
    %1119 = vmatpush1.msra.mxu0 0.0
    %1120 = vmatprep.mubr.f32.mxu0 0.0
    %1121 = vmatmul.mubr.f32.gmra.mrb[0].mxu0 %v1054
    %v1122 = vpop.f32.mrb[0].mxu0
    %v1123 = vadd.f32 0.0, %v1122
    %v1124 = vpop.f32.mrb[0].mxu0
    %1125 = vdwg.mxu0
    %1126 = vmatprep.subr.mxu0 0.0
    %1127 = vmatpush1.msra.mxu0 %v54
    %1128 = vmatprep.subr.mxu0 0.0
    %1129 = vmatpush1.msra.mxu0 %v55
    %1130 = vmatprep.subr.mxu0 0.0
    %1131 = vmatpush1.msra.mxu0 %v56
    %1132 = vmatprep.subr.mxu0 0.0
    %1133 = vmatpush1.msra.mxu0 %v57
    %1134 = vmatprep.subr.mxu0 0.0
    %1135 = vmatpush1.msra.mxu0 %v58
    %1136 = vmatprep.subr.mxu0 0.0
    %1137 = vmatpush1.msra.mxu0 %v59
    %1138 = vmatprep.subr.mxu0 0.0
    %1139 = vmatpush1.msra.mxu0 %v60
    %1140 = vmatprep.subr.mxu0 0.0
    %1141 = vmatpush1.msra.mxu0 %v61
    %1142 = vmatprep.subr.mxu0 0.0
    %1143 = vmatpush1.msra.mxu0 %v62
    %1144 = vmatprep.subr.mxu0 0.0
    %1145 = vmatpush1.msra.mxu0 %v63
    %1146 = vmatprep.subr.mxu0 0.0
    %1147 = vmatpush1.msra.mxu0 %v64
    %1148 = vmatprep.subr.mxu0 0.0
    %1149 = vmatpush1.msra.mxu0 %v65
    %1150 = vmatprep.subr.mxu0 0.0
    %1151 = vmatpush1.msra.mxu0 %v66
    %1152 = vmatprep.subr.mxu0 0.0
    %1153 = vmatpush1.msra.mxu0 %v67
    %1154 = vmatprep.subr.mxu0 0.0
    %1155 = vmatpush1.msra.mxu0 %v68
    %1156 = vmatprep.subr.mxu0 0.0
    %1157 = vmatpush1.msra.mxu0 %v69
    %1158 = vmatprep.subr.mxu0 0.0
    %1159 = vmatpush1.msra.mxu0 0.0
    %1160 = vmatprep.subr.mxu0 0.0
    %1161 = vmatpush1.msra.mxu0 0.0
    %1162 = vmatprep.subr.mxu0 0.0
    %1163 = vmatpush1.msra.mxu0 0.0
    %1164 = vmatprep.subr.mxu0 0.0
    %1165 = vmatpush1.msra.mxu0 0.0
    %1166 = vmatprep.subr.mxu0 0.0
    %1167 = vmatpush1.msra.mxu0 0.0
    %1168 = vmatprep.subr.mxu0 0.0
    %1169 = vmatpush1.msra.mxu0 0.0
    %1170 = vmatprep.subr.mxu0 0.0
    %1171 = vmatpush1.msra.mxu0 0.0
    %1172 = vmatprep.subr.mxu0 0.0
    %1173 = vmatpush1.msra.mxu0 0.0
    %1174 = vmatprep.subr.mxu0 0.0
    %1175 = vmatpush1.msra.mxu0 0.0
    %1176 = vmatprep.subr.mxu0 0.0
    %1177 = vmatpush1.msra.mxu0 0.0
    %1178 = vmatprep.subr.mxu0 0.0
    %1179 = vmatpush1.msra.mxu0 0.0
    %1180 = vmatprep.subr.mxu0 0.0
    %1181 = vmatpush1.msra.mxu0 0.0
    %1182 = vmatprep.subr.mxu0 0.0
    %1183 = vmatpush1.msra.mxu0 0.0
    %1184 = vmatprep.subr.mxu0 0.0
    %1185 = vmatpush1.msra.mxu0 0.0
    %1186 = vmatprep.subr.mxu0 0.0
    %1187 = vmatpush1.msra.mxu0 0.0
    %1188 = vmatprep.subr.mxu0 0.0
    %1189 = vmatpush1.msra.mxu0 0.0
    %1190 = vmatprep.mubr.f32.mxu0 0.0
    %1191 = vmatmul.mubr.f32.gmra.mrb[0].mxu0 %v1052
    %v1192 = vpop.f32.mrb[0].mxu0
    %v1193 = vadd.f32 %v1123, %v1192
    %v1194 = vpop.f32.mrb[0].mxu0
    %1195 = vdwg.mxu0
    %v1196 = vadd.f32 %v1193, %v284
    %v1197 = vxor.u32 %v1196, 2147483648
    %v1198 = vmul.f32 %v1197, 1.442695
    %v1199 = vpow.pop %v1198
    %v1200 = vadd.f32 %v1199, 1.0
    %v1201 = vrcp.pop %v1200
    %v1202 = vmul.f32 1.0, %v1201
    %1203 = vmatprep.subr.mxu0 0.0
    %1204 = vmatpush1.msra.mxu0 %v106
    %1205 = vmatprep.subr.mxu0 0.0
    %1206 = vmatpush1.msra.mxu0 %v107
    %1207 = vmatprep.subr.mxu0 0.0
    %1208 = vmatpush1.msra.mxu0 %v108
    %1209 = vmatprep.subr.mxu0 0.0
    %1210 = vmatpush1.msra.mxu0 %v109
    %1211 = vmatprep.subr.mxu0 0.0
    %1212 = vmatpush1.msra.mxu0 0.0
    %1213 = vmatprep.subr.mxu0 0.0
    %1214 = vmatpush1.msra.mxu0 0.0
    %1215 = vmatprep.subr.mxu0 0.0
    %1216 = vmatpush1.msra.mxu0 0.0
    %1217 = vmatprep.subr.mxu0 0.0
    %1218 = vmatpush1.msra.mxu0 0.0
    %1219 = vmatprep.subr.mxu0 0.0
    %1220 = vmatpush1.msra.mxu0 0.0
    %1221 = vmatprep.subr.mxu0 0.0
    %1222 = vmatpush1.msra.mxu0 0.0
    %1223 = vmatprep.subr.mxu0 0.0
    %1224 = vmatpush1.msra.mxu0 0.0
    %1225 = vmatprep.subr.mxu0 0.0
    %1226 = vmatpush1.msra.mxu0 0.0
    %1227 = vmatprep.subr.mxu0 0.0
    %1228 = vmatpush1.msra.mxu0 0.0
    %1229 = vmatprep.subr.mxu0 0.0
    %1230 = vmatpush1.msra.mxu0 0.0
    %1231 = vmatprep.subr.mxu0 0.0
    %1232 = vmatpush1.msra.mxu0 0.0
    %1233 = vmatprep.subr.mxu0 0.0
    %1234 = vmatpush1.msra.mxu0 0.0
    %1235 = vmatprep.subr.mxu0 0.0
    %1236 = vmatpush1.msra.mxu0 0.0
    %1237 = vmatprep.subr.mxu0 0.0
    %1238 = vmatpush1.msra.mxu0 0.0
    %1239 = vmatprep.subr.mxu0 0.0
    %1240 = vmatpush1.msra.mxu0 0.0
    %1241 = vmatprep.subr.mxu0 0.0
    %1242 = vmatpush1.msra.mxu0 0.0
    %1243 = vmatprep.subr.mxu0 0.0
    %1244 = vmatpush1.msra.mxu0 0.0
    %1245 = vmatprep.subr.mxu0 0.0
    %1246 = vmatpush1.msra.mxu0 0.0
    %1247 = vmatprep.subr.mxu0 0.0
    %1248 = vmatpush1.msra.mxu0 0.0
    %1249 = vmatprep.subr.mxu0 0.0
    %1250 = vmatpush1.msra.mxu0 0.0
    %1251 = vmatprep.subr.mxu0 0.0
    %1252 = vmatpush1.msra.mxu0 0.0
    %1253 = vmatprep.subr.mxu0 0.0
    %1254 = vmatpush1.msra.mxu0 0.0
    %1255 = vmatprep.subr.mxu0 0.0
    %1256 = vmatpush1.msra.mxu0 0.0
    %1257 = vmatprep.subr.mxu0 0.0
    %1258 = vmatpush1.msra.mxu0 0.0
    %1259 = vmatprep.subr.mxu0 0.0
    %1260 = vmatpush1.msra.mxu0 0.0
    %1261 = vmatprep.subr.mxu0 0.0
    %1262 = vmatpush1.msra.mxu0 0.0
    %1263 = vmatprep.subr.mxu0 0.0
    %1264 = vmatpush1.msra.mxu0 0.0
    %1265 = vmatprep.subr.mxu0 0.0
    %1266 = vmatpush1.msra.mxu0 0.0
    %1267 = vmatprep.mubr.f32.mxu0 0.0
    %1268 = vmatmul.mubr.f32.gmra.mrb[0].mxu0 %v1054
    %v1269 = vpop.f32.mrb[0].mxu0
    %v1270 = vadd.f32 0.0, %v1269
    %v1271 = vpop.f32.mrb[0].mxu0
    %1272 = vdwg.mxu0
    %1273 = vmatprep.subr.mxu0 0.0
    %1274 = vmatpush1.msra.mxu0 %v70
    %1275 = vmatprep.subr.mxu0 0.0
    %1276 = vmatpush1.msra.mxu0 %v71
    %1277 = vmatprep.subr.mxu0 0.0
    %1278 = vmatpush1.msra.mxu0 %v72
    %1279 = vmatprep.subr.mxu0 0.0
    %1280 = vmatpush1.msra.mxu0 %v73
    %1281 = vmatprep.subr.mxu0 0.0
    %1282 = vmatpush1.msra.mxu0 %v74
    %1283 = vmatprep.subr.mxu0 0.0
    %1284 = vmatpush1.msra.mxu0 %v75
    %1285 = vmatprep.subr.mxu0 0.0
    %1286 = vmatpush1.msra.mxu0 %v76
    %1287 = vmatprep.subr.mxu0 0.0
    %1288 = vmatpush1.msra.mxu0 %v77
    %1289 = vmatprep.subr.mxu0 0.0
    %1290 = vmatpush1.msra.mxu0 %v78
    %1291 = vmatprep.subr.mxu0 0.0
    %1292 = vmatpush1.msra.mxu0 %v79
    %1293 = vmatprep.subr.mxu0 0.0
    %1294 = vmatpush1.msra.mxu0 %v80
    %1295 = vmatprep.subr.mxu0 0.0
    %1296 = vmatpush1.msra.mxu0 %v81
    %1297 = vmatprep.subr.mxu0 0.0
    %1298 = vmatpush1.msra.mxu0 %v82
    %1299 = vmatprep.subr.mxu0 0.0
    %1300 = vmatpush1.msra.mxu0 %v83
    %1301 = vmatprep.subr.mxu0 0.0
    %1302 = vmatpush1.msra.mxu0 %v84
    %1303 = vmatprep.subr.mxu0 0.0
    %1304 = vmatpush1.msra.mxu0 %v85
    %1305 = vmatprep.subr.mxu0 0.0
    %1306 = vmatpush1.msra.mxu0 0.0
    %1307 = vmatprep.subr.mxu0 0.0
    %1308 = vmatpush1.msra.mxu0 0.0
    %1309 = vmatprep.subr.mxu0 0.0
    %1310 = vmatpush1.msra.mxu0 0.0
    %1311 = vmatprep.subr.mxu0 0.0
    %1312 = vmatpush1.msra.mxu0 0.0
    %1313 = vmatprep.subr.mxu0 0.0
    %1314 = vmatpush1.msra.mxu0 0.0
    %1315 = vmatprep.subr.mxu0 0.0
    %1316 = vmatpush1.msra.mxu0 0.0
    %1317 = vmatprep.subr.mxu0 0.0
    %1318 = vmatpush1.msra.mxu0 0.0
    %1319 = vmatprep.subr.mxu0 0.0
    %1320 = vmatpush1.msra.mxu0 0.0
    %1321 = vmatprep.subr.mxu0 0.0
    %1322 = vmatpush1.msra.mxu0 0.0
    %1323 = vmatprep.subr.mxu0 0.0
    %1324 = vmatpush1.msra.mxu0 0.0
    %1325 = vmatprep.subr.mxu0 0.0
    %1326 = vmatpush1.msra.mxu0 0.0
    %1327 = vmatprep.subr.mxu0 0.0
    %1328 = vmatpush1.msra.mxu0 0.0
    %1329 = vmatprep.subr.mxu0 0.0
    %1330 = vmatpush1.msra.mxu0 0.0
    %1331 = vmatprep.subr.mxu0 0.0
    %1332 = vmatpush1.msra.mxu0 0.0
    %1333 = vmatprep.subr.mxu0 0.0
    %1334 = vmatpush1.msra.mxu0 0.0
    %1335 = vmatprep.subr.mxu0 0.0
    %1336 = vmatpush1.msra.mxu0 0.0
    %1337 = vmatprep.mubr.f32.mxu0 0.0
    %1338 = vmatmul.mubr.f32.gmra.mrb[0].mxu0 %v1052
    %v1339 = vpop.f32.mrb[0].mxu0
    %v1340 = vadd.f32 %v1270, %v1339
    %v1341 = vpop.f32.mrb[0].mxu0
    %1342 = vdwg.mxu0
    %v1343 = vadd.f32 %v1340, %v437
    %v1344 = vxor.u32 %v1343, 2147483648
    %v1345 = vmul.f32 %v1344, 1.442695
    %v1346 = vpow.pop %v1345
    %v1347 = vadd.f32 %v1346, 1.0
    %v1348 = vrcp.pop %v1347
    %v1349 = vmul.f32 1.0, %v1348
    %1350 = vmatprep.subr.mxu0 0.0
    %1351 = vmatpush1.msra.mxu0 %v86
    %1352 = vmatprep.subr.mxu0 0.0
    %1353 = vmatpush1.msra.mxu0 %v87
    %1354 = vmatprep.subr.mxu0 0.0
    %1355 = vmatpush1.msra.mxu0 %v88
    %1356 = vmatprep.subr.mxu0 0.0
    %1357 = vmatpush1.msra.mxu0 %v89
    %1358 = vmatprep.subr.mxu0 0.0
    %1359 = vmatpush1.msra.mxu0 %v90
    %1360 = vmatprep.subr.mxu0 0.0
    %1361 = vmatpush1.msra.mxu0 %v91
    %1362 = vmatprep.subr.mxu0 0.0
    %1363 = vmatpush1.msra.mxu0 %v92
    %1364 = vmatprep.subr.mxu0 0.0
    %1365 = vmatpush1.msra.mxu0 %v93
    %1366 = vmatprep.subr.mxu0 0.0
    %1367 = vmatpush1.msra.mxu0 %v94
    %1368 = vmatprep.subr.mxu0 0.0
    %1369 = vmatpush1.msra.mxu0 %v95
    %1370 = vmatprep.subr.mxu0 0.0
    %1371 = vmatpush1.msra.mxu0 %v96
    %1372 = vmatprep.subr.mxu0 0.0
    %1373 = vmatpush1.msra.mxu0 %v97
    %1374 = vmatprep.subr.mxu0 0.0
    %1375 = vmatpush1.msra.mxu0 %v98
    %1376 = vmatprep.subr.mxu0 0.0
    %1377 = vmatpush1.msra.mxu0 %v99
    %1378 = vmatprep.subr.mxu0 0.0
    %1379 = vmatpush1.msra.mxu0 %v100
    %1380 = vmatprep.subr.mxu0 0.0
    %1381 = vmatpush1.msra.mxu0 %v101
    %1382 = vmatprep.subr.mxu0 0.0
    %1383 = vmatpush1.msra.mxu0 0.0
    %1384 = vmatprep.subr.mxu0 0.0
    %1385 = vmatpush1.msra.mxu0 0.0
    %1386 = vmatprep.subr.mxu0 0.0
    %1387 = vmatpush1.msra.mxu0 0.0
    %1388 = vmatprep.subr.mxu0 0.0
    %1389 = vmatpush1.msra.mxu0 0.0
    %1390 = vmatprep.subr.mxu0 0.0
    %1391 = vmatpush1.msra.mxu0 0.0
    %1392 = vmatprep.subr.mxu0 0.0
    %1393 = vmatpush1.msra.mxu0 0.0
    %1394 = vmatprep.subr.mxu0 0.0
    %1395 = vmatpush1.msra.mxu0 0.0
    %1396 = vmatprep.subr.mxu0 0.0
    %1397 = vmatpush1.msra.mxu0 0.0
    %1398 = vmatprep.subr.mxu0 0.0
    %1399 = vmatpush1.msra.mxu0 0.0
    %1400 = vmatprep.subr.mxu0 0.0
    %1401 = vmatpush1.msra.mxu0 0.0
    %1402 = vmatprep.subr.mxu0 0.0
    %1403 = vmatpush1.msra.mxu0 0.0
    %1404 = vmatprep.subr.mxu0 0.0
    %1405 = vmatpush1.msra.mxu0 0.0
    %1406 = vmatprep.subr.mxu0 0.0
    %1407 = vmatpush1.msra.mxu0 0.0
    %1408 = vmatprep.subr.mxu0 0.0
    %1409 = vmatpush1.msra.mxu0 0.0
    %1410 = vmatprep.subr.mxu0 0.0
    %1411 = vmatpush1.msra.mxu0 0.0
    %1412 = vmatprep.subr.mxu0 0.0
    %1413 = vmatpush1.msra.mxu0 0.0
    %1414 = vmatprep.mubr.f32.mxu0 0.0
    %1415 = vmatmul.mubr.f32.gmra.mrb[0].mxu0 %v1052
    %v1416 = vpop.f32.mrb[0].mxu0
    %v1417 = vadd.f32 %v450, %v1416
    %v1418 = vpop.f32.mrb[0].mxu0
    %1419 = vdwg.mxu0
    %1420 = vmatprep.subr.mxu0 0.0
    %1421 = vmatpush1.msra.mxu0 %v110
    %1422 = vmatprep.subr.mxu0 0.0
    %1423 = vmatpush1.msra.mxu0 %v111
    %1424 = vmatprep.subr.mxu0 0.0
    %1425 = vmatpush1.msra.mxu0 %v112
    %1426 = vmatprep.subr.mxu0 0.0
    %1427 = vmatpush1.msra.mxu0 %v113
    %1428 = vmatprep.subr.mxu0 0.0
    %1429 = vmatpush1.msra.mxu0 0.0
    %1430 = vmatprep.subr.mxu0 0.0
    %1431 = vmatpush1.msra.mxu0 0.0
    %1432 = vmatprep.subr.mxu0 0.0
    %1433 = vmatpush1.msra.mxu0 0.0
    %1434 = vmatprep.subr.mxu0 0.0
    %1435 = vmatpush1.msra.mxu0 0.0
    %1436 = vmatprep.subr.mxu0 0.0
    %1437 = vmatpush1.msra.mxu0 0.0
    %1438 = vmatprep.subr.mxu0 0.0
    %1439 = vmatpush1.msra.mxu0 0.0
    %1440 = vmatprep.subr.mxu0 0.0
    %1441 = vmatpush1.msra.mxu0 0.0
    %1442 = vmatprep.subr.mxu0 0.0
    %1443 = vmatpush1.msra.mxu0 0.0
    %1444 = vmatprep.subr.mxu0 0.0
    %1445 = vmatpush1.msra.mxu0 0.0
    %1446 = vmatprep.subr.mxu0 0.0
    %1447 = vmatpush1.msra.mxu0 0.0
    %1448 = vmatprep.subr.mxu0 0.0
    %1449 = vmatpush1.msra.mxu0 0.0
    %1450 = vmatprep.subr.mxu0 0.0
    %1451 = vmatpush1.msra.mxu0 0.0
    %1452 = vmatprep.subr.mxu0 0.0
    %1453 = vmatpush1.msra.mxu0 0.0
    %1454 = vmatprep.subr.mxu0 0.0
    %1455 = vmatpush1.msra.mxu0 0.0
    %1456 = vmatprep.subr.mxu0 0.0
    %1457 = vmatpush1.msra.mxu0 0.0
    %1458 = vmatprep.subr.mxu0 0.0
    %1459 = vmatpush1.msra.mxu0 0.0
    %1460 = vmatprep.subr.mxu0 0.0
    %1461 = vmatpush1.msra.mxu0 0.0
    %1462 = vmatprep.subr.mxu0 0.0
    %1463 = vmatpush1.msra.mxu0 0.0
    %1464 = vmatprep.subr.mxu0 0.0
    %1465 = vmatpush1.msra.mxu0 0.0
    %1466 = vmatprep.subr.mxu0 0.0
    %1467 = vmatpush1.msra.mxu0 0.0
    %1468 = vmatprep.subr.mxu0 0.0
    %1469 = vmatpush1.msra.mxu0 0.0
    %1470 = vmatprep.subr.mxu0 0.0
    %1471 = vmatpush1.msra.mxu0 0.0
    %1472 = vmatprep.subr.mxu0 0.0
    %1473 = vmatpush1.msra.mxu0 0.0
    %1474 = vmatprep.subr.mxu0 0.0
    %1475 = vmatpush1.msra.mxu0 0.0
    %1476 = vmatprep.subr.mxu0 0.0
    %1477 = vmatpush1.msra.mxu0 0.0
    %1478 = vmatprep.subr.mxu0 0.0
    %1479 = vmatpush1.msra.mxu0 0.0
    %1480 = vmatprep.subr.mxu0 0.0
    %1481 = vmatpush1.msra.mxu0 0.0
    %1482 = vmatprep.subr.mxu0 0.0
    %1483 = vmatpush1.msra.mxu0 0.0
    %1484 = vmatprep.mubr.f32.mxu0 0.0
    %1485 = vmatmul.mubr.f32.gmra.mrb[0].mxu0 %v1054
    %v1486 = vpop.f32.mrb[0].mxu0
    %v1487 = vadd.f32 %v526, %v1486
    %v1488 = vpop.f32.mrb[0].mxu0
    %1489 = vdwg.mxu0
    %v1490 = vmul.f32 %v1202, %v1487
    %v1491 = vadd.f32 %v1417, %v1490
    %v1492 = vtanh.pop %v1491
    %v1493 = vsub.f32 1.0, %v1349
    %v1494 = vmul.f32 %v1493, %v1492
    %v1495 = vmul.f32 %v1349, %v1050
    %v1496 = vadd.f32 %v1494, %v1495
    %s1497 = scalar_lea.vmem %s0, 6
    %v1498 = vld [vmem:[%s1497] sm:$0x3]
    %v1500 = vsel %vm136, %v1496, 0
    %1502 = vmatprep.subr.mxu0 0.0
    %1503 = vmatpush1.msra.mxu0 %v102
    %1504 = vmatprep.subr.mxu0 0.0
    %1505 = vmatpush1.msra.mxu0 %v103
    %1506 = vmatprep.subr.mxu0 0.0
    %1507 = vmatpush1.msra.mxu0 %v104
    %1508 = vmatprep.subr.mxu0 0.0
    %1509 = vmatpush1.msra.mxu0 %v105
    %1510 = vmatprep.subr.mxu0 0.0
    %1511 = vmatpush1.msra.mxu0 0.0
    %1512 = vmatprep.subr.mxu0 0.0
    %1513 = vmatpush1.msra.mxu0 0.0
    %1514 = vmatprep.subr.mxu0 0.0
    %1515 = vmatpush1.msra.mxu0 0.0
    %1516 = vmatprep.subr.mxu0 0.0
    %1517 = vmatpush1.msra.mxu0 0.0
    %1518 = vmatprep.subr.mxu0 0.0
    %1519 = vmatpush1.msra.mxu0 0.0
    %1520 = vmatprep.subr.mxu0 0.0
    %1521 = vmatpush1.msra.mxu0 0.0
    %1522 = vmatprep.subr.mxu0 0.0
    %1523 = vmatpush1.msra.mxu0 0.0
    %1524 = vmatprep.subr.mxu0 0.0
    %1525 = vmatpush1.msra.mxu0 0.0
    %1526 = vmatprep.subr.mxu0 0.0
    %1527 = vmatpush1.msra.mxu0 0.0
    %1528 = vmatprep.subr.mxu0 0.0
    %1529 = vmatpush1.msra.mxu0 0.0
    %1530 = vmatprep.subr.mxu0 0.0
    %1531 = vmatpush1.msra.mxu0 0.0
    %1532 = vmatprep.subr.mxu0 0.0
    %1533 = vmatpush1.msra.mxu0 0.0
    %1534 = vmatprep.subr.mxu0 0.0
    %1535 = vmatpush1.msra.mxu0 0.0
    %1536 = vmatprep.subr.mxu0 0.0
    %1537 = vmatpush1.msra.mxu0 0.0
    %1538 = vmatprep.subr.mxu0 0.0
    %1539 = vmatpush1.msra.mxu0 0.0
    %1540 = vmatprep.subr.mxu0 0.0
    %1541 = vmatpush1.msra.mxu0 0.0
    %1542 = vmatprep.subr.mxu0 0.0
    %1543 = vmatpush1.msra.mxu0 0.0
    %1544 = vmatprep.subr.mxu0 0.0
    %1545 = vmatpush1.msra.mxu0 0.0
    %1546 = vmatprep.subr.mxu0 0.0
    %1547 = vmatpush1.msra.mxu0 0.0
    %1548 = vmatprep.subr.mxu0 0.0
    %1549 = vmatpush1.msra.mxu0 0.0
    %1550 = vmatprep.subr.mxu0 0.0
    %1551 = vmatpush1.msra.mxu0 0.0
    %1552 = vmatprep.subr.mxu0 0.0
    %1553 = vmatpush1.msra.mxu0 0.0
    %1554 = vmatprep.subr.mxu0 0.0
    %1555 = vmatpush1.msra.mxu0 0.0
    %1556 = vmatprep.subr.mxu0 0.0
    %1557 = vmatpush1.msra.mxu0 0.0
    %1558 = vmatprep.subr.mxu0 0.0
    %1559 = vmatpush1.msra.mxu0 0.0
    %1560 = vmatprep.subr.mxu0 0.0
    %1561 = vmatpush1.msra.mxu0 0.0
    %1562 = vmatprep.subr.mxu0 0.0
    %1563 = vmatpush1.msra.mxu0 0.0
    %1564 = vmatprep.subr.mxu0 0.0
    %1565 = vmatpush1.msra.mxu0 0.0
    %1566 = vmatprep.mubr.f32.mxu0 0.0
    %1567 = vmatmul.mubr.f32.gmra.mrb[0].mxu0 %v1500
    %v1568 = vpop.f32.mrb[0].mxu0
    %v1569 = vadd.f32 0.0, %v1568
    %v1570 = vpop.f32.mrb[0].mxu0
    %1571 = vdwg.mxu0
    %1572 = vmatprep.subr.mxu0 0.0
    %1573 = vmatpush1.msra.mxu0 %v54
    %1574 = vmatprep.subr.mxu0 0.0
    %1575 = vmatpush1.msra.mxu0 %v55
    %1576 = vmatprep.subr.mxu0 0.0
    %1577 = vmatpush1.msra.mxu0 %v56
    %1578 = vmatprep.subr.mxu0 0.0
    %1579 = vmatpush1.msra.mxu0 %v57
    %1580 = vmatprep.subr.mxu0 0.0
    %1581 = vmatpush1.msra.mxu0 %v58
    %1582 = vmatprep.subr.mxu0 0.0
    %1583 = vmatpush1.msra.mxu0 %v59
    %1584 = vmatprep.subr.mxu0 0.0
    %1585 = vmatpush1.msra.mxu0 %v60
    %1586 = vmatprep.subr.mxu0 0.0
    %1587 = vmatpush1.msra.mxu0 %v61
    %1588 = vmatprep.subr.mxu0 0.0
    %1589 = vmatpush1.msra.mxu0 %v62
    %1590 = vmatprep.subr.mxu0 0.0
    %1591 = vmatpush1.msra.mxu0 %v63
    %1592 = vmatprep.subr.mxu0 0.0
    %1593 = vmatpush1.msra.mxu0 %v64
    %1594 = vmatprep.subr.mxu0 0.0
    %1595 = vmatpush1.msra.mxu0 %v65
    %1596 = vmatprep.subr.mxu0 0.0
    %1597 = vmatpush1.msra.mxu0 %v66
    %1598 = vmatprep.subr.mxu0 0.0
    %1599 = vmatpush1.msra.mxu0 %v67
    %1600 = vmatprep.subr.mxu0 0.0
    %1601 = vmatpush1.msra.mxu0 %v68
    %1602 = vmatprep.subr.mxu0 0.0
    %1603 = vmatpush1.msra.mxu0 %v69
    %1604 = vmatprep.subr.mxu0 0.0
    %1605 = vmatpush1.msra.mxu0 0.0
    %1606 = vmatprep.subr.mxu0 0.0
    %1607 = vmatpush1.msra.mxu0 0.0
    %1608 = vmatprep.subr.mxu0 0.0
    %1609 = vmatpush1.msra.mxu0 0.0
    %1610 = vmatprep.subr.mxu0 0.0
    %1611 = vmatpush1.msra.mxu0 0.0
    %1612 = vmatprep.subr.mxu0 0.0
    %1613 = vmatpush1.msra.mxu0 0.0
    %1614 = vmatprep.subr.mxu0 0.0
    %1615 = vmatpush1.msra.mxu0 0.0
    %1616 = vmatprep.subr.mxu0 0.0
    %1617 = vmatpush1.msra.mxu0 0.0
    %1618 = vmatprep.subr.mxu0 0.0
    %1619 = vmatpush1.msra.mxu0 0.0
    %1620 = vmatprep.subr.mxu0 0.0
    %1621 = vmatpush1.msra.mxu0 0.0
    %1622 = vmatprep.subr.mxu0 0.0
    %1623 = vmatpush1.msra.mxu0 0.0
    %1624 = vmatprep.subr.mxu0 0.0
    %1625 = vmatpush1.msra.mxu0 0.0
    %1626 = vmatprep.subr.mxu0 0.0
    %1627 = vmatpush1.msra.mxu0 0.0
    %1628 = vmatprep.subr.mxu0 0.0
    %1629 = vmatpush1.msra.mxu0 0.0
    %1630 = vmatprep.subr.mxu0 0.0
    %1631 = vmatpush1.msra.mxu0 0.0
    %1632 = vmatprep.subr.mxu0 0.0
    %1633 = vmatpush1.msra.mxu0 0.0
    %1634 = vmatprep.subr.mxu0 0.0
    %1635 = vmatpush1.msra.mxu0 0.0
    %1636 = vmatprep.mubr.f32.mxu0 0.0
    %1637 = vmatmul.mubr.f32.gmra.mrb[0].mxu0 %v1498
    %v1638 = vpop.f32.mrb[0].mxu0
    %v1639 = vadd.f32 %v1569, %v1638
    %v1640 = vpop.f32.mrb[0].mxu0
    %1641 = vdwg.mxu0
    %v1642 = vadd.f32 %v1639, %v284
    %v1643 = vxor.u32 %v1642, 2147483648
    %v1644 = vmul.f32 %v1643, 1.442695
    %v1645 = vpow.pop %v1644
    %v1646 = vadd.f32 %v1645, 1.0
    %v1647 = vrcp.pop %v1646
    %v1648 = vmul.f32 1.0, %v1647
    %1649 = vmatprep.subr.mxu0 0.0
    %1650 = vmatpush1.msra.mxu0 %v106
    %1651 = vmatprep.subr.mxu0 0.0
    %1652 = vmatpush1.msra.mxu0 %v107
    %1653 = vmatprep.subr.mxu0 0.0
    %1654 = vmatpush1.msra.mxu0 %v108
    %1655 = vmatprep.subr.mxu0 0.0
    %1656 = vmatpush1.msra.mxu0 %v109
    %1657 = vmatprep.subr.mxu0 0.0
    %1658 = vmatpush1.msra.mxu0 0.0
    %1659 = vmatprep.subr.mxu0 0.0
    %1660 = vmatpush1.msra.mxu0 0.0
    %1661 = vmatprep.subr.mxu0 0.0
    %1662 = vmatpush1.msra.mxu0 0.0
    %1663 = vmatprep.subr.mxu0 0.0
    %1664 = vmatpush1.msra.mxu0 0.0
    %1665 = vmatprep.subr.mxu0 0.0
    %1666 = vmatpush1.msra.mxu0 0.0
    %1667 = vmatprep.subr.mxu0 0.0
    %1668 = vmatpush1.msra.mxu0 0.0
    %1669 = vmatprep.subr.mxu0 0.0
    %1670 = vmatpush1.msra.mxu0 0.0
    %1671 = vmatprep.subr.mxu0 0.0
    %1672 = vmatpush1.msra.mxu0 0.0
    %1673 = vmatprep.subr.mxu0 0.0
    %1674 = vmatpush1.msra.mxu0 0.0
    %1675 = vmatprep.subr.mxu0 0.0
    %1676 = vmatpush1.msra.mxu0 0.0
    %1677 = vmatprep.subr.mxu0 0.0
    %1678 = vmatpush1.msra.mxu0 0.0
    %1679 = vmatprep.subr.mxu0 0.0
    %1680 = vmatpush1.msra.mxu0 0.0
    %1681 = vmatprep.subr.mxu0 0.0
    %1682 = vmatpush1.msra.mxu0 0.0
    %1683 = vmatprep.subr.mxu0 0.0
    %1684 = vmatpush1.msra.mxu0 0.0
    %1685 = vmatprep.subr.mxu0 0.0
    %1686 = vmatpush1.msra.mxu0 0.0
    %1687 = vmatprep.subr.mxu0 0.0
    %1688 = vmatpush1.msra.mxu0 0.0
    %1689 = vmatprep.subr.mxu0 0.0
    %1690 = vmatpush1.msra.mxu0 0.0
    %1691 = vmatprep.subr.mxu0 0.0
    %1692 = vmatpush1.msra.mxu0 0.0
    %1693 = vmatprep.subr.mxu0 0.0
    %1694 = vmatpush1.msra.mxu0 0.0
    %1695 = vmatprep.subr.mxu0 0.0
    %1696 = vmatpush1.msra.mxu0 0.0
    %1697 = vmatprep.subr.mxu0 0.0
    %1698 = vmatpush1.msra.mxu0 0.0
    %1699 = vmatprep.subr.mxu0 0.0
    %1700 = vmatpush1.msra.mxu0 0.0
    %1701 = vmatprep.subr.mxu0 0.0
    %1702 = vmatpush1.msra.mxu0 0.0
    %1703 = vmatprep.subr.mxu0 0.0
    %1704 = vmatpush1.msra.mxu0 0.0
    %1705 = vmatprep.subr.mxu0 0.0
    %1706 = vmatpush1.msra.mxu0 0.0
    %1707 = vmatprep.subr.mxu0 0.0
    %1708 = vmatpush1.msra.mxu0 0.0
    %1709 = vmatprep.subr.mxu0 0.0
    %1710 = vmatpush1.msra.mxu0 0.0
    %1711 = vmatprep.subr.mxu0 0.0
    %1712 = vmatpush1.msra.mxu0 0.0
    %1713 = vmatprep.mubr.f32.mxu0 0.0
    %1714 = vmatmul.mubr.f32.gmra.mrb[0].mxu0 %v1500
    %v1715 = vpop.f32.mrb[0].mxu0
    %v1716 = vadd.f32 0.0, %v1715
    %v1717 = vpop.f32.mrb[0].mxu0
    %1718 = vdwg.mxu0
    %1719 = vmatprep.subr.mxu0 0.0
    %1720 = vmatpush1.msra.mxu0 %v70
    %1721 = vmatprep.subr.mxu0 0.0
    %1722 = vmatpush1.msra.mxu0 %v71
    %1723 = vmatprep.subr.mxu0 0.0
    %1724 = vmatpush1.msra.mxu0 %v72
    %1725 = vmatprep.subr.mxu0 0.0
    %1726 = vmatpush1.msra.mxu0 %v73
    %1727 = vmatprep.subr.mxu0 0.0
    %1728 = vmatpush1.msra.mxu0 %v74
    %1729 = vmatprep.subr.mxu0 0.0
    %1730 = vmatpush1.msra.mxu0 %v75
    %1731 = vmatprep.subr.mxu0 0.0
    %1732 = vmatpush1.msra.mxu0 %v76
    %1733 = vmatprep.subr.mxu0 0.0
    %1734 = vmatpush1.msra.mxu0 %v77
    %1735 = vmatprep.subr.mxu0 0.0
    %1736 = vmatpush1.msra.mxu0 %v78
    %1737 = vmatprep.subr.mxu0 0.0
    %1738 = vmatpush1.msra.mxu0 %v79
    %1739 = vmatprep.subr.mxu0 0.0
    %1740 = vmatpush1.msra.mxu0 %v80
    %1741 = vmatprep.subr.mxu0 0.0
    %1742 = vmatpush1.msra.mxu0 %v81
    %1743 = vmatprep.subr.mxu0 0.0
    %1744 = vmatpush1.msra.mxu0 %v82
    %1745 = vmatprep.subr.mxu0 0.0
    %1746 = vmatpush1.msra.mxu0 %v83
    %1747 = vmatprep.subr.mxu0 0.0
    %1748 = vmatpush1.msra.mxu0 %v84
    %1749 = vmatprep.subr.mxu0 0.0
    %1750 = vmatpush1.msra.mxu0 %v85
    %1751 = vmatprep.subr.mxu0 0.0
    %1752 = vmatpush1.msra.mxu0 0.0
    %1753 = vmatprep.subr.mxu0 0.0
    %1754 = vmatpush1.msra.mxu0 0.0
    %1755 = vmatprep.subr.mxu0 0.0
    %1756 = vmatpush1.msra.mxu0 0.0
    %1757 = vmatprep.subr.mxu0 0.0
    %1758 = vmatpush1.msra.mxu0 0.0
    %1759 = vmatprep.subr.mxu0 0.0
    %1760 = vmatpush1.msra.mxu0 0.0
    %1761 = vmatprep.subr.mxu0 0.0
    %1762 = vmatpush1.msra.mxu0 0.0
    %1763 = vmatprep.subr.mxu0 0.0
    %1764 = vmatpush1.msra.mxu0 0.0
    %1765 = vmatprep.subr.mxu0 0.0
    %1766 = vmatpush1.msra.mxu0 0.0
    %1767 = vmatprep.subr.mxu0 0.0
    %1768 = vmatpush1.msra.mxu0 0.0
    %1769 = vmatprep.subr.mxu0 0.0
    %1770 = vmatpush1.msra.mxu0 0.0
    %1771 = vmatprep.subr.mxu0 0.0
    %1772 = vmatpush1.msra.mxu0 0.0
    %1773 = vmatprep.subr.mxu0 0.0
    %1774 = vmatpush1.msra.mxu0 0.0
    %1775 = vmatprep.subr.mxu0 0.0
    %1776 = vmatpush1.msra.mxu0 0.0
    %1777 = vmatprep.subr.mxu0 0.0
    %1778 = vmatpush1.msra.mxu0 0.0
    %1779 = vmatprep.subr.mxu0 0.0
    %1780 = vmatpush1.msra.mxu0 0.0
    %1781 = vmatprep.subr.mxu0 0.0
    %1782 = vmatpush1.msra.mxu0 0.0
    %1783 = vmatprep.mubr.f32.mxu0 0.0
    %1784 = vmatmul.mubr.f32.gmra.mrb[0].mxu0 %v1498
    %v1785 = vpop.f32.mrb[0].mxu0
    %v1786 = vadd.f32 %v1716, %v1785
    %v1787 = vpop.f32.mrb[0].mxu0
    %1788 = vdwg.mxu0
    %v1789 = vadd.f32 %v1786, %v437
    %v1790 = vxor.u32 %v1789, 2147483648
    %v1791 = vmul.f32 %v1790, 1.442695
    %v1792 = vpow.pop %v1791
    %v1793 = vadd.f32 %v1792, 1.0
    %v1794 = vrcp.pop %v1793
    %v1795 = vmul.f32 1.0, %v1794
    %1796 = vmatprep.subr.mxu0 0.0
    %1797 = vmatpush1.msra.mxu0 %v86
    %1798 = vmatprep.subr.mxu0 0.0
    %1799 = vmatpush1.msra.mxu0 %v87
    %1800 = vmatprep.subr.mxu0 0.0
    %1801 = vmatpush1.msra.mxu0 %v88
    %1802 = vmatprep.subr.mxu0 0.0
    %1803 = vmatpush1.msra.mxu0 %v89
    %1804 = vmatprep.subr.mxu0 0.0
    %1805 = vmatpush1.msra.mxu0 %v90
    %1806 = vmatprep.subr.mxu0 0.0
    %1807 = vmatpush1.msra.mxu0 %v91
    %1808 = vmatprep.subr.mxu0 0.0
    %1809 = vmatpush1.msra.mxu0 %v92
    %1810 = vmatprep.subr.mxu0 0.0
    %1811 = vmatpush1.msra.mxu0 %v93
    %1812 = vmatprep.subr.mxu0 0.0
    %1813 = vmatpush1.msra.mxu0 %v94
    %1814 = vmatprep.subr.mxu0 0.0
    %1815 = vmatpush1.msra.mxu0 %v95
    %1816 = vmatprep.subr.mxu0 0.0
    %1817 = vmatpush1.msra.mxu0 %v96
    %1818 = vmatprep.subr.mxu0 0.0
    %1819 = vmatpush1.msra.mxu0 %v97
    %1820 = vmatprep.subr.mxu0 0.0
    %1821 = vmatpush1.msra.mxu0 %v98
    %1822 = vmatprep.subr.mxu0 0.0
    %1823 = vmatpush1.msra.mxu0 %v99
    %1824 = vmatprep.subr.mxu0 0.0
    %1825 = vmatpush1.msra.mxu0 %v100
    %1826 = vmatprep.subr.mxu0 0.0
    %1827 = vmatpush1.msra.mxu0 %v101
    %1828 = vmatprep.subr.mxu0 0.0
    %1829 = vmatpush1.msra.mxu0 0.0
    %1830 = vmatprep.subr.mxu0 0.0
    %1831 = vmatpush1.msra.mxu0 0.0
    %1832 = vmatprep.subr.mxu0 0.0
    %1833 = vmatpush1.msra.mxu0 0.0
    %1834 = vmatprep.subr.mxu0 0.0
    %1835 = vmatpush1.msra.mxu0 0.0
    %1836 = vmatprep.subr.mxu0 0.0
    %1837 = vmatpush1.msra.mxu0 0.0
    %1838 = vmatprep.subr.mxu0 0.0
    %1839 = vmatpush1.msra.mxu0 0.0
    %1840 = vmatprep.subr.mxu0 0.0
    %1841 = vmatpush1.msra.mxu0 0.0
    %1842 = vmatprep.subr.mxu0 0.0
    %1843 = vmatpush1.msra.mxu0 0.0
    %1844 = vmatprep.subr.mxu0 0.0
    %1845 = vmatpush1.msra.mxu0 0.0
    %1846 = vmatprep.subr.mxu0 0.0
    %1847 = vmatpush1.msra.mxu0 0.0
    %1848 = vmatprep.subr.mxu0 0.0
    %1849 = vmatpush1.msra.mxu0 0.0
    %1850 = vmatprep.subr.mxu0 0.0
    %1851 = vmatpush1.msra.mxu0 0.0
    %1852 = vmatprep.subr.mxu0 0.0
    %1853 = vmatpush1.msra.mxu0 0.0
    %1854 = vmatprep.subr.mxu0 0.0
    %1855 = vmatpush1.msra.mxu0 0.0
    %1856 = vmatprep.subr.mxu0 0.0
    %1857 = vmatpush1.msra.mxu0 0.0
    %1858 = vmatprep.subr.mxu0 0.0
    %1859 = vmatpush1.msra.mxu0 0.0
    %1860 = vmatprep.mubr.f32.mxu0 0.0
    %1861 = vmatmul.mubr.f32.gmra.mrb[0].mxu0 %v1498
    %v1862 = vpop.f32.mrb[0].mxu0
    %v1863 = vadd.f32 %v450, %v1862
    %v1864 = vpop.f32.mrb[0].mxu0
    %1865 = vdwg.mxu0
    %1866 = vmatprep.subr.mxu0 0.0
    %1867 = vmatpush1.msra.mxu0 %v110
    %1868 = vmatprep.subr.mxu0 0.0
    %1869 = vmatpush1.msra.mxu0 %v111
    %1870 = vmatprep.subr.mxu0 0.0
    %1871 = vmatpush1.msra.mxu0 %v112
    %1872 = vmatprep.subr.mxu0 0.0
    %1873 = vmatpush1.msra.mxu0 %v113
    %1874 = vmatprep.subr.mxu0 0.0
    %1875 = vmatpush1.msra.mxu0 0.0
    %1876 = vmatprep.subr.mxu0 0.0
    %1877 = vmatpush1.msra.mxu0 0.0
    %1878 = vmatprep.subr.mxu0 0.0
    %1879 = vmatpush1.msra.mxu0 0.0
    %1880 = vmatprep.subr.mxu0 0.0
    %1881 = vmatpush1.msra.mxu0 0.0
    %1882 = vmatprep.subr.mxu0 0.0
    %1883 = vmatpush1.msra.mxu0 0.0
    %1884 = vmatprep.subr.mxu0 0.0
    %1885 = vmatpush1.msra.mxu0 0.0
    %1886 = vmatprep.subr.mxu0 0.0
    %1887 = vmatpush1.msra.mxu0 0.0
    %1888 = vmatprep.subr.mxu0 0.0
    %1889 = vmatpush1.msra.mxu0 0.0
    %1890 = vmatprep.subr.mxu0 0.0
    %1891 = vmatpush1.msra.mxu0 0.0
    %1892 = vmatprep.subr.mxu0 0.0
    %1893 = vmatpush1.msra.mxu0 0.0
    %1894 = vmatprep.subr.mxu0 0.0
    %1895 = vmatpush1.msra.mxu0 0.0
    %1896 = vmatprep.subr.mxu0 0.0
    %1897 = vmatpush1.msra.mxu0 0.0
    %1898 = vmatprep.subr.mxu0 0.0
    %1899 = vmatpush1.msra.mxu0 0.0
    %1900 = vmatprep.subr.mxu0 0.0
    %1901 = vmatpush1.msra.mxu0 0.0
    %1902 = vmatprep.subr.mxu0 0.0
    %1903 = vmatpush1.msra.mxu0 0.0
    %1904 = vmatprep.subr.mxu0 0.0
    %1905 = vmatpush1.msra.mxu0 0.0
    %1906 = vmatprep.subr.mxu0 0.0
    %1907 = vmatpush1.msra.mxu0 0.0
    %1908 = vmatprep.subr.mxu0 0.0
    %1909 = vmatpush1.msra.mxu0 0.0
    %1910 = vmatprep.subr.mxu0 0.0
    %1911 = vmatpush1.msra.mxu0 0.0
    %1912 = vmatprep.subr.mxu0 0.0
    %1913 = vmatpush1.msra.mxu0 0.0
    %1914 = vmatprep.subr.mxu0 0.0
    %1915 = vmatpush1.msra.mxu0 0.0
    %1916 = vmatprep.subr.mxu0 0.0
    %1917 = vmatpush1.msra.mxu0 0.0
    %1918 = vmatprep.subr.mxu0 0.0
    %1919 = vmatpush1.msra.mxu0 0.0
    %1920 = vmatprep.subr.mxu0 0.0
    %1921 = vmatpush1.msra.mxu0 0.0
    %1922 = vmatprep.subr.mxu0 0.0
    %1923 = vmatpush1.msra.mxu0 0.0
    %1924 = vmatprep.subr.mxu0 0.0
    %1925 = vmatpush1.msra.mxu0 0.0
    %1926 = vmatprep.subr.mxu0 0.0
    %1927 = vmatpush1.msra.mxu0 0.0
    %1928 = vmatprep.subr.mxu0 0.0
    %1929 = vmatpush1.msra.mxu0 0.0
    %1930 = vmatprep.mubr.f32.mxu0 0.0
    %1931 = vmatmul.mubr.f32.gmra.mrb[0].mxu0 %v1500
    %v1932 = vpop.f32.mrb[0].mxu0
    %v1933 = vadd.f32 %v526, %v1932
    %v1934 = vpop.f32.mrb[0].mxu0
    %1935 = vdwg.mxu0
    %v1936 = vmul.f32 %v1648, %v1933
    %v1937 = vadd.f32 %v1863, %v1936
    %v1938 = vtanh.pop %v1937
    %v1939 = vsub.f32 1.0, %v1795
    %v1940 = vmul.f32 %v1939, %v1938
    %v1941 = vmul.f32 %v1795, %v1496
    %v1942 = vadd.f32 %v1940, %v1941
    %v1944 = vsel %vm136, %v1942, 0
    %1946 = vmatprep.subr.mxu0 0.0
    %1947 = vmatpush1.msra.mxu0 %v102
    %1948 = vmatprep.subr.mxu0 0.0
    %1949 = vmatpush1.msra.mxu0 %v103
    %1950 = vmatprep.subr.mxu0 0.0
    %1951 = vmatpush1.msra.mxu0 %v104
    %1952 = vmatprep.subr.mxu0 0.0
    %1953 = vmatpush1.msra.mxu0 %v105
    %1954 = vmatprep.subr.mxu0 0.0
    %1955 = vmatpush1.msra.mxu0 0.0
    %1956 = vmatprep.subr.mxu0 0.0
    %1957 = vmatpush1.msra.mxu0 0.0
    %1958 = vmatprep.subr.mxu0 0.0
    %1959 = vmatpush1.msra.mxu0 0.0
    %1960 = vmatprep.subr.mxu0 0.0
    %1961 = vmatpush1.msra.mxu0 0.0
    %1962 = vmatprep.subr.mxu0 0.0
    %1963 = vmatpush1.msra.mxu0 0.0
    %1964 = vmatprep.subr.mxu0 0.0
    %1965 = vmatpush1.msra.mxu0 0.0
    %1966 = vmatprep.subr.mxu0 0.0
    %1967 = vmatpush1.msra.mxu0 0.0
    %1968 = vmatprep.subr.mxu0 0.0
    %1969 = vmatpush1.msra.mxu0 0.0
    %1970 = vmatprep.subr.mxu0 0.0
    %1971 = vmatpush1.msra.mxu0 0.0
    %1972 = vmatprep.subr.mxu0 0.0
    %1973 = vmatpush1.msra.mxu0 0.0
    %1974 = vmatprep.subr.mxu0 0.0
    %1975 = vmatpush1.msra.mxu0 0.0
    %1976 = vmatprep.subr.mxu0 0.0
    %1977 = vmatpush1.msra.mxu0 0.0
    %1978 = vmatprep.subr.mxu0 0.0
    %1979 = vmatpush1.msra.mxu0 0.0
    %1980 = vmatprep.subr.mxu0 0.0
    %1981 = vmatpush1.msra.mxu0 0.0
    %1982 = vmatprep.subr.mxu0 0.0
    %1983 = vmatpush1.msra.mxu0 0.0
    %1984 = vmatprep.subr.mxu0 0.0
    %1985 = vmatpush1.msra.mxu0 0.0
    %1986 = vmatprep.subr.mxu0 0.0
    %1987 = vmatpush1.msra.mxu0 0.0
    %1988 = vmatprep.subr.mxu0 0.0
    %1989 = vmatpush1.msra.mxu0 0.0
    %1990 = vmatprep.subr.mxu0 0.0
    %1991 = vmatpush1.msra.mxu0 0.0
    %1992 = vmatprep.subr.mxu0 0.0
    %1993 = vmatpush1.msra.mxu0 0.0
    %1994 = vmatprep.subr.mxu0 0.0
    %1995 = vmatpush1.msra.mxu0 0.0
    %1996 = vmatprep.subr.mxu0 0.0
    %1997 = vmatpush1.msra.mxu0 0.0
    %1998 = vmatprep.subr.mxu0 0.0
    %1999 = vmatpush1.msra.mxu0 0.0
    %2000 = vmatprep.subr.mxu0 0.0
    %2001 = vmatpush1.msra.mxu0 0.0
    %2002 = vmatprep.subr.mxu0 0.0
    %2003 = vmatpush1.msra.mxu0 0.0
    %2004 = vmatprep.subr.mxu0 0.0
    %2005 = vmatpush1.msra.mxu0 0.0
    %2006 = vmatprep.subr.mxu0 0.0
    %2007 = vmatpush1.msra.mxu0 0.0
    %2008 = vmatprep.subr.mxu0 0.0
    %2009 = vmatpush1.msra.mxu0 0.0
    %2010 = vmatprep.mubr.f32.mxu0 0.0
    %2011 = vmatmul.mubr.f32.gmra.mrb[0].mxu0 %v1944
    %v2012 = vpop.f32.mrb[0].mxu0
    %v2013 = vadd.f32 0.0, %v2012
    %v2014 = vpop.f32.mrb[0].mxu0
    %2015 = vdwg.mxu0
    %2016 = vmatprep.subr.mxu0 0.0
    %2017 = vmatpush1.msra.mxu0 %v54
    %2018 = vmatprep.subr.mxu0 0.0
    %2019 = vmatpush1.msra.mxu0 %v55
    %2020 = vmatprep.subr.mxu0 0.0
    %2021 = vmatpush1.msra.mxu0 %v56
    %2022 = vmatprep.subr.mxu0 0.0
    %2023 = vmatpush1.msra.mxu0 %v57
    %2024 = vmatprep.subr.mxu0 0.0
    %2025 = vmatpush1.msra.mxu0 %v58
    %2026 = vmatprep.subr.mxu0 0.0
    %2027 = vmatpush1.msra.mxu0 %v59
    %2028 = vmatprep.subr.mxu0 0.0
    %2029 = vmatpush1.msra.mxu0 %v60
    %2030 = vmatprep.subr.mxu0 0.0
    %2031 = vmatpush1.msra.mxu0 %v61
    %2032 = vmatprep.subr.mxu0 0.0
    %2033 = vmatpush1.msra.mxu0 %v62
    %2034 = vmatprep.subr.mxu0 0.0
    %2035 = vmatpush1.msra.mxu0 %v63
    %2036 = vmatprep.subr.mxu0 0.0
    %2037 = vmatpush1.msra.mxu0 %v64
    %2038 = vmatprep.subr.mxu0 0.0
    %2039 = vmatpush1.msra.mxu0 %v65
    %2040 = vmatprep.subr.mxu0 0.0
    %2041 = vmatpush1.msra.mxu0 %v66
    %2042 = vmatprep.subr.mxu0 0.0
    %2043 = vmatpush1.msra.mxu0 %v67
    %2044 = vmatprep.subr.mxu0 0.0
    %2045 = vmatpush1.msra.mxu0 %v68
    %2046 = vmatprep.subr.mxu0 0.0
    %2047 = vmatpush1.msra.mxu0 %v69
    %2048 = vmatprep.subr.mxu0 0.0
    %2049 = vmatpush1.msra.mxu0 0.0
    %2050 = vmatprep.subr.mxu0 0.0
    %2051 = vmatpush1.msra.mxu0 0.0
    %2052 = vmatprep.subr.mxu0 0.0
    %2053 = vmatpush1.msra.mxu0 0.0
    %2054 = vmatprep.subr.mxu0 0.0
    %2055 = vmatpush1.msra.mxu0 0.0
    %2056 = vmatprep.subr.mxu0 0.0
    %2057 = vmatpush1.msra.mxu0 0.0
    %2058 = vmatprep.subr.mxu0 0.0
    %2059 = vmatpush1.msra.mxu0 0.0
    %2060 = vmatprep.subr.mxu0 0.0
    %2061 = vmatpush1.msra.mxu0 0.0
    %2062 = vmatprep.subr.mxu0 0.0
    %2063 = vmatpush1.msra.mxu0 0.0
    %2064 = vmatprep.subr.mxu0 0.0
    %2065 = vmatpush1.msra.mxu0 0.0
    %2066 = vmatprep.subr.mxu0 0.0
    %2067 = vmatpush1.msra.mxu0 0.0
    %2068 = vmatprep.subr.mxu0 0.0
    %2069 = vmatpush1.msra.mxu0 0.0
    %2070 = vmatprep.subr.mxu0 0.0
    %2071 = vmatpush1.msra.mxu0 0.0
    %2072 = vmatprep.subr.mxu0 0.0
    %2073 = vmatpush1.msra.mxu0 0.0
    %2074 = vmatprep.subr.mxu0 0.0
    %2075 = vmatpush1.msra.mxu0 0.0
    %2076 = vmatprep.subr.mxu0 0.0
    %2077 = vmatpush1.msra.mxu0 0.0
    %2078 = vmatprep.subr.mxu0 0.0
    %2079 = vmatpush1.msra.mxu0 0.0
    %2080 = vmatprep.mubr.f32.mxu0 0.0
    %2081 = vmatmul.mubr.f32.gmra.mrb[0].mxu0 %v1498
    %v2082 = vpop.f32.mrb[0].mxu0
    %v2083 = vadd.f32 %v2013, %v2082
    %v2084 = vpop.f32.mrb[0].mxu0
    %2085 = vdwg.mxu0
    %v2086 = vadd.f32 %v2083, %v284
    %v2087 = vxor.u32 %v2086, 2147483648
    %v2088 = vmul.f32 %v2087, 1.442695
    %v2089 = vpow.pop %v2088
    %v2090 = vadd.f32 %v2089, 1.0
    %v2091 = vrcp.pop %v2090
    %v2092 = vmul.f32 1.0, %v2091
    %2093 = vmatprep.subr.mxu0 0.0
    %2094 = vmatpush1.msra.mxu0 %v106
    %2095 = vmatprep.subr.mxu0 0.0
    %2096 = vmatpush1.msra.mxu0 %v107
    %2097 = vmatprep.subr.mxu0 0.0
    %2098 = vmatpush1.msra.mxu0 %v108
    %2099 = vmatprep.subr.mxu0 0.0
    %2100 = vmatpush1.msra.mxu0 %v109
    %2101 = vmatprep.subr.mxu0 0.0
    %2102 = vmatpush1.msra.mxu0 0.0
    %2103 = vmatprep.subr.mxu0 0.0
    %2104 = vmatpush1.msra.mxu0 0.0
    %2105 = vmatprep.subr.mxu0 0.0
    %2106 = vmatpush1.msra.mxu0 0.0
    %2107 = vmatprep.subr.mxu0 0.0
    %2108 = vmatpush1.msra.mxu0 0.0
    %2109 = vmatprep.subr.mxu0 0.0
    %2110 = vmatpush1.msra.mxu0 0.0
    %2111 = vmatprep.subr.mxu0 0.0
    %2112 = vmatpush1.msra.mxu0 0.0
    %2113 = vmatprep.subr.mxu0 0.0
    %2114 = vmatpush1.msra.mxu0 0.0
    %2115 = vmatprep.subr.mxu0 0.0
    %2116 = vmatpush1.msra.mxu0 0.0
    %2117 = vmatprep.subr.mxu0 0.0
    %2118 = vmatpush1.msra.mxu0 0.0
    %2119 = vmatprep.subr.mxu0 0.0
    %2120 = vmatpush1.msra.mxu0 0.0
    %2121 = vmatprep.subr.mxu0 0.0
    %2122 = vmatpush1.msra.mxu0 0.0
    %2123 = vmatprep.subr.mxu0 0.0
    %2124 = vmatpush1.msra.mxu0 0.0
    %2125 = vmatprep.subr.mxu0 0.0
    %2126 = vmatpush1.msra.mxu0 0.0
    %2127 = vmatprep.subr.mxu0 0.0
    %2128 = vmatpush1.msra.mxu0 0.0
    %2129 = vmatprep.subr.mxu0 0.0
    %2130 = vmatpush1.msra.mxu0 0.0
    %2131 = vmatprep.subr.mxu0 0.0
    %2132 = vmatpush1.msra.mxu0 0.0
    %2133 = vmatprep.subr.mxu0 0.0
    %2134 = vmatpush1.msra.mxu0 0.0
    %2135 = vmatprep.subr.mxu0 0.0
    %2136 = vmatpush1.msra.mxu0 0.0
    %2137 = vmatprep.subr.mxu0 0.0
    %2138 = vmatpush1.msra.mxu0 0.0
    %2139 = vmatprep.subr.mxu0 0.0
    %2140 = vmatpush1.msra.mxu0 0.0
    %2141 = vmatprep.subr.mxu0 0.0
    %2142 = vmatpush1.msra.mxu0 0.0
    %2143 = vmatprep.subr.mxu0 0.0
    %2144 = vmatpush1.msra.mxu0 0.0
    %2145 = vmatprep.subr.mxu0 0.0
    %2146 = vmatpush1.msra.mxu0 0.0
    %2147 = vmatprep.subr.mxu0 0.0
    %2148 = vmatpush1.msra.mxu0 0.0
    %2149 = vmatprep.subr.mxu0 0.0
    %2150 = vmatpush1.msra.mxu0 0.0
    %2151 = vmatprep.subr.mxu0 0.0
    %2152 = vmatpush1.msra.mxu0 0.0
    %2153 = vmatprep.subr.mxu0 0.0
    %2154 = vmatpush1.msra.mxu0 0.0
    %2155 = vmatprep.subr.mxu0 0.0
    %2156 = vmatpush1.msra.mxu0 0.0
    %2157 = vmatprep.mubr.f32.mxu0 0.0
    %2158 = vmatmul.mubr.f32.gmra.mrb[0].mxu0 %v1944
    %v2159 = vpop.f32.mrb[0].mxu0
    %v2160 = vadd.f32 0.0, %v2159
    %v2161 = vpop.f32.mrb[0].mxu0
    %2162 = vdwg.mxu0
    %2163 = vmatprep.subr.mxu0 0.0
    %2164 = vmatpush1.msra.mxu0 %v70
    %2165 = vmatprep.subr.mxu0 0.0
    %2166 = vmatpush1.msra.mxu0 %v71
    %2167 = vmatprep.subr.mxu0 0.0
    %2168 = vmatpush1.msra.mxu0 %v72
    %2169 = vmatprep.subr.mxu0 0.0
    %2170 = vmatpush1.msra.mxu0 %v73
    %2171 = vmatprep.subr.mxu0 0.0
    %2172 = vmatpush1.msra.mxu0 %v74
    %2173 = vmatprep.subr.mxu0 0.0
    %2174 = vmatpush1.msra.mxu0 %v75
    %2175 = vmatprep.subr.mxu0 0.0
    %2176 = vmatpush1.msra.mxu0 %v76
    %2177 = vmatprep.subr.mxu0 0.0
    %2178 = vmatpush1.msra.mxu0 %v77
    %2179 = vmatprep.subr.mxu0 0.0
    %2180 = vmatpush1.msra.mxu0 %v78
    %2181 = vmatprep.subr.mxu0 0.0
    %2182 = vmatpush1.msra.mxu0 %v79
    %2183 = vmatprep.subr.mxu0 0.0
    %2184 = vmatpush1.msra.mxu0 %v80
    %2185 = vmatprep.subr.mxu0 0.0
    %2186 = vmatpush1.msra.mxu0 %v81
    %2187 = vmatprep.subr.mxu0 0.0
    %2188 = vmatpush1.msra.mxu0 %v82
    %2189 = vmatprep.subr.mxu0 0.0
    %2190 = vmatpush1.msra.mxu0 %v83
    %2191 = vmatprep.subr.mxu0 0.0
    %2192 = vmatpush1.msra.mxu0 %v84
    %2193 = vmatprep.subr.mxu0 0.0
    %2194 = vmatpush1.msra.mxu0 %v85
    %2195 = vmatprep.subr.mxu0 0.0
    %2196 = vmatpush1.msra.mxu0 0.0
    %2197 = vmatprep.subr.mxu0 0.0
    %2198 = vmatpush1.msra.mxu0 0.0
    %2199 = vmatprep.subr.mxu0 0.0
    %2200 = vmatpush1.msra.mxu0 0.0
    %2201 = vmatprep.subr.mxu0 0.0
    %2202 = vmatpush1.msra.mxu0 0.0
    %2203 = vmatprep.subr.mxu0 0.0
    %2204 = vmatpush1.msra.mxu0 0.0
    %2205 = vmatprep.subr.mxu0 0.0
    %2206 = vmatpush1.msra.mxu0 0.0
    %2207 = vmatprep.subr.mxu0 0.0
    %2208 = vmatpush1.msra.mxu0 0.0
    %2209 = vmatprep.subr.mxu0 0.0
    %2210 = vmatpush1.msra.mxu0 0.0
    %2211 = vmatprep.subr.mxu0 0.0
    %2212 = vmatpush1.msra.mxu0 0.0
    %2213 = vmatprep.subr.mxu0 0.0
    %2214 = vmatpush1.msra.mxu0 0.0
    %2215 = vmatprep.subr.mxu0 0.0
    %2216 = vmatpush1.msra.mxu0 0.0
    %2217 = vmatprep.subr.mxu0 0.0
    %2218 = vmatpush1.msra.mxu0 0.0
    %2219 = vmatprep.subr.mxu0 0.0
    %2220 = vmatpush1.msra.mxu0 0.0
    %2221 = vmatprep.subr.mxu0 0.0
    %2222 = vmatpush1.msra.mxu0 0.0
    %2223 = vmatprep.subr.mxu0 0.0
    %2224 = vmatpush1.msra.mxu0 0.0
    %2225 = vmatprep.subr.mxu0 0.0
    %2226 = vmatpush1.msra.mxu0 0.0
    %2227 = vmatprep.mubr.f32.mxu0 0.0
    %2228 = vmatmul.mubr.f32.gmra.mrb[0].mxu0 %v1498
    %v2229 = vpop.f32.mrb[0].mxu0
    %v2230 = vadd.f32 %v2160, %v2229
    %v2231 = vpop.f32.mrb[0].mxu0
    %2232 = vdwg.mxu0
    %v2233 = vadd.f32 %v2230, %v437
    %v2234 = vxor.u32 %v2233, 2147483648
    %v2235 = vmul.f32 %v2234, 1.442695
    %v2236 = vpow.pop %v2235
    %v2237 = vadd.f32 %v2236, 1.0
    %v2238 = vrcp.pop %v2237
    %v2239 = vmul.f32 1.0, %v2238
    %2240 = vmatprep.subr.mxu0 0.0
    %2241 = vmatpush1.msra.mxu0 %v110
    %2242 = vmatprep.subr.mxu0 0.0
    %2243 = vmatpush1.msra.mxu0 %v111
    %2244 = vmatprep.subr.mxu0 0.0
    %2245 = vmatpush1.msra.mxu0 %v112
    %2246 = vmatprep.subr.mxu0 0.0
    %2247 = vmatpush1.msra.mxu0 %v113
    %2248 = vmatprep.subr.mxu0 0.0
    %2249 = vmatpush1.msra.mxu0 0.0
    %2250 = vmatprep.subr.mxu0 0.0
    %2251 = vmatpush1.msra.mxu0 0.0
    %2252 = vmatprep.subr.mxu0 0.0
    %2253 = vmatpush1.msra.mxu0 0.0
    %2254 = vmatprep.subr.mxu0 0.0
    %2255 = vmatpush1.msra.mxu0 0.0
    %2256 = vmatprep.subr.mxu0 0.0
    %2257 = vmatpush1.msra.mxu0 0.0
    %2258 = vmatprep.subr.mxu0 0.0
    %2259 = vmatpush1.msra.mxu0 0.0
    %2260 = vmatprep.subr.mxu0 0.0
    %2261 = vmatpush1.msra.mxu0 0.0
    %2262 = vmatprep.subr.mxu0 0.0
    %2263 = vmatpush1.msra.mxu0 0.0
    %2264 = vmatprep.subr.mxu0 0.0
    %2265 = vmatpush1.msra.mxu0 0.0
    %2266 = vmatprep.subr.mxu0 0.0
    %2267 = vmatpush1.msra.mxu0 0.0
    %2268 = vmatprep.subr.mxu0 0.0
    %2269 = vmatpush1.msra.mxu0 0.0
    %2270 = vmatprep.subr.mxu0 0.0
    %2271 = vmatpush1.msra.mxu0 0.0
    %2272 = vmatprep.subr.mxu0 0.0
    %2273 = vmatpush1.msra.mxu0 0.0
    %2274 = vmatprep.subr.mxu0 0.0
    %2275 = vmatpush1.msra.mxu0 0.0
    %2276 = vmatprep.subr.mxu0 0.0
    %2277 = vmatpush1.msra.mxu0 0.0
    %2278 = vmatprep.subr.mxu0 0.0
    %2279 = vmatpush1.msra.mxu0 0.0
    %2280 = vmatprep.subr.mxu0 0.0
    %2281 = vmatpush1.msra.mxu0 0.0
    %2282 = vmatprep.subr.mxu0 0.0
    %2283 = vmatpush1.msra.mxu0 0.0
    %2284 = vmatprep.subr.mxu0 0.0
    %2285 = vmatpush1.msra.mxu0 0.0
    %2286 = vmatprep.subr.mxu0 0.0
    %2287 = vmatpush1.msra.mxu0 0.0
    %2288 = vmatprep.subr.mxu0 0.0
    %2289 = vmatpush1.msra.mxu0 0.0
    %2290 = vmatprep.subr.mxu0 0.0
    %2291 = vmatpush1.msra.mxu0 0.0
    %2292 = vmatprep.subr.mxu0 0.0
    %2293 = vmatpush1.msra.mxu0 0.0
    %2294 = vmatprep.subr.mxu0 0.0
    %2295 = vmatpush1.msra.mxu0 0.0
    %2296 = vmatprep.subr.mxu0 0.0
    %2297 = vmatpush1.msra.mxu0 0.0
    %2298 = vmatprep.subr.mxu0 0.0
    %2299 = vmatpush1.msra.mxu0 0.0
    %2300 = vmatprep.subr.mxu0 0.0
    %2301 = vmatpush1.msra.mxu0 0.0
    %2302 = vmatprep.subr.mxu0 0.0
    %2303 = vmatpush1.msra.mxu0 0.0
    %2304 = vmatprep.mubr.f32.mxu0 0.0
    %2305 = vmatmul.mubr.f32.gmra.mrb[0].mxu0 %v1944
    %v2306 = vpop.f32.mrb[0].mxu0
    %v2307 = vadd.f32 %v526, %v2306
    %v2308 = vpop.f32.mrb[0].mxu0
    %2309 = vdwg.mxu0
    %v2310 = vmul.f32 %v2092, %v2307
    %v2311 = vadd.f32 %v1863, %v2310
    %v2312 = vtanh.pop %v2311
    %v2313 = vsub.f32 1.0, %v2239
    %v2314 = vmul.f32 %v2313, %v2312
    %v2315 = vmul.f32 %v2239, %v1942
    %v2316 = vadd.f32 %v2314, %v2315
    %v2319 = vunpack.c.l.s4 1966171168
    %v2320 = vunpack.c.0.s8 %v2319
    %v2321 = vlaneseq
    %v2322 = vshrl.u32 %v2321, 7
    %v2323 = vsub.s32 %v2320, %v2322
    %v2324 = vrot.slane %v2316, %v2323
    %v2325 = vcombine.high %v2324, %v2324
    %v2327 = vunpack.c.l.s4 1966171168
    %v2328 = vunpack.c.0.s8 %v2327
    %v2329 = vlaneseq
    %v2330 = vshrl.u32 %v2329, 7
    %v2331 = vsub.s32 %v2328, %v2330
    %v2332 = vrot.slane %v2324, %v2331
    %v2334 = vunpack.c.l.s4 1966171168
    %v2335 = vunpack.c.0.s8 %v2334
    %v2336 = vlaneseq
    %v2337 = vshrl.u32 %v2336, 7
    %v2338 = vsub.s32 %v2335, %v2337
    %v2339 = vrot.slane %v2325, %v2338
    %v2340 = vlaneseq
    %v2341 = vshrl.u32 %v2340, 7
    %v2342 = vsub.s32 0, %v2341
    %v2343 = vrot.slane %v2332, %v2342
    %v2344 = vlaneseq
    %v2345 = vshrl.u32 %v2344, 7
    %v2346 = vsub.s32 0, %v2345
    %v2347 = vrot.slane %v2339, %v2346
    %v2350 = vmul.f32 %v118, %v2343
    %v2351 = vmul.f32 %v119, %v2343
    %v2352 = vmul.f32 %v120, %v2347
    %v2353 = vmul.f32 %v121, %v2347
    %v2354 = vsel %vm136, %v2350, 0.0
    %2355 = vadd.xlane.f32.xlu0 %v2354
    %v2356 = vpop.xlane.xlu0 %2355
    %vm2357 = vcmask 259072
    %v2358 = vsel %vm2357, %v2351, 0.0
    %2359 = vadd.xlane.f32.xlu0 %v2358
    %v2360 = vpop.xlane.xlu0 %2359
    %v2361 = vsel %vm136, %v2352, 0.0
    %2362 = vadd.xlane.f32.xlu0 %v2361
    %v2363 = vpop.xlane.xlu0 %2362
    %v2364 = vsel %vm2357, %v2353, 0.0
    %2365 = vadd.xlane.f32.xlu0 %v2364
    %v2366 = vpop.xlane.xlu0 %2365
    %v2371 = vlaneseq
    %v2372 = vshrl.u32 %v2371, 7
    %v2373 = vsub.s32 %v132, %v2372
    %v2374 = vrot.slane %v2356, %v2373
    %v2375 = vadd.s32 %v132, 4294967288
    %v2376 = vlaneseq
    %v2377 = vshrl.u32 %v2376, 7
    %v2378 = vsub.s32 %v2375, %v2377
    %v2379 = vrot.slane %v2360, %v2378
    %vm2380 = vcmask 130112
    %v2381 = vsel %vm2380, %v2379, %v2374
    %v2382 = vlaneseq
    %v2383 = vshrl.u32 %v2382, 7
    %v2384 = vsub.s32 %v132, %v2383
    %v2385 = vrot.slane %v2363, %v2384
    %v2386 = vlaneseq
    %v2387 = vshrl.u32 %v2386, 7
    %v2388 = vsub.s32 %v2375, %v2387
    %v2389 = vrot.slane %v2366, %v2388
    %v2390 = vsel %vm2380, %v2389, %v2385
    %vm2391 = vcmask 1041409
    %v2392 = vsel %vm2391, %v2390, %v2381
    %v2394 = vsel %vm133, %v2392, -1e+30
    %vm2395 = vcmask 107520
    %v2396 = vsel %vm2395, %v2394, -inf
    %2397 = vmax.xlane.f32.xlu0 %v2396
    %v2398 = vpop.xlane.xlu0 %2397
    %v2399 = vsub.f32 %v2394, %v2398
    %v2400 = vmul.f32 %v2399, 1.442695
    %v2401 = vpow.pop %v2400
    %v2402 = vsel %vm2395, %v2401, 0.0
    %2403 = vadd.xlane.f32.xlu0 %v2402
    %v2404 = vpop.xlane.xlu0 %2403
    %v2405 = vrcp.pop %v2404
    %v2406 = vmul.f32 %v2401, %v2405
    %vm2407 = vmxor %vm133, 1
    %v2408 = vsel %vm2407, %v2392, -1e+30
    %v2409 = vsel %vm2395, %v2408, -inf
    %2410 = vmax.xlane.f32.xlu0 %v2409
    %v2411 = vpop.xlane.xlu0 %2410
    %v2412 = vsub.f32 %v2408, %v2411
    %v2413 = vmul.f32 %v2412, 1.442695
    %v2414 = vpow.pop %v2413
    %v2415 = vsel %vm2395, %v2414, 0.0
    %2416 = vadd.xlane.f32.xlu0 %v2415
    %v2417 = vpop.xlane.xlu0 %2416
    %v2418 = vrcp.pop %v2417
    %v2419 = vmul.f32 %v2414, %v2418
    %v2420 = vadd.f32 %v2406, %v2419
    %v2421 = vlaneseq
    %v2422 = vshrl.u32 %v2421, 7
    %v2423 = vsub.s32 0, %v2422
    %v2424 = vrot.slane %v2420, %v2423
    %2426 = vbcast.lane.b32.xlu0 %v2424, 256
    %v2427 = vpop.permute.xlu0 %2426
    %s2429 = sor.u32 256, 8
    %2430 = vbcast.lane.b32.xlu0 %v2424, %s2429
    %v2431 = vpop.permute.xlu0 %2430
    %v2432 = vlaneseq
    %v2433 = vshrl.u32 %v2432, 7
    %v2434 = vsub.s32 1, %v2433
    %v2435 = vrot.slane %v2420, %v2434
    %2437 = vbcast.lane.b32.xlu0 %v2435, 256
    %v2438 = vpop.permute.xlu0 %2437
    %s2440 = sor.u32 256, 8
    %2441 = vbcast.lane.b32.xlu0 %v2435, %s2440
    %v2442 = vpop.permute.xlu0 %2441
    %v2443 = vmul.f32 %v122, %v2427
    %v2444 = vmul.f32 %v123, %v2431
    %v2445 = vmul.f32 %v124, %v2438
    %v2446 = vmul.f32 %v125, %v2442
    %vm2447 = vcmask 1045504
    %v2448 = vsel %vm2447, %v2444, 0.0
    %v2449 = vadd.f32 %v2443, %v2448
    %v2450 = vrot.slane %v2449, 4
    %v2451 = vadd.f32 %v2449, %v2450
    %v2452 = vrot.slane %v2451, 2
    %v2453 = vadd.f32 %v2451, %v2452
    %v2454 = vrot.slane %v2453, 1
    %v2455 = vadd.f32 %v2453, %v2454
    %v2456 = vsel %vm2447, %v2446, 0.0
    %v2457 = vadd.f32 %v2445, %v2456
    %v2458 = vrot.slane %v2457, 4
    %v2459 = vadd.f32 %v2457, %v2458
    %v2460 = vrot.slane %v2459, 2
    %v2461 = vadd.f32 %v2459, %v2460
    %v2462 = vrot.slane %v2461, 1
    %v2463 = vadd.f32 %v2461, %v2462
    %v2466 = vsel %vm2391, %v2463, %v2455
    %v2468 = vsel %vm136, %v2316, 0
    %2470 = vmatprep.subr.mxu0 0.0
    %2471 = vmatpush1.msra.mxu0 %v126
    %2472 = vmatprep.subr.mxu0 0.0
    %2473 = vmatpush1.msra.mxu0 %v127
    %2474 = vmatprep.subr.mxu0 0.0
    %2475 = vmatpush1.msra.mxu0 %v128
    %2476 = vmatprep.subr.mxu0 0.0
    %2477 = vmatpush1.msra.mxu0 %v129
    %2478 = vmatprep.subr.mxu0 0.0
    %2479 = vmatpush1.msra.mxu0 0.0
    %2480 = vmatprep.subr.mxu0 0.0
    %2481 = vmatpush1.msra.mxu0 0.0
    %2482 = vmatprep.subr.mxu0 0.0
    %2483 = vmatpush1.msra.mxu0 0.0
    %2484 = vmatprep.subr.mxu0 0.0
    %2485 = vmatpush1.msra.mxu0 0.0
    %2486 = vmatprep.subr.mxu0 0.0
    %2487 = vmatpush1.msra.mxu0 0.0
    %2488 = vmatprep.subr.mxu0 0.0
    %2489 = vmatpush1.msra.mxu0 0.0
    %2490 = vmatprep.subr.mxu0 0.0
    %2491 = vmatpush1.msra.mxu0 0.0
    %2492 = vmatprep.subr.mxu0 0.0
    %2493 = vmatpush1.msra.mxu0 0.0
    %2494 = vmatprep.subr.mxu0 0.0
    %2495 = vmatpush1.msra.mxu0 0.0
    %2496 = vmatprep.subr.mxu0 0.0
    %2497 = vmatpush1.msra.mxu0 0.0
    %2498 = vmatprep.subr.mxu0 0.0
    %2499 = vmatpush1.msra.mxu0 0.0
    %2500 = vmatprep.subr.mxu0 0.0
    %2501 = vmatpush1.msra.mxu0 0.0
    %2502 = vmatprep.subr.mxu0 0.0
    %2503 = vmatpush1.msra.mxu0 0.0
    %2504 = vmatprep.subr.mxu0 0.0
    %2505 = vmatpush1.msra.mxu0 0.0
    %2506 = vmatprep.subr.mxu0 0.0
    %2507 = vmatpush1.msra.mxu0 0.0
    %2508 = vmatprep.subr.mxu0 0.0
    %2509 = vmatpush1.msra.mxu0 0.0
    %2510 = vmatprep.subr.mxu0 0.0
    %2511 = vmatpush1.msra.mxu0 0.0
    %2512 = vmatprep.subr.mxu0 0.0
    %2513 = vmatpush1.msra.mxu0 0.0
    %2514 = vmatprep.subr.mxu0 0.0
    %2515 = vmatpush1.msra.mxu0 0.0
    %2516 = vmatprep.subr.mxu0 0.0
    %2517 = vmatpush1.msra.mxu0 0.0
    %2518 = vmatprep.subr.mxu0 0.0
    %2519 = vmatpush1.msra.mxu0 0.0
    %2520 = vmatprep.subr.mxu0 0.0
    %2521 = vmatpush1.msra.mxu0 0.0
    %2522 = vmatprep.subr.mxu0 0.0
    %2523 = vmatpush1.msra.mxu0 0.0
    %2524 = vmatprep.subr.mxu0 0.0
    %2525 = vmatpush1.msra.mxu0 0.0
    %2526 = vmatprep.subr.mxu0 0.0
    %2527 = vmatpush1.msra.mxu0 0.0
    %2528 = vmatprep.subr.mxu0 0.0
    %2529 = vmatpush1.msra.mxu0 0.0
    %2530 = vmatprep.subr.mxu0 0.0
    %2531 = vmatpush1.msra.mxu0 0.0
    %2532 = vmatprep.subr.mxu0 0.0
    %2533 = vmatpush1.msra.mxu0 0.0
    %2534 = vmatprep.mubr.f32.mxu0 0.0
    %2535 = vmatmul.mubr.f32.gmra.mrb[0].mxu0 %v2468
    %v2536 = vpop.f32.mrb[0].mxu0
    %v2537 = vadd.f32 %v2466, %v2536
    %v2538 = vpop.f32.mrb[0].mxu0
    %2539 = vdwg.mxu0
    %v2541 = vlaneseq
    %v2542 = vshrl.u32 %v2541, 7
    %v2543 = vsub.s32 0, %v2542
    %v2544 = vrot.slane %v130, %v2543
    %v2546 = vadd.f32 %v2537, %v2544
    %2547 = vst [vmem:[#allocation2] sm:$0x3] %v2546
    %2548 = vmatprep.subr.mxu0 0.0
    %2549 = vmatpush1.msra.mxu0 %v102
    %2550 = vmatprep.subr.mxu0 0.0
    %2551 = vmatpush1.msra.mxu0 %v103
    %2552 = vmatprep.subr.mxu0 0.0
    %2553 = vmatpush1.msra.mxu0 %v104
    %2554 = vmatprep.subr.mxu0 0.0
    %2555 = vmatpush1.msra.mxu0 %v105
    %2556 = vmatprep.subr.mxu0 0.0
    %2557 = vmatpush1.msra.mxu0 0.0
    %2558 = vmatprep.subr.mxu0 0.0
    %2559 = vmatpush1.msra.mxu0 0.0
    %2560 = vmatprep.subr.mxu0 0.0
    %2561 = vmatpush1.msra.mxu0 0.0
    %2562 = vmatprep.subr.mxu0 0.0
    %2563 = vmatpush1.msra.mxu0 0.0
    %2564 = vmatprep.subr.mxu0 0.0
    %2565 = vmatpush1.msra.mxu0 0.0
    %2566 = vmatprep.subr.mxu0 0.0
    %2567 = vmatpush1.msra.mxu0 0.0
    %2568 = vmatprep.subr.mxu0 0.0
    %2569 = vmatpush1.msra.mxu0 0.0
    %2570 = vmatprep.subr.mxu0 0.0
    %2571 = vmatpush1.msra.mxu0 0.0
    %2572 = vmatprep.subr.mxu0 0.0
    %2573 = vmatpush1.msra.mxu0 0.0
    %2574 = vmatprep.subr.mxu0 0.0
    %2575 = vmatpush1.msra.mxu0 0.0
    %2576 = vmatprep.subr.mxu0 0.0
    %2577 = vmatpush1.msra.mxu0 0.0
    %2578 = vmatprep.subr.mxu0 0.0
    %2579 = vmatpush1.msra.mxu0 0.0
    %2580 = vmatprep.subr.mxu0 0.0
    %2581 = vmatpush1.msra.mxu0 0.0
    %2582 = vmatprep.subr.mxu0 0.0
    %2583 = vmatpush1.msra.mxu0 0.0
    %2584 = vmatprep.subr.mxu0 0.0
    %2585 = vmatpush1.msra.mxu0 0.0
    %2586 = vmatprep.subr.mxu0 0.0
    %2587 = vmatpush1.msra.mxu0 0.0
    %2588 = vmatprep.subr.mxu0 0.0
    %2589 = vmatpush1.msra.mxu0 0.0
    %2590 = vmatprep.subr.mxu0 0.0
    %2591 = vmatpush1.msra.mxu0 0.0
    %2592 = vmatprep.subr.mxu0 0.0
    %2593 = vmatpush1.msra.mxu0 0.0
    %2594 = vmatprep.subr.mxu0 0.0
    %2595 = vmatpush1.msra.mxu0 0.0
    %2596 = vmatprep.subr.mxu0 0.0
    %2597 = vmatpush1.msra.mxu0 0.0
    %2598 = vmatprep.subr.mxu0 0.0
    %2599 = vmatpush1.msra.mxu0 0.0
    %2600 = vmatprep.subr.mxu0 0.0
    %2601 = vmatpush1.msra.mxu0 0.0
    %2602 = vmatprep.subr.mxu0 0.0
    %2603 = vmatpush1.msra.mxu0 0.0
    %2604 = vmatprep.subr.mxu0 0.0
    %2605 = vmatpush1.msra.mxu0 0.0
    %2606 = vmatprep.subr.mxu0 0.0
    %2607 = vmatpush1.msra.mxu0 0.0
    %2608 = vmatprep.subr.mxu0 0.0
    %2609 = vmatpush1.msra.mxu0 0.0
    %2610 = vmatprep.subr.mxu0 0.0
    %2611 = vmatpush1.msra.mxu0 0.0
    %2612 = vmatprep.mubr.f32.mxu0 0.0
    %2613 = vmatmul.mubr.f32.gmra.mrb[0].mxu0 %v2468
    %v2614 = vpop.f32.mrb[0].mxu0
    %v2615 = vadd.f32 0.0, %v2614
    %v2616 = vpop.f32.mrb[0].mxu0
    %2617 = vdwg.mxu0
    %2618 = vmatprep.subr.mxu0 0.0
    %2619 = vmatpush1.msra.mxu0 %v54
    %2620 = vmatprep.subr.mxu0 0.0
    %2621 = vmatpush1.msra.mxu0 %v55
    %2622 = vmatprep.subr.mxu0 0.0
    %2623 = vmatpush1.msra.mxu0 %v56
    %2624 = vmatprep.subr.mxu0 0.0
    %2625 = vmatpush1.msra.mxu0 %v57
    %2626 = vmatprep.subr.mxu0 0.0
    %2627 = vmatpush1.msra.mxu0 %v58
    %2628 = vmatprep.subr.mxu0 0.0
    %2629 = vmatpush1.msra.mxu0 %v59
    %2630 = vmatprep.subr.mxu0 0.0
    %2631 = vmatpush1.msra.mxu0 %v60
    %2632 = vmatprep.subr.mxu0 0.0
    %2633 = vmatpush1.msra.mxu0 %v61
    %2634 = vmatprep.subr.mxu0 0.0
    %2635 = vmatpush1.msra.mxu0 %v62
    %2636 = vmatprep.subr.mxu0 0.0
    %2637 = vmatpush1.msra.mxu0 %v63
    %2638 = vmatprep.subr.mxu0 0.0
    %2639 = vmatpush1.msra.mxu0 %v64
    %2640 = vmatprep.subr.mxu0 0.0
    %2641 = vmatpush1.msra.mxu0 %v65
    %2642 = vmatprep.subr.mxu0 0.0
    %2643 = vmatpush1.msra.mxu0 %v66
    %2644 = vmatprep.subr.mxu0 0.0
    %2645 = vmatpush1.msra.mxu0 %v67
    %2646 = vmatprep.subr.mxu0 0.0
    %2647 = vmatpush1.msra.mxu0 %v68
    %2648 = vmatprep.subr.mxu0 0.0
    %2649 = vmatpush1.msra.mxu0 %v69
    %2650 = vmatprep.subr.mxu0 0.0
    %2651 = vmatpush1.msra.mxu0 0.0
    %2652 = vmatprep.subr.mxu0 0.0
    %2653 = vmatpush1.msra.mxu0 0.0
    %2654 = vmatprep.subr.mxu0 0.0
    %2655 = vmatpush1.msra.mxu0 0.0
    %2656 = vmatprep.subr.mxu0 0.0
    %2657 = vmatpush1.msra.mxu0 0.0
    %2658 = vmatprep.subr.mxu0 0.0
    %2659 = vmatpush1.msra.mxu0 0.0
    %2660 = vmatprep.subr.mxu0 0.0
    %2661 = vmatpush1.msra.mxu0 0.0
    %2662 = vmatprep.subr.mxu0 0.0
    %2663 = vmatpush1.msra.mxu0 0.0
    %2664 = vmatprep.subr.mxu0 0.0
    %2665 = vmatpush1.msra.mxu0 0.0
    %2666 = vmatprep.subr.mxu0 0.0
    %2667 = vmatpush1.msra.mxu0 0.0
    %2668 = vmatprep.subr.mxu0 0.0
    %2669 = vmatpush1.msra.mxu0 0.0
    %2670 = vmatprep.subr.mxu0 0.0
    %2671 = vmatpush1.msra.mxu0 0.0
    %2672 = vmatprep.subr.mxu0 0.0
    %2673 = vmatpush1.msra.mxu0 0.0
    %2674 = vmatprep.subr.mxu0 0.0
    %2675 = vmatpush1.msra.mxu0 0.0
    %2676 = vmatprep.subr.mxu0 0.0
    %2677 = vmatpush1.msra.mxu0 0.0
    %2678 = vmatprep.subr.mxu0 0.0
    %2679 = vmatpush1.msra.mxu0 0.0
    %2680 = vmatprep.subr.mxu0 0.0
    %2681 = vmatpush1.msra.mxu0 0.0
    %2682 = vmatprep.mubr.f32.mxu0 0.0
    %2683 = vmatmul.mubr.f32.gmra.mrb[0].mxu0 %v2546
    %v2684 = vpop.f32.mrb[0].mxu0
    %v2685 = vadd.f32 %v2615, %v2684
    %v2686 = vpop.f32.mrb[0].mxu0
    %2687 = vdwg.mxu0
    %v2688 = vadd.f32 %v2685, %v284
    %v2689 = vxor.u32 %v2688, 2147483648
    %v2690 = vmul.f32 %v2689, 1.442695
    %v2691 = vpow.pop %v2690
    %v2692 = vadd.f32 %v2691, 1.0
    %v2693 = vrcp.pop %v2692
    %v2694 = vmul.f32 1.0, %v2693
    %2695 = vmatprep.subr.mxu0 0.0
    %2696 = vmatpush1.msra.mxu0 %v106
    %2697 = vmatprep.subr.mxu0 0.0
    %2698 = vmatpush1.msra.mxu0 %v107
    %2699 = vmatprep.subr.mxu0 0.0
    %2700 = vmatpush1.msra.mxu0 %v108
    %2701 = vmatprep.subr.mxu0 0.0
    %2702 = vmatpush1.msra.mxu0 %v109
    %2703 = vmatprep.subr.mxu0 0.0
    %2704 = vmatpush1.msra.mxu0 0.0
    %2705 = vmatprep.subr.mxu0 0.0
    %2706 = vmatpush1.msra.mxu0 0.0
    %2707 = vmatprep.subr.mxu0 0.0
    %2708 = vmatpush1.msra.mxu0 0.0
    %2709 = vmatprep.subr.mxu0 0.0
    %2710 = vmatpush1.msra.mxu0 0.0
    %2711 = vmatprep.subr.mxu0 0.0
    %2712 = vmatpush1.msra.mxu0 0.0
    %2713 = vmatprep.subr.mxu0 0.0
    %2714 = vmatpush1.msra.mxu0 0.0
    %2715 = vmatprep.subr.mxu0 0.0
    %2716 = vmatpush1.msra.mxu0 0.0
    %2717 = vmatprep.subr.mxu0 0.0
    %2718 = vmatpush1.msra.mxu0 0.0
    %2719 = vmatprep.subr.mxu0 0.0
    %2720 = vmatpush1.msra.mxu0 0.0
    %2721 = vmatprep.subr.mxu0 0.0
    %2722 = vmatpush1.msra.mxu0 0.0
    %2723 = vmatprep.subr.mxu0 0.0
    %2724 = vmatpush1.msra.mxu0 0.0
    %2725 = vmatprep.subr.mxu0 0.0
    %2726 = vmatpush1.msra.mxu0 0.0
    %2727 = vmatprep.subr.mxu0 0.0
    %2728 = vmatpush1.msra.mxu0 0.0
    %2729 = vmatprep.subr.mxu0 0.0
    %2730 = vmatpush1.msra.mxu0 0.0
    %2731 = vmatprep.subr.mxu0 0.0
    %2732 = vmatpush1.msra.mxu0 0.0
    %2733 = vmatprep.subr.mxu0 0.0
    %2734 = vmatpush1.msra.mxu0 0.0
    %2735 = vmatprep.subr.mxu0 0.0
    %2736 = vmatpush1.msra.mxu0 0.0
    %2737 = vmatprep.subr.mxu0 0.0
    %2738 = vmatpush1.msra.mxu0 0.0
    %2739 = vmatprep.subr.mxu0 0.0
    %2740 = vmatpush1.msra.mxu0 0.0
    %2741 = vmatprep.subr.mxu0 0.0
    %2742 = vmatpush1.msra.mxu0 0.0
    %2743 = vmatprep.subr.mxu0 0.0
    %2744 = vmatpush1.msra.mxu0 0.0
    %2745 = vmatprep.subr.mxu0 0.0
    %2746 = vmatpush1.msra.mxu0 0.0
    %2747 = vmatprep.subr.mxu0 0.0
    %2748 = vmatpush1.msra.mxu0 0.0
    %2749 = vmatprep.subr.mxu0 0.0
    %2750 = vmatpush1.msra.mxu0 0.0
    %2751 = vmatprep.subr.mxu0 0.0
    %2752 = vmatpush1.msra.mxu0 0.0
    %2753 = vmatprep.subr.mxu0 0.0
    %2754 = vmatpush1.msra.mxu0 0.0
    %2755 = vmatprep.subr.mxu0 0.0
    %2756 = vmatpush1.msra.mxu0 0.0
    %2757 = vmatprep.subr.mxu0 0.0
    %2758 = vmatpush1.msra.mxu0 0.0
    %2759 = vmatprep.mubr.f32.mxu0 0.0
    %2760 = vmatmul.mubr.f32.gmra.mrb[0].mxu0 %v2468
    %v2761 = vpop.f32.mrb[0].mxu0
    %v2762 = vadd.f32 0.0, %v2761
    %v2763 = vpop.f32.mrb[0].mxu0
    %2764 = vdwg.mxu0
    %2765 = vmatprep.subr.mxu0 0.0
    %2766 = vmatpush1.msra.mxu0 %v70
    %2767 = vmatprep.subr.mxu0 0.0
    %2768 = vmatpush1.msra.mxu0 %v71
    %2769 = vmatprep.subr.mxu0 0.0
    %2770 = vmatpush1.msra.mxu0 %v72
    %2771 = vmatprep.subr.mxu0 0.0
    %2772 = vmatpush1.msra.mxu0 %v73
    %2773 = vmatprep.subr.mxu0 0.0
    %2774 = vmatpush1.msra.mxu0 %v74
    %2775 = vmatprep.subr.mxu0 0.0
    %2776 = vmatpush1.msra.mxu0 %v75
    %2777 = vmatprep.subr.mxu0 0.0
    %2778 = vmatpush1.msra.mxu0 %v76
    %2779 = vmatprep.subr.mxu0 0.0
    %2780 = vmatpush1.msra.mxu0 %v77
    %2781 = vmatprep.subr.mxu0 0.0
    %2782 = vmatpush1.msra.mxu0 %v78
    %2783 = vmatprep.subr.mxu0 0.0
    %2784 = vmatpush1.msra.mxu0 %v79
    %2785 = vmatprep.subr.mxu0 0.0
    %2786 = vmatpush1.msra.mxu0 %v80
    %2787 = vmatprep.subr.mxu0 0.0
    %2788 = vmatpush1.msra.mxu0 %v81
    %2789 = vmatprep.subr.mxu0 0.0
    %2790 = vmatpush1.msra.mxu0 %v82
    %2791 = vmatprep.subr.mxu0 0.0
    %2792 = vmatpush1.msra.mxu0 %v83
    %2793 = vmatprep.subr.mxu0 0.0
    %2794 = vmatpush1.msra.mxu0 %v84
    %2795 = vmatprep.subr.mxu0 0.0
    %2796 = vmatpush1.msra.mxu0 %v85
    %2797 = vmatprep.subr.mxu0 0.0
    %2798 = vmatpush1.msra.mxu0 0.0
    %2799 = vmatprep.subr.mxu0 0.0
    %2800 = vmatpush1.msra.mxu0 0.0
    %2801 = vmatprep.subr.mxu0 0.0
    %2802 = vmatpush1.msra.mxu0 0.0
    %2803 = vmatprep.subr.mxu0 0.0
    %2804 = vmatpush1.msra.mxu0 0.0
    %2805 = vmatprep.subr.mxu0 0.0
    %2806 = vmatpush1.msra.mxu0 0.0
    %2807 = vmatprep.subr.mxu0 0.0
    %2808 = vmatpush1.msra.mxu0 0.0
    %2809 = vmatprep.subr.mxu0 0.0
    %2810 = vmatpush1.msra.mxu0 0.0
    %2811 = vmatprep.subr.mxu0 0.0
    %2812 = vmatpush1.msra.mxu0 0.0
    %2813 = vmatprep.subr.mxu0 0.0
    %2814 = vmatpush1.msra.mxu0 0.0
    %2815 = vmatprep.subr.mxu0 0.0
    %2816 = vmatpush1.msra.mxu0 0.0
    %2817 = vmatprep.subr.mxu0 0.0
    %2818 = vmatpush1.msra.mxu0 0.0
    %2819 = vmatprep.subr.mxu0 0.0
    %2820 = vmatpush1.msra.mxu0 0.0
    %2821 = vmatprep.subr.mxu0 0.0
    %2822 = vmatpush1.msra.mxu0 0.0
    %2823 = vmatprep.subr.mxu0 0.0
    %2824 = vmatpush1.msra.mxu0 0.0
    %2825 = vmatprep.subr.mxu0 0.0
    %2826 = vmatpush1.msra.mxu0 0.0
    %2827 = vmatprep.subr.mxu0 0.0
    %2828 = vmatpush1.msra.mxu0 0.0
    %2829 = vmatprep.mubr.f32.mxu0 0.0
    %2830 = vmatmul.mubr.f32.gmra.mrb[0].mxu0 %v2546
    %v2831 = vpop.f32.mrb[0].mxu0
    %v2832 = vadd.f32 %v2762, %v2831
    %v2833 = vpop.f32.mrb[0].mxu0
    %2834 = vdwg.mxu0
    %v2835 = vadd.f32 %v2832, %v437
    %v2836 = vxor.u32 %v2835, 2147483648
    %v2837 = vmul.f32 %v2836, 1.442695
    %v2838 = vpow.pop %v2837
    %v2839 = vadd.f32 %v2838, 1.0
    %v2840 = vrcp.pop %v2839
    %v2841 = vmul.f32 1.0, %v2840
    %2842 = vmatprep.subr.mxu0 0.0
    %2843 = vmatpush1.msra.mxu0 %v86
    %2844 = vmatprep.subr.mxu0 0.0
    %2845 = vmatpush1.msra.mxu0 %v87
    %2846 = vmatprep.subr.mxu0 0.0
    %2847 = vmatpush1.msra.mxu0 %v88
    %2848 = vmatprep.subr.mxu0 0.0
    %2849 = vmatpush1.msra.mxu0 %v89
    %2850 = vmatprep.subr.mxu0 0.0
    %2851 = vmatpush1.msra.mxu0 %v90
    %2852 = vmatprep.subr.mxu0 0.0
    %2853 = vmatpush1.msra.mxu0 %v91
    %2854 = vmatprep.subr.mxu0 0.0
    %2855 = vmatpush1.msra.mxu0 %v92
    %2856 = vmatprep.subr.mxu0 0.0
    %2857 = vmatpush1.msra.mxu0 %v93
    %2858 = vmatprep.subr.mxu0 0.0
    %2859 = vmatpush1.msra.mxu0 %v94
    %2860 = vmatprep.subr.mxu0 0.0
    %2861 = vmatpush1.msra.mxu0 %v95
    %2862 = vmatprep.subr.mxu0 0.0
    %2863 = vmatpush1.msra.mxu0 %v96
    %2864 = vmatprep.subr.mxu0 0.0
    %2865 = vmatpush1.msra.mxu0 %v97
    %2866 = vmatprep.subr.mxu0 0.0
    %2867 = vmatpush1.msra.mxu0 %v98
    %2868 = vmatprep.subr.mxu0 0.0
    %2869 = vmatpush1.msra.mxu0 %v99
    %2870 = vmatprep.subr.mxu0 0.0
    %2871 = vmatpush1.msra.mxu0 %v100
    %2872 = vmatprep.subr.mxu0 0.0
    %2873 = vmatpush1.msra.mxu0 %v101
    %2874 = vmatprep.subr.mxu0 0.0
    %2875 = vmatpush1.msra.mxu0 0.0
    %2876 = vmatprep.subr.mxu0 0.0
    %2877 = vmatpush1.msra.mxu0 0.0
    %2878 = vmatprep.subr.mxu0 0.0
    %2879 = vmatpush1.msra.mxu0 0.0
    %2880 = vmatprep.subr.mxu0 0.0
    %2881 = vmatpush1.msra.mxu0 0.0
    %2882 = vmatprep.subr.mxu0 0.0
    %2883 = vmatpush1.msra.mxu0 0.0
    %2884 = vmatprep.subr.mxu0 0.0
    %2885 = vmatpush1.msra.mxu0 0.0
    %2886 = vmatprep.subr.mxu0 0.0
    %2887 = vmatpush1.msra.mxu0 0.0
    %2888 = vmatprep.subr.mxu0 0.0
    %2889 = vmatpush1.msra.mxu0 0.0
    %2890 = vmatprep.subr.mxu0 0.0
    %2891 = vmatpush1.msra.mxu0 0.0
    %2892 = vmatprep.subr.mxu0 0.0
    %2893 = vmatpush1.msra.mxu0 0.0
    %2894 = vmatprep.subr.mxu0 0.0
    %2895 = vmatpush1.msra.mxu0 0.0
    %2896 = vmatprep.subr.mxu0 0.0
    %2897 = vmatpush1.msra.mxu0 0.0
    %2898 = vmatprep.subr.mxu0 0.0
    %2899 = vmatpush1.msra.mxu0 0.0
    %2900 = vmatprep.subr.mxu0 0.0
    %2901 = vmatpush1.msra.mxu0 0.0
    %2902 = vmatprep.subr.mxu0 0.0
    %2903 = vmatpush1.msra.mxu0 0.0
    %2904 = vmatprep.subr.mxu0 0.0
    %2905 = vmatpush1.msra.mxu0 0.0
    %2906 = vmatprep.mubr.f32.mxu0 0.0
    %2907 = vmatmul.mubr.f32.gmra.mrb[0].mxu0 %v2546
    %v2908 = vpop.f32.mrb[0].mxu0
    %v2909 = vadd.f32 %v450, %v2908
    %v2910 = vpop.f32.mrb[0].mxu0
    %2911 = vdwg.mxu0
    %2912 = vmatprep.subr.mxu0 0.0
    %2913 = vmatpush1.msra.mxu0 %v110
    %2914 = vmatprep.subr.mxu0 0.0
    %2915 = vmatpush1.msra.mxu0 %v111
    %2916 = vmatprep.subr.mxu0 0.0
    %2917 = vmatpush1.msra.mxu0 %v112
    %2918 = vmatprep.subr.mxu0 0.0
    %2919 = vmatpush1.msra.mxu0 %v113
    %2920 = vmatprep.subr.mxu0 0.0
    %2921 = vmatpush1.msra.mxu0 0.0
    %2922 = vmatprep.subr.mxu0 0.0
    %2923 = vmatpush1.msra.mxu0 0.0
    %2924 = vmatprep.subr.mxu0 0.0
    %2925 = vmatpush1.msra.mxu0 0.0
    %2926 = vmatprep.subr.mxu0 0.0
    %2927 = vmatpush1.msra.mxu0 0.0
    %2928 = vmatprep.subr.mxu0 0.0
    %2929 = vmatpush1.msra.mxu0 0.0
    %2930 = vmatprep.subr.mxu0 0.0
    %2931 = vmatpush1.msra.mxu0 0.0
    %2932 = vmatprep.subr.mxu0 0.0
    %2933 = vmatpush1.msra.mxu0 0.0
    %2934 = vmatprep.subr.mxu0 0.0
    %2935 = vmatpush1.msra.mxu0 0.0
    %2936 = vmatprep.subr.mxu0 0.0
    %2937 = vmatpush1.msra.mxu0 0.0
    %2938 = vmatprep.subr.mxu0 0.0
    %2939 = vmatpush1.msra.mxu0 0.0
    %2940 = vmatprep.subr.mxu0 0.0
    %2941 = vmatpush1.msra.mxu0 0.0
    %2942 = vmatprep.subr.mxu0 0.0
    %2943 = vmatpush1.msra.mxu0 0.0
    %2944 = vmatprep.subr.mxu0 0.0
    %2945 = vmatpush1.msra.mxu0 0.0
    %2946 = vmatprep.subr.mxu0 0.0
    %2947 = vmatpush1.msra.mxu0 0.0
    %2948 = vmatprep.subr.mxu0 0.0
    %2949 = vmatpush1.msra.mxu0 0.0
    %2950 = vmatprep.subr.mxu0 0.0
    %2951 = vmatpush1.msra.mxu0 0.0
    %2952 = vmatprep.subr.mxu0 0.0
    %2953 = vmatpush1.msra.mxu0 0.0
    %2954 = vmatprep.subr.mxu0 0.0
    %2955 = vmatpush1.msra.mxu0 0.0
    %2956 = vmatprep.subr.mxu0 0.0
    %2957 = vmatpush1.msra.mxu0 0.0
    %2958 = vmatprep.subr.mxu0 0.0
    %2959 = vmatpush1.msra.mxu0 0.0
    %2960 = vmatprep.subr.mxu0 0.0
    %2961 = vmatpush1.msra.mxu0 0.0
    %2962 = vmatprep.subr.mxu0 0.0
    %2963 = vmatpush1.msra.mxu0 0.0
    %2964 = vmatprep.subr.mxu0 0.0
    %2965 = vmatpush1.msra.mxu0 0.0
    %2966 = vmatprep.subr.mxu0 0.0
    %2967 = vmatpush1.msra.mxu0 0.0
    %2968 = vmatprep.subr.mxu0 0.0
    %2969 = vmatpush1.msra.mxu0 0.0
    %2970 = vmatprep.subr.mxu0 0.0
    %2971 = vmatpush1.msra.mxu0 0.0
    %2972 = vmatprep.subr.mxu0 0.0
    %2973 = vmatpush1.msra.mxu0 0.0
    %2974 = vmatprep.subr.mxu0 0.0
    %2975 = vmatpush1.msra.mxu0 0.0
    %2976 = vmatprep.mubr.f32.mxu0 0.0
    %2977 = vmatmul.mubr.f32.gmra.mrb[0].mxu0 %v2468
    %v2978 = vpop.f32.mrb[0].mxu0
    %v2979 = vadd.f32 %v526, %v2978
    %v2980 = vpop.f32.mrb[0].mxu0
    %2981 = vdwg.mxu0
    %v2982 = vmul.f32 %v2694, %v2979
    %v2983 = vadd.f32 %v2909, %v2982
    %v2984 = vtanh.pop %v2983
    %v2985 = vsub.f32 1.0, %v2841
    %v2986 = vmul.f32 %v2985, %v2984
    %v2987 = vmul.f32 %v2841, %v2316
    %v2988 = vadd.f32 %v2986, %v2987
    %v2991 = vunpack.c.l.s4 1966171168
    %v2992 = vunpack.c.0.s8 %v2991
    %v2993 = vlaneseq
    %v2994 = vshrl.u32 %v2993, 7
    %v2995 = vsub.s32 %v2992, %v2994
    %v2996 = vrot.slane %v2988, %v2995
    %v2997 = vcombine.high %v2996, %v2996
    %v2999 = vunpack.c.l.s4 1966171168
    %v3000 = vunpack.c.0.s8 %v2999
    %v3001 = vlaneseq
    %v3002 = vshrl.u32 %v3001, 7
    %v3003 = vsub.s32 %v3000, %v3002
    %v3004 = vrot.slane %v2996, %v3003
    %v3006 = vunpack.c.l.s4 1966171168
    %v3007 = vunpack.c.0.s8 %v3006
    %v3008 = vlaneseq
    %v3009 = vshrl.u32 %v3008, 7
    %v3010 = vsub.s32 %v3007, %v3009
    %v3011 = vrot.slane %v2997, %v3010
    %v3012 = vlaneseq
    %v3013 = vshrl.u32 %v3012, 7
    %v3014 = vsub.s32 0, %v3013
    %v3015 = vrot.slane %v3004, %v3014
    %v3016 = vlaneseq
    %v3017 = vshrl.u32 %v3016, 7
    %v3018 = vsub.s32 0, %v3017
    %v3019 = vrot.slane %v3011, %v3018
    %v3022 = vmul.f32 %v118, %v3015
    %v3023 = vmul.f32 %v119, %v3015
    %v3024 = vmul.f32 %v120, %v3019
    %v3025 = vmul.f32 %v121, %v3019
    %v3026 = vsel %vm136, %v3022, 0.0
    %3027 = vadd.xlane.f32.xlu0 %v3026
    %v3028 = vpop.xlane.xlu0 %3027
    %v3029 = vsel %vm2357, %v3023, 0.0
    %3030 = vadd.xlane.f32.xlu0 %v3029
    %v3031 = vpop.xlane.xlu0 %3030
    %v3032 = vsel %vm136, %v3024, 0.0
    %3033 = vadd.xlane.f32.xlu0 %v3032
    %v3034 = vpop.xlane.xlu0 %3033
    %v3035 = vsel %vm2357, %v3025, 0.0
    %3036 = vadd.xlane.f32.xlu0 %v3035
    %v3037 = vpop.xlane.xlu0 %3036
    %v3042 = vlaneseq
    %v3043 = vshrl.u32 %v3042, 7
    %v3044 = vsub.s32 %v132, %v3043
    %v3045 = vrot.slane %v3028, %v3044
    %v3046 = vlaneseq
    %v3047 = vshrl.u32 %v3046, 7
    %v3048 = vsub.s32 %v2375, %v3047
    %v3049 = vrot.slane %v3031, %v3048
    %v3050 = vsel %vm2380, %v3049, %v3045
    %v3051 = vlaneseq
    %v3052 = vshrl.u32 %v3051, 7
    %v3053 = vsub.s32 %v132, %v3052
    %v3054 = vrot.slane %v3034, %v3053
    %v3055 = vlaneseq
    %v3056 = vshrl.u32 %v3055, 7
    %v3057 = vsub.s32 %v2375, %v3056
    %v3058 = vrot.slane %v3037, %v3057
    %v3059 = vsel %vm2380, %v3058, %v3054
    %v3060 = vsel %vm2391, %v3059, %v3050
    %v3062 = vsel %vm133, %v3060, -1e+30
    %v3063 = vsel %vm2395, %v3062, -inf
    %3064 = vmax.xlane.f32.xlu0 %v3063
    %v3065 = vpop.xlane.xlu0 %3064
    %v3066 = vsub.f32 %v3062, %v3065
    %v3067 = vmul.f32 %v3066, 1.442695
    %v3068 = vpow.pop %v3067
    %v3069 = vsel %vm2395, %v3068, 0.0
    %3070 = vadd.xlane.f32.xlu0 %v3069
    %v3071 = vpop.xlane.xlu0 %3070
    %v3072 = vrcp.pop %v3071
    %v3073 = vmul.f32 %v3068, %v3072
    %v3074 = vsel %vm2407, %v3060, -1e+30
    %v3075 = vsel %vm2395, %v3074, -inf
    %3076 = vmax.xlane.f32.xlu0 %v3075
    %v3077 = vpop.xlane.xlu0 %3076
    %v3078 = vsub.f32 %v3074, %v3077
    %v3079 = vmul.f32 %v3078, 1.442695
    %v3080 = vpow.pop %v3079
    %v3081 = vsel %vm2395, %v3080, 0.0
    %3082 = vadd.xlane.f32.xlu0 %v3081
    %v3083 = vpop.xlane.xlu0 %3082
    %v3084 = vrcp.pop %v3083
    %v3085 = vmul.f32 %v3080, %v3084
    %v3086 = vadd.f32 %v3073, %v3085
    %v3087 = vlaneseq
    %v3088 = vshrl.u32 %v3087, 7
    %v3089 = vsub.s32 0, %v3088
    %v3090 = vrot.slane %v3086, %v3089
    %3092 = vbcast.lane.b32.xlu0 %v3090, 256
    %v3093 = vpop.permute.xlu0 %3092
    %s3095 = sor.u32 256, 8
    %3096 = vbcast.lane.b32.xlu0 %v3090, %s3095
    %v3097 = vpop.permute.xlu0 %3096
    %v3098 = vlaneseq
    %v3099 = vshrl.u32 %v3098, 7
    %v3100 = vsub.s32 1, %v3099
    %v3101 = vrot.slane %v3086, %v3100
    %3103 = vbcast.lane.b32.xlu0 %v3101, 256
    %v3104 = vpop.permute.xlu0 %3103
    %s3106 = sor.u32 256, 8
    %3107 = vbcast.lane.b32.xlu0 %v3101, %s3106
    %v3108 = vpop.permute.xlu0 %3107
    %v3109 = vmul.f32 %v122, %v3093
    %v3110 = vmul.f32 %v123, %v3097
    %v3111 = vmul.f32 %v124, %v3104
    %v3112 = vmul.f32 %v125, %v3108
    %v3113 = vsel %vm2447, %v3110, 0.0
    %v3114 = vadd.f32 %v3109, %v3113
    %v3115 = vrot.slane %v3114, 4
    %v3116 = vadd.f32 %v3114, %v3115
    %v3117 = vrot.slane %v3116, 2
    %v3118 = vadd.f32 %v3116, %v3117
    %v3119 = vrot.slane %v3118, 1
    %v3120 = vadd.f32 %v3118, %v3119
    %v3121 = vsel %vm2447, %v3112, 0.0
    %v3122 = vadd.f32 %v3111, %v3121
    %v3123 = vrot.slane %v3122, 4
    %v3124 = vadd.f32 %v3122, %v3123
    %v3125 = vrot.slane %v3124, 2
    %v3126 = vadd.f32 %v3124, %v3125
    %v3127 = vrot.slane %v3126, 1
    %v3128 = vadd.f32 %v3126, %v3127
    %v3131 = vsel %vm2391, %v3128, %v3120
    %v3133 = vsel %vm136, %v2988, 0
    %3135 = vmatprep.subr.mxu0 0.0
    %3136 = vmatpush1.msra.mxu0 %v126
    %3137 = vmatprep.subr.mxu0 0.0
    %3138 = vmatpush1.msra.mxu0 %v127
    %3139 = vmatprep.subr.mxu0 0.0
    %3140 = vmatpush1.msra.mxu0 %v128
    %3141 = vmatprep.subr.mxu0 0.0
    %3142 = vmatpush1.msra.mxu0 %v129
    %3143 = vmatprep.subr.mxu0 0.0
    %3144 = vmatpush1.msra.mxu0 0.0
    %3145 = vmatprep.subr.mxu0 0.0
    %3146 = vmatpush1.msra.mxu0 0.0
    %3147 = vmatprep.subr.mxu0 0.0
    %3148 = vmatpush1.msra.mxu0 0.0
    %3149 = vmatprep.subr.mxu0 0.0
    %3150 = vmatpush1.msra.mxu0 0.0
    %3151 = vmatprep.subr.mxu0 0.0
    %3152 = vmatpush1.msra.mxu0 0.0
    %3153 = vmatprep.subr.mxu0 0.0
    %3154 = vmatpush1.msra.mxu0 0.0
    %3155 = vmatprep.subr.mxu0 0.0
    %3156 = vmatpush1.msra.mxu0 0.0
    %3157 = vmatprep.subr.mxu0 0.0
    %3158 = vmatpush1.msra.mxu0 0.0
    %3159 = vmatprep.subr.mxu0 0.0
    %3160 = vmatpush1.msra.mxu0 0.0
    %3161 = vmatprep.subr.mxu0 0.0
    %3162 = vmatpush1.msra.mxu0 0.0
    %3163 = vmatprep.subr.mxu0 0.0
    %3164 = vmatpush1.msra.mxu0 0.0
    %3165 = vmatprep.subr.mxu0 0.0
    %3166 = vmatpush1.msra.mxu0 0.0
    %3167 = vmatprep.subr.mxu0 0.0
    %3168 = vmatpush1.msra.mxu0 0.0
    %3169 = vmatprep.subr.mxu0 0.0
    %3170 = vmatpush1.msra.mxu0 0.0
    %3171 = vmatprep.subr.mxu0 0.0
    %3172 = vmatpush1.msra.mxu0 0.0
    %3173 = vmatprep.subr.mxu0 0.0
    %3174 = vmatpush1.msra.mxu0 0.0
    %3175 = vmatprep.subr.mxu0 0.0
    %3176 = vmatpush1.msra.mxu0 0.0
    %3177 = vmatprep.subr.mxu0 0.0
    %3178 = vmatpush1.msra.mxu0 0.0
    %3179 = vmatprep.subr.mxu0 0.0
    %3180 = vmatpush1.msra.mxu0 0.0
    %3181 = vmatprep.subr.mxu0 0.0
    %3182 = vmatpush1.msra.mxu0 0.0
    %3183 = vmatprep.subr.mxu0 0.0
    %3184 = vmatpush1.msra.mxu0 0.0
    %3185 = vmatprep.subr.mxu0 0.0
    %3186 = vmatpush1.msra.mxu0 0.0
    %3187 = vmatprep.subr.mxu0 0.0
    %3188 = vmatpush1.msra.mxu0 0.0
    %3189 = vmatprep.subr.mxu0 0.0
    %3190 = vmatpush1.msra.mxu0 0.0
    %3191 = vmatprep.subr.mxu0 0.0
    %3192 = vmatpush1.msra.mxu0 0.0
    %3193 = vmatprep.subr.mxu0 0.0
    %3194 = vmatpush1.msra.mxu0 0.0
    %3195 = vmatprep.subr.mxu0 0.0
    %3196 = vmatpush1.msra.mxu0 0.0
    %3197 = vmatprep.subr.mxu0 0.0
    %3198 = vmatpush1.msra.mxu0 0.0
    %3199 = vmatprep.mubr.f32.mxu0 0.0
    %3200 = vmatmul.mubr.f32.gmra.mrb[0].mxu0 %v3133
    %v3201 = vpop.f32.mrb[0].mxu0
    %v3202 = vadd.f32 %v3131, %v3201
    %v3203 = vpop.f32.mrb[0].mxu0
    %3204 = vdwg.mxu0
    %v3205 = vadd.f32 %v3202, %v2544
    %s3206 = scalar_lea.vmem [#allocation2], 2
    %3207 = vst [vmem:[%s3206] sm:$0x3] %v3205
    %3208 = vmatprep.subr.mxu0 0.0
    %3209 = vmatpush1.msra.mxu0 %v102
    %3210 = vmatprep.subr.mxu0 0.0
    %3211 = vmatpush1.msra.mxu0 %v103
    %3212 = vmatprep.subr.mxu0 0.0
    %3213 = vmatpush1.msra.mxu0 %v104
    %3214 = vmatprep.subr.mxu0 0.0
    %3215 = vmatpush1.msra.mxu0 %v105
    %3216 = vmatprep.subr.mxu0 0.0
    %3217 = vmatpush1.msra.mxu0 0.0
    %3218 = vmatprep.subr.mxu0 0.0
    %3219 = vmatpush1.msra.mxu0 0.0
    %3220 = vmatprep.subr.mxu0 0.0
    %3221 = vmatpush1.msra.mxu0 0.0
    %3222 = vmatprep.subr.mxu0 0.0
    %3223 = vmatpush1.msra.mxu0 0.0
    %3224 = vmatprep.subr.mxu0 0.0
    %3225 = vmatpush1.msra.mxu0 0.0
    %3226 = vmatprep.subr.mxu0 0.0
    %3227 = vmatpush1.msra.mxu0 0.0
    %3228 = vmatprep.subr.mxu0 0.0
    %3229 = vmatpush1.msra.mxu0 0.0
    %3230 = vmatprep.subr.mxu0 0.0
    %3231 = vmatpush1.msra.mxu0 0.0
    %3232 = vmatprep.subr.mxu0 0.0
    %3233 = vmatpush1.msra.mxu0 0.0
    %3234 = vmatprep.subr.mxu0 0.0
    %3235 = vmatpush1.msra.mxu0 0.0
    %3236 = vmatprep.subr.mxu0 0.0
    %3237 = vmatpush1.msra.mxu0 0.0
    %3238 = vmatprep.subr.mxu0 0.0
    %3239 = vmatpush1.msra.mxu0 0.0
    %3240 = vmatprep.subr.mxu0 0.0
    %3241 = vmatpush1.msra.mxu0 0.0
    %3242 = vmatprep.subr.mxu0 0.0
    %3243 = vmatpush1.msra.mxu0 0.0
    %3244 = vmatprep.subr.mxu0 0.0
    %3245 = vmatpush1.msra.mxu0 0.0
    %3246 = vmatprep.subr.mxu0 0.0
    %3247 = vmatpush1.msra.mxu0 0.0
    %3248 = vmatprep.subr.mxu0 0.0
    %3249 = vmatpush1.msra.mxu0 0.0
    %3250 = vmatprep.subr.mxu0 0.0
    %3251 = vmatpush1.msra.mxu0 0.0
    %3252 = vmatprep.subr.mxu0 0.0
    %3253 = vmatpush1.msra.mxu0 0.0
    %3254 = vmatprep.subr.mxu0 0.0
    %3255 = vmatpush1.msra.mxu0 0.0
    %3256 = vmatprep.subr.mxu0 0.0
    %3257 = vmatpush1.msra.mxu0 0.0
    %3258 = vmatprep.subr.mxu0 0.0
    %3259 = vmatpush1.msra.mxu0 0.0
    %3260 = vmatprep.subr.mxu0 0.0
    %3261 = vmatpush1.msra.mxu0 0.0
    %3262 = vmatprep.subr.mxu0 0.0
    %3263 = vmatpush1.msra.mxu0 0.0
    %3264 = vmatprep.subr.mxu0 0.0
    %3265 = vmatpush1.msra.mxu0 0.0
    %3266 = vmatprep.subr.mxu0 0.0
    %3267 = vmatpush1.msra.mxu0 0.0
    %3268 = vmatprep.subr.mxu0 0.0
    %3269 = vmatpush1.msra.mxu0 0.0
    %3270 = vmatprep.subr.mxu0 0.0
    %3271 = vmatpush1.msra.mxu0 0.0
    %3272 = vmatprep.mubr.f32.mxu0 0.0
    %3273 = vmatmul.mubr.f32.gmra.mrb[0].mxu0 %v3133
    %v3274 = vpop.f32.mrb[0].mxu0
    %v3275 = vadd.f32 0.0, %v3274
    %v3276 = vpop.f32.mrb[0].mxu0
    %3277 = vdwg.mxu0
    %3278 = vmatprep.subr.mxu0 0.0
    %3279 = vmatpush1.msra.mxu0 %v54
    %3280 = vmatprep.subr.mxu0 0.0
    %3281 = vmatpush1.msra.mxu0 %v55
    %3282 = vmatprep.subr.mxu0 0.0
    %3283 = vmatpush1.msra.mxu0 %v56
    %3284 = vmatprep.subr.mxu0 0.0
    %3285 = vmatpush1.msra.mxu0 %v57
    %3286 = vmatprep.subr.mxu0 0.0
    %3287 = vmatpush1.msra.mxu0 %v58
    %3288 = vmatprep.subr.mxu0 0.0
    %3289 = vmatpush1.msra.mxu0 %v59
    %3290 = vmatprep.subr.mxu0 0.0
    %3291 = vmatpush1.msra.mxu0 %v60
    %3292 = vmatprep.subr.mxu0 0.0
    %3293 = vmatpush1.msra.mxu0 %v61
    %3294 = vmatprep.subr.mxu0 0.0
    %3295 = vmatpush1.msra.mxu0 %v62
    %3296 = vmatprep.subr.mxu0 0.0
    %3297 = vmatpush1.msra.mxu0 %v63
    %3298 = vmatprep.subr.mxu0 0.0
    %3299 = vmatpush1.msra.mxu0 %v64
    %3300 = vmatprep.subr.mxu0 0.0
    %3301 = vmatpush1.msra.mxu0 %v65
    %3302 = vmatprep.subr.mxu0 0.0
    %3303 = vmatpush1.msra.mxu0 %v66
    %3304 = vmatprep.subr.mxu0 0.0
    %3305 = vmatpush1.msra.mxu0 %v67
    %3306 = vmatprep.subr.mxu0 0.0
    %3307 = vmatpush1.msra.mxu0 %v68
    %3308 = vmatprep.subr.mxu0 0.0
    %3309 = vmatpush1.msra.mxu0 %v69
    %3310 = vmatprep.subr.mxu0 0.0
    %3311 = vmatpush1.msra.mxu0 0.0
    %3312 = vmatprep.subr.mxu0 0.0
    %3313 = vmatpush1.msra.mxu0 0.0
    %3314 = vmatprep.subr.mxu0 0.0
    %3315 = vmatpush1.msra.mxu0 0.0
    %3316 = vmatprep.subr.mxu0 0.0
    %3317 = vmatpush1.msra.mxu0 0.0
    %3318 = vmatprep.subr.mxu0 0.0
    %3319 = vmatpush1.msra.mxu0 0.0
    %3320 = vmatprep.subr.mxu0 0.0
    %3321 = vmatpush1.msra.mxu0 0.0
    %3322 = vmatprep.subr.mxu0 0.0
    %3323 = vmatpush1.msra.mxu0 0.0
    %3324 = vmatprep.subr.mxu0 0.0
    %3325 = vmatpush1.msra.mxu0 0.0
    %3326 = vmatprep.subr.mxu0 0.0
    %3327 = vmatpush1.msra.mxu0 0.0
    %3328 = vmatprep.subr.mxu0 0.0
    %3329 = vmatpush1.msra.mxu0 0.0
    %3330 = vmatprep.subr.mxu0 0.0
    %3331 = vmatpush1.msra.mxu0 0.0
    %3332 = vmatprep.subr.mxu0 0.0
    %3333 = vmatpush1.msra.mxu0 0.0
    %3334 = vmatprep.subr.mxu0 0.0
    %3335 = vmatpush1.msra.mxu0 0.0
    %3336 = vmatprep.subr.mxu0 0.0
    %3337 = vmatpush1.msra.mxu0 0.0
    %3338 = vmatprep.subr.mxu0 0.0
    %3339 = vmatpush1.msra.mxu0 0.0
    %3340 = vmatprep.subr.mxu0 0.0
    %3341 = vmatpush1.msra.mxu0 0.0
    %3342 = vmatprep.mubr.f32.mxu0 0.0
    %3343 = vmatmul.mubr.f32.gmra.mrb[0].mxu0 %v3205
    %v3344 = vpop.f32.mrb[0].mxu0
    %v3345 = vadd.f32 %v3275, %v3344
    %v3346 = vpop.f32.mrb[0].mxu0
    %3347 = vdwg.mxu0
    %v3348 = vadd.f32 %v3345, %v284
    %v3349 = vxor.u32 %v3348, 2147483648
    %v3350 = vmul.f32 %v3349, 1.442695
    %v3351 = vpow.pop %v3350
    %v3352 = vadd.f32 %v3351, 1.0
    %v3353 = vrcp.pop %v3352
    %v3354 = vmul.f32 1.0, %v3353
    %3355 = vmatprep.subr.mxu0 0.0
    %3356 = vmatpush1.msra.mxu0 %v106
    %3357 = vmatprep.subr.mxu0 0.0
    %3358 = vmatpush1.msra.mxu0 %v107
    %3359 = vmatprep.subr.mxu0 0.0
    %3360 = vmatpush1.msra.mxu0 %v108
    %3361 = vmatprep.subr.mxu0 0.0
    %3362 = vmatpush1.msra.mxu0 %v109
    %3363 = vmatprep.subr.mxu0 0.0
    %3364 = vmatpush1.msra.mxu0 0.0
    %3365 = vmatprep.subr.mxu0 0.0
    %3366 = vmatpush1.msra.mxu0 0.0
    %3367 = vmatprep.subr.mxu0 0.0
    %3368 = vmatpush1.msra.mxu0 0.0
    %3369 = vmatprep.subr.mxu0 0.0
    %3370 = vmatpush1.msra.mxu0 0.0
    %3371 = vmatprep.subr.mxu0 0.0
    %3372 = vmatpush1.msra.mxu0 0.0
    %3373 = vmatprep.subr.mxu0 0.0
    %3374 = vmatpush1.msra.mxu0 0.0
    %3375 = vmatprep.subr.mxu0 0.0
    %3376 = vmatpush1.msra.mxu0 0.0
    %3377 = vmatprep.subr.mxu0 0.0
    %3378 = vmatpush1.msra.mxu0 0.0
    %3379 = vmatprep.subr.mxu0 0.0
    %3380 = vmatpush1.msra.mxu0 0.0
    %3381 = vmatprep.subr.mxu0 0.0
    %3382 = vmatpush1.msra.mxu0 0.0
    %3383 = vmatprep.subr.mxu0 0.0
    %3384 = vmatpush1.msra.mxu0 0.0
    %3385 = vmatprep.subr.mxu0 0.0
    %3386 = vmatpush1.msra.mxu0 0.0
    %3387 = vmatprep.subr.mxu0 0.0
    %3388 = vmatpush1.msra.mxu0 0.0
    %3389 = vmatprep.subr.mxu0 0.0
    %3390 = vmatpush1.msra.mxu0 0.0
    %3391 = vmatprep.subr.mxu0 0.0
    %3392 = vmatpush1.msra.mxu0 0.0
    %3393 = vmatprep.subr.mxu0 0.0
    %3394 = vmatpush1.msra.mxu0 0.0
    %3395 = vmatprep.subr.mxu0 0.0
    %3396 = vmatpush1.msra.mxu0 0.0
    %3397 = vmatprep.subr.mxu0 0.0
    %3398 = vmatpush1.msra.mxu0 0.0
    %3399 = vmatprep.subr.mxu0 0.0
    %3400 = vmatpush1.msra.mxu0 0.0
    %3401 = vmatprep.subr.mxu0 0.0
    %3402 = vmatpush1.msra.mxu0 0.0
    %3403 = vmatprep.subr.mxu0 0.0
    %3404 = vmatpush1.msra.mxu0 0.0
    %3405 = vmatprep.subr.mxu0 0.0
    %3406 = vmatpush1.msra.mxu0 0.0
    %3407 = vmatprep.subr.mxu0 0.0
    %3408 = vmatpush1.msra.mxu0 0.0
    %3409 = vmatprep.subr.mxu0 0.0
    %3410 = vmatpush1.msra.mxu0 0.0
    %3411 = vmatprep.subr.mxu0 0.0
    %3412 = vmatpush1.msra.mxu0 0.0
    %3413 = vmatprep.subr.mxu0 0.0
    %3414 = vmatpush1.msra.mxu0 0.0
    %3415 = vmatprep.subr.mxu0 0.0
    %3416 = vmatpush1.msra.mxu0 0.0
    %3417 = vmatprep.subr.mxu0 0.0
    %3418 = vmatpush1.msra.mxu0 0.0
    %3419 = vmatprep.mubr.f32.mxu0 0.0
    %3420 = vmatmul.mubr.f32.gmra.mrb[0].mxu0 %v3133
    %v3421 = vpop.f32.mrb[0].mxu0
    %v3422 = vadd.f32 0.0, %v3421
    %v3423 = vpop.f32.mrb[0].mxu0
    %3424 = vdwg.mxu0
    %3425 = vmatprep.subr.mxu0 0.0
    %3426 = vmatpush1.msra.mxu0 %v70
    %3427 = vmatprep.subr.mxu0 0.0
    %3428 = vmatpush1.msra.mxu0 %v71
    %3429 = vmatprep.subr.mxu0 0.0
    %3430 = vmatpush1.msra.mxu0 %v72
    %3431 = vmatprep.subr.mxu0 0.0
    %3432 = vmatpush1.msra.mxu0 %v73
    %3433 = vmatprep.subr.mxu0 0.0
    %3434 = vmatpush1.msra.mxu0 %v74
    %3435 = vmatprep.subr.mxu0 0.0
    %3436 = vmatpush1.msra.mxu0 %v75
    %3437 = vmatprep.subr.mxu0 0.0
    %3438 = vmatpush1.msra.mxu0 %v76
    %3439 = vmatprep.subr.mxu0 0.0
    %3440 = vmatpush1.msra.mxu0 %v77
    %3441 = vmatprep.subr.mxu0 0.0
    %3442 = vmatpush1.msra.mxu0 %v78
    %3443 = vmatprep.subr.mxu0 0.0
    %3444 = vmatpush1.msra.mxu0 %v79
    %3445 = vmatprep.subr.mxu0 0.0
    %3446 = vmatpush1.msra.mxu0 %v80
    %3447 = vmatprep.subr.mxu0 0.0
    %3448 = vmatpush1.msra.mxu0 %v81
    %3449 = vmatprep.subr.mxu0 0.0
    %3450 = vmatpush1.msra.mxu0 %v82
    %3451 = vmatprep.subr.mxu0 0.0
    %3452 = vmatpush1.msra.mxu0 %v83
    %3453 = vmatprep.subr.mxu0 0.0
    %3454 = vmatpush1.msra.mxu0 %v84
    %3455 = vmatprep.subr.mxu0 0.0
    %3456 = vmatpush1.msra.mxu0 %v85
    %3457 = vmatprep.subr.mxu0 0.0
    %3458 = vmatpush1.msra.mxu0 0.0
    %3459 = vmatprep.subr.mxu0 0.0
    %3460 = vmatpush1.msra.mxu0 0.0
    %3461 = vmatprep.subr.mxu0 0.0
    %3462 = vmatpush1.msra.mxu0 0.0
    %3463 = vmatprep.subr.mxu0 0.0
    %3464 = vmatpush1.msra.mxu0 0.0
    %3465 = vmatprep.subr.mxu0 0.0
    %3466 = vmatpush1.msra.mxu0 0.0
    %3467 = vmatprep.subr.mxu0 0.0
    %3468 = vmatpush1.msra.mxu0 0.0
    %3469 = vmatprep.subr.mxu0 0.0
    %3470 = vmatpush1.msra.mxu0 0.0
    %3471 = vmatprep.subr.mxu0 0.0
    %3472 = vmatpush1.msra.mxu0 0.0
    %3473 = vmatprep.subr.mxu0 0.0
    %3474 = vmatpush1.msra.mxu0 0.0
    %3475 = vmatprep.subr.mxu0 0.0
    %3476 = vmatpush1.msra.mxu0 0.0
    %3477 = vmatprep.subr.mxu0 0.0
    %3478 = vmatpush1.msra.mxu0 0.0
    %3479 = vmatprep.subr.mxu0 0.0
    %3480 = vmatpush1.msra.mxu0 0.0
    %3481 = vmatprep.subr.mxu0 0.0
    %3482 = vmatpush1.msra.mxu0 0.0
    %3483 = vmatprep.subr.mxu0 0.0
    %3484 = vmatpush1.msra.mxu0 0.0
    %3485 = vmatprep.subr.mxu0 0.0
    %3486 = vmatpush1.msra.mxu0 0.0
    %3487 = vmatprep.subr.mxu0 0.0
    %3488 = vmatpush1.msra.mxu0 0.0
    %3489 = vmatprep.mubr.f32.mxu0 0.0
    %3490 = vmatmul.mubr.f32.gmra.mrb[0].mxu0 %v3205
    %v3491 = vpop.f32.mrb[0].mxu0
    %v3492 = vadd.f32 %v3422, %v3491
    %v3493 = vpop.f32.mrb[0].mxu0
    %3494 = vdwg.mxu0
    %v3495 = vadd.f32 %v3492, %v437
    %v3496 = vxor.u32 %v3495, 2147483648
    %v3497 = vmul.f32 %v3496, 1.442695
    %v3498 = vpow.pop %v3497
    %v3499 = vadd.f32 %v3498, 1.0
    %v3500 = vrcp.pop %v3499
    %v3501 = vmul.f32 1.0, %v3500
    %3502 = vmatprep.subr.mxu0 0.0
    %3503 = vmatpush1.msra.mxu0 %v86
    %3504 = vmatprep.subr.mxu0 0.0
    %3505 = vmatpush1.msra.mxu0 %v87
    %3506 = vmatprep.subr.mxu0 0.0
    %3507 = vmatpush1.msra.mxu0 %v88
    %3508 = vmatprep.subr.mxu0 0.0
    %3509 = vmatpush1.msra.mxu0 %v89
    %3510 = vmatprep.subr.mxu0 0.0
    %3511 = vmatpush1.msra.mxu0 %v90
    %3512 = vmatprep.subr.mxu0 0.0
    %3513 = vmatpush1.msra.mxu0 %v91
    %3514 = vmatprep.subr.mxu0 0.0
    %3515 = vmatpush1.msra.mxu0 %v92
    %3516 = vmatprep.subr.mxu0 0.0
    %3517 = vmatpush1.msra.mxu0 %v93
    %3518 = vmatprep.subr.mxu0 0.0
    %3519 = vmatpush1.msra.mxu0 %v94
    %3520 = vmatprep.subr.mxu0 0.0
    %3521 = vmatpush1.msra.mxu0 %v95
    %3522 = vmatprep.subr.mxu0 0.0
    %3523 = vmatpush1.msra.mxu0 %v96
    %3524 = vmatprep.subr.mxu0 0.0
    %3525 = vmatpush1.msra.mxu0 %v97
    %3526 = vmatprep.subr.mxu0 0.0
    %3527 = vmatpush1.msra.mxu0 %v98
    %3528 = vmatprep.subr.mxu0 0.0
    %3529 = vmatpush1.msra.mxu0 %v99
    %3530 = vmatprep.subr.mxu0 0.0
    %3531 = vmatpush1.msra.mxu0 %v100
    %3532 = vmatprep.subr.mxu0 0.0
    %3533 = vmatpush1.msra.mxu0 %v101
    %3534 = vmatprep.subr.mxu0 0.0
    %3535 = vmatpush1.msra.mxu0 0.0
    %3536 = vmatprep.subr.mxu0 0.0
    %3537 = vmatpush1.msra.mxu0 0.0
    %3538 = vmatprep.subr.mxu0 0.0
    %3539 = vmatpush1.msra.mxu0 0.0
    %3540 = vmatprep.subr.mxu0 0.0
    %3541 = vmatpush1.msra.mxu0 0.0
    %3542 = vmatprep.subr.mxu0 0.0
    %3543 = vmatpush1.msra.mxu0 0.0
    %3544 = vmatprep.subr.mxu0 0.0
    %3545 = vmatpush1.msra.mxu0 0.0
    %3546 = vmatprep.subr.mxu0 0.0
    %3547 = vmatpush1.msra.mxu0 0.0
    %3548 = vmatprep.subr.mxu0 0.0
    %3549 = vmatpush1.msra.mxu0 0.0
    %3550 = vmatprep.subr.mxu0 0.0
    %3551 = vmatpush1.msra.mxu0 0.0
    %3552 = vmatprep.subr.mxu0 0.0
    %3553 = vmatpush1.msra.mxu0 0.0
    %3554 = vmatprep.subr.mxu0 0.0
    %3555 = vmatpush1.msra.mxu0 0.0
    %3556 = vmatprep.subr.mxu0 0.0
    %3557 = vmatpush1.msra.mxu0 0.0
    %3558 = vmatprep.subr.mxu0 0.0
    %3559 = vmatpush1.msra.mxu0 0.0
    %3560 = vmatprep.subr.mxu0 0.0
    %3561 = vmatpush1.msra.mxu0 0.0
    %3562 = vmatprep.subr.mxu0 0.0
    %3563 = vmatpush1.msra.mxu0 0.0
    %3564 = vmatprep.subr.mxu0 0.0
    %3565 = vmatpush1.msra.mxu0 0.0
    %3566 = vmatprep.mubr.f32.mxu0 0.0
    %3567 = vmatmul.mubr.f32.gmra.mrb[0].mxu0 %v3205
    %v3568 = vpop.f32.mrb[0].mxu0
    %v3569 = vadd.f32 %v450, %v3568
    %v3570 = vpop.f32.mrb[0].mxu0
    %3571 = vdwg.mxu0
    %3572 = vmatprep.subr.mxu0 0.0
    %3573 = vmatpush1.msra.mxu0 %v110
    %3574 = vmatprep.subr.mxu0 0.0
    %3575 = vmatpush1.msra.mxu0 %v111
    %3576 = vmatprep.subr.mxu0 0.0
    %3577 = vmatpush1.msra.mxu0 %v112
    %3578 = vmatprep.subr.mxu0 0.0
    %3579 = vmatpush1.msra.mxu0 %v113
    %3580 = vmatprep.subr.mxu0 0.0
    %3581 = vmatpush1.msra.mxu0 0.0
    %3582 = vmatprep.subr.mxu0 0.0
    %3583 = vmatpush1.msra.mxu0 0.0
    %3584 = vmatprep.subr.mxu0 0.0
    %3585 = vmatpush1.msra.mxu0 0.0
    %3586 = vmatprep.subr.mxu0 0.0
    %3587 = vmatpush1.msra.mxu0 0.0
    %3588 = vmatprep.subr.mxu0 0.0
    %3589 = vmatpush1.msra.mxu0 0.0
    %3590 = vmatprep.subr.mxu0 0.0
    %3591 = vmatpush1.msra.mxu0 0.0
    %3592 = vmatprep.subr.mxu0 0.0
    %3593 = vmatpush1.msra.mxu0 0.0
    %3594 = vmatprep.subr.mxu0 0.0
    %3595 = vmatpush1.msra.mxu0 0.0
    %3596 = vmatprep.subr.mxu0 0.0
    %3597 = vmatpush1.msra.mxu0 0.0
    %3598 = vmatprep.subr.mxu0 0.0
    %3599 = vmatpush1.msra.mxu0 0.0
    %3600 = vmatprep.subr.mxu0 0.0
    %3601 = vmatpush1.msra.mxu0 0.0
    %3602 = vmatprep.subr.mxu0 0.0
    %3603 = vmatpush1.msra.mxu0 0.0
    %3604 = vmatprep.subr.mxu0 0.0
    %3605 = vmatpush1.msra.mxu0 0.0
    %3606 = vmatprep.subr.mxu0 0.0
    %3607 = vmatpush1.msra.mxu0 0.0
    %3608 = vmatprep.subr.mxu0 0.0
    %3609 = vmatpush1.msra.mxu0 0.0
    %3610 = vmatprep.subr.mxu0 0.0
    %3611 = vmatpush1.msra.mxu0 0.0
    %3612 = vmatprep.subr.mxu0 0.0
    %3613 = vmatpush1.msra.mxu0 0.0
    %3614 = vmatprep.subr.mxu0 0.0
    %3615 = vmatpush1.msra.mxu0 0.0
    %3616 = vmatprep.subr.mxu0 0.0
    %3617 = vmatpush1.msra.mxu0 0.0
    %3618 = vmatprep.subr.mxu0 0.0
    %3619 = vmatpush1.msra.mxu0 0.0
    %3620 = vmatprep.subr.mxu0 0.0
    %3621 = vmatpush1.msra.mxu0 0.0
    %3622 = vmatprep.subr.mxu0 0.0
    %3623 = vmatpush1.msra.mxu0 0.0
    %3624 = vmatprep.subr.mxu0 0.0
    %3625 = vmatpush1.msra.mxu0 0.0
    %3626 = vmatprep.subr.mxu0 0.0
    %3627 = vmatpush1.msra.mxu0 0.0
    %3628 = vmatprep.subr.mxu0 0.0
    %3629 = vmatpush1.msra.mxu0 0.0
    %3630 = vmatprep.subr.mxu0 0.0
    %3631 = vmatpush1.msra.mxu0 0.0
    %3632 = vmatprep.subr.mxu0 0.0
    %3633 = vmatpush1.msra.mxu0 0.0
    %3634 = vmatprep.subr.mxu0 0.0
    %3635 = vmatpush1.msra.mxu0 0.0
    %3636 = vmatprep.mubr.f32.mxu0 0.0
    %3637 = vmatmul.mubr.f32.gmra.mrb[0].mxu0 %v3133
    %v3638 = vpop.f32.mrb[0].mxu0
    %v3639 = vadd.f32 %v526, %v3638
    %v3640 = vpop.f32.mrb[0].mxu0
    %3641 = vdwg.mxu0
    %v3642 = vmul.f32 %v3354, %v3639
    %v3643 = vadd.f32 %v3569, %v3642
    %v3644 = vtanh.pop %v3643
    %v3645 = vsub.f32 1.0, %v3501
    %v3646 = vmul.f32 %v3645, %v3644
    %v3647 = vmul.f32 %v3501, %v2988
    %v3648 = vadd.f32 %v3646, %v3647
    %v3651 = vunpack.c.l.s4 1966171168
    %v3652 = vunpack.c.0.s8 %v3651
    %v3653 = vlaneseq
    %v3654 = vshrl.u32 %v3653, 7
    %v3655 = vsub.s32 %v3652, %v3654
    %v3656 = vrot.slane %v3648, %v3655
    %v3657 = vcombine.high %v3656, %v3656
    %v3659 = vunpack.c.l.s4 1966171168
    %v3660 = vunpack.c.0.s8 %v3659
    %v3661 = vlaneseq
    %v3662 = vshrl.u32 %v3661, 7
    %v3663 = vsub.s32 %v3660, %v3662
    %v3664 = vrot.slane %v3656, %v3663
    %v3666 = vunpack.c.l.s4 1966171168
    %v3667 = vunpack.c.0.s8 %v3666
    %v3668 = vlaneseq
    %v3669 = vshrl.u32 %v3668, 7
    %v3670 = vsub.s32 %v3667, %v3669
    %v3671 = vrot.slane %v3657, %v3670
    %v3672 = vlaneseq
    %v3673 = vshrl.u32 %v3672, 7
    %v3674 = vsub.s32 0, %v3673
    %v3675 = vrot.slane %v3664, %v3674
    %v3676 = vlaneseq
    %v3677 = vshrl.u32 %v3676, 7
    %v3678 = vsub.s32 0, %v3677
    %v3679 = vrot.slane %v3671, %v3678
    %v3682 = vmul.f32 %v118, %v3675
    %v3683 = vmul.f32 %v119, %v3675
    %v3684 = vmul.f32 %v120, %v3679
    %v3685 = vmul.f32 %v121, %v3679
    %v3686 = vsel %vm136, %v3682, 0.0
    %3687 = vadd.xlane.f32.xlu0 %v3686
    %v3688 = vpop.xlane.xlu0 %3687
    %v3689 = vsel %vm2357, %v3683, 0.0
    %3690 = vadd.xlane.f32.xlu0 %v3689
    %v3691 = vpop.xlane.xlu0 %3690
    %v3692 = vsel %vm136, %v3684, 0.0
    %3693 = vadd.xlane.f32.xlu0 %v3692
    %v3694 = vpop.xlane.xlu0 %3693
    %v3695 = vsel %vm2357, %v3685, 0.0
    %3696 = vadd.xlane.f32.xlu0 %v3695
    %v3697 = vpop.xlane.xlu0 %3696
    %v3702 = vlaneseq
    %v3703 = vshrl.u32 %v3702, 7
    %v3704 = vsub.s32 %v132, %v3703
    %v3705 = vrot.slane %v3688, %v3704
    %v3706 = vlaneseq
    %v3707 = vshrl.u32 %v3706, 7
    %v3708 = vsub.s32 %v2375, %v3707
    %v3709 = vrot.slane %v3691, %v3708
    %v3710 = vsel %vm2380, %v3709, %v3705
    %v3711 = vlaneseq
    %v3712 = vshrl.u32 %v3711, 7
    %v3713 = vsub.s32 %v132, %v3712
    %v3714 = vrot.slane %v3694, %v3713
    %v3715 = vlaneseq
    %v3716 = vshrl.u32 %v3715, 7
    %v3717 = vsub.s32 %v2375, %v3716
    %v3718 = vrot.slane %v3697, %v3717
    %v3719 = vsel %vm2380, %v3718, %v3714
    %v3720 = vsel %vm2391, %v3719, %v3710
    %v3722 = vsel %vm133, %v3720, -1e+30
    %v3723 = vsel %vm2395, %v3722, -inf
    %3724 = vmax.xlane.f32.xlu0 %v3723
    %v3725 = vpop.xlane.xlu0 %3724
    %v3726 = vsub.f32 %v3722, %v3725
    %v3727 = vmul.f32 %v3726, 1.442695
    %v3728 = vpow.pop %v3727
    %v3729 = vsel %vm2395, %v3728, 0.0
    %3730 = vadd.xlane.f32.xlu0 %v3729
    %v3731 = vpop.xlane.xlu0 %3730
    %v3732 = vrcp.pop %v3731
    %v3733 = vmul.f32 %v3728, %v3732
    %v3734 = vsel %vm2407, %v3720, -1e+30
    %v3735 = vsel %vm2395, %v3734, -inf
    %3736 = vmax.xlane.f32.xlu0 %v3735
    %v3737 = vpop.xlane.xlu0 %3736
    %v3738 = vsub.f32 %v3734, %v3737
    %v3739 = vmul.f32 %v3738, 1.442695
    %v3740 = vpow.pop %v3739
    %v3741 = vsel %vm2395, %v3740, 0.0
    %3742 = vadd.xlane.f32.xlu0 %v3741
    %v3743 = vpop.xlane.xlu0 %3742
    %v3744 = vrcp.pop %v3743
    %v3745 = vmul.f32 %v3740, %v3744
    %v3746 = vadd.f32 %v3733, %v3745
    %v3747 = vlaneseq
    %v3748 = vshrl.u32 %v3747, 7
    %v3749 = vsub.s32 0, %v3748
    %v3750 = vrot.slane %v3746, %v3749
    %3752 = vbcast.lane.b32.xlu0 %v3750, 256
    %v3753 = vpop.permute.xlu0 %3752
    %s3755 = sor.u32 256, 8
    %3756 = vbcast.lane.b32.xlu0 %v3750, %s3755
    %v3757 = vpop.permute.xlu0 %3756
    %v3758 = vlaneseq
    %v3759 = vshrl.u32 %v3758, 7
    %v3760 = vsub.s32 1, %v3759
    %v3761 = vrot.slane %v3746, %v3760
    %3763 = vbcast.lane.b32.xlu0 %v3761, 256
    %v3764 = vpop.permute.xlu0 %3763
    %s3766 = sor.u32 256, 8
    %3767 = vbcast.lane.b32.xlu0 %v3761, %s3766
    %v3768 = vpop.permute.xlu0 %3767
    %v3769 = vmul.f32 %v122, %v3753
    %v3770 = vmul.f32 %v123, %v3757
    %v3771 = vmul.f32 %v124, %v3764
    %v3772 = vmul.f32 %v125, %v3768
    %v3773 = vsel %vm2447, %v3770, 0.0
    %v3774 = vadd.f32 %v3769, %v3773
    %v3775 = vrot.slane %v3774, 4
    %v3776 = vadd.f32 %v3774, %v3775
    %v3777 = vrot.slane %v3776, 2
    %v3778 = vadd.f32 %v3776, %v3777
    %v3779 = vrot.slane %v3778, 1
    %v3780 = vadd.f32 %v3778, %v3779
    %v3781 = vsel %vm2447, %v3772, 0.0
    %v3782 = vadd.f32 %v3771, %v3781
    %v3783 = vrot.slane %v3782, 4
    %v3784 = vadd.f32 %v3782, %v3783
    %v3785 = vrot.slane %v3784, 2
    %v3786 = vadd.f32 %v3784, %v3785
    %v3787 = vrot.slane %v3786, 1
    %v3788 = vadd.f32 %v3786, %v3787
    %v3791 = vsel %vm2391, %v3788, %v3780
    %v3793 = vsel %vm136, %v3648, 0
    %3795 = vmatprep.subr.mxu0 0.0
    %3796 = vmatpush1.msra.mxu0 %v126
    %3797 = vmatprep.subr.mxu0 0.0
    %3798 = vmatpush1.msra.mxu0 %v127
    %3799 = vmatprep.subr.mxu0 0.0
    %3800 = vmatpush1.msra.mxu0 %v128
    %3801 = vmatprep.subr.mxu0 0.0
    %3802 = vmatpush1.msra.mxu0 %v129
    %3803 = vmatprep.subr.mxu0 0.0
    %3804 = vmatpush1.msra.mxu0 0.0
    %3805 = vmatprep.subr.mxu0 0.0
    %3806 = vmatpush1.msra.mxu0 0.0
    %3807 = vmatprep.subr.mxu0 0.0
    %3808 = vmatpush1.msra.mxu0 0.0
    %3809 = vmatprep.subr.mxu0 0.0
    %3810 = vmatpush1.msra.mxu0 0.0
    %3811 = vmatprep.subr.mxu0 0.0
    %3812 = vmatpush1.msra.mxu0 0.0
    %3813 = vmatprep.subr.mxu0 0.0
    %3814 = vmatpush1.msra.mxu0 0.0
    %3815 = vmatprep.subr.mxu0 0.0
    %3816 = vmatpush1.msra.mxu0 0.0
    %3817 = vmatprep.subr.mxu0 0.0
    %3818 = vmatpush1.msra.mxu0 0.0
    %3819 = vmatprep.subr.mxu0 0.0
    %3820 = vmatpush1.msra.mxu0 0.0
    %3821 = vmatprep.subr.mxu0 0.0
    %3822 = vmatpush1.msra.mxu0 0.0
    %3823 = vmatprep.subr.mxu0 0.0
    %3824 = vmatpush1.msra.mxu0 0.0
    %3825 = vmatprep.subr.mxu0 0.0
    %3826 = vmatpush1.msra.mxu0 0.0
    %3827 = vmatprep.subr.mxu0 0.0
    %3828 = vmatpush1.msra.mxu0 0.0
    %3829 = vmatprep.subr.mxu0 0.0
    %3830 = vmatpush1.msra.mxu0 0.0
    %3831 = vmatprep.subr.mxu0 0.0
    %3832 = vmatpush1.msra.mxu0 0.0
    %3833 = vmatprep.subr.mxu0 0.0
    %3834 = vmatpush1.msra.mxu0 0.0
    %3835 = vmatprep.subr.mxu0 0.0
    %3836 = vmatpush1.msra.mxu0 0.0
    %3837 = vmatprep.subr.mxu0 0.0
    %3838 = vmatpush1.msra.mxu0 0.0
    %3839 = vmatprep.subr.mxu0 0.0
    %3840 = vmatpush1.msra.mxu0 0.0
    %3841 = vmatprep.subr.mxu0 0.0
    %3842 = vmatpush1.msra.mxu0 0.0
    %3843 = vmatprep.subr.mxu0 0.0
    %3844 = vmatpush1.msra.mxu0 0.0
    %3845 = vmatprep.subr.mxu0 0.0
    %3846 = vmatpush1.msra.mxu0 0.0
    %3847 = vmatprep.subr.mxu0 0.0
    %3848 = vmatpush1.msra.mxu0 0.0
    %3849 = vmatprep.subr.mxu0 0.0
    %3850 = vmatpush1.msra.mxu0 0.0
    %3851 = vmatprep.subr.mxu0 0.0
    %3852 = vmatpush1.msra.mxu0 0.0
    %3853 = vmatprep.subr.mxu0 0.0
    %3854 = vmatpush1.msra.mxu0 0.0
    %3855 = vmatprep.subr.mxu0 0.0
    %3856 = vmatpush1.msra.mxu0 0.0
    %3857 = vmatprep.subr.mxu0 0.0
    %3858 = vmatpush1.msra.mxu0 0.0
    %3859 = vmatprep.mubr.f32.mxu0 0.0
    %3860 = vmatmul.mubr.f32.gmra.mrb[0].mxu0 %v3793
    %v3861 = vpop.f32.mrb[0].mxu0
    %v3862 = vadd.f32 %v3791, %v3861
    %v3863 = vpop.f32.mrb[0].mxu0
    %3864 = vdwg.mxu0
    %v3865 = vadd.f32 %v3862, %v2544
    %s3866 = scalar_lea.vmem [#allocation2], 4
    %3867 = vst [vmem:[%s3866] sm:$0x3] %v3865
    %3868 = vmatprep.subr.mxu0 0.0
    %3869 = vmatpush1.msra.mxu0 %v102
    %3870 = vmatprep.subr.mxu0 0.0
    %3871 = vmatpush1.msra.mxu0 %v103
    %3872 = vmatprep.subr.mxu0 0.0
    %3873 = vmatpush1.msra.mxu0 %v104
    %3874 = vmatprep.subr.mxu0 0.0
    %3875 = vmatpush1.msra.mxu0 %v105
    %3876 = vmatprep.subr.mxu0 0.0
    %3877 = vmatpush1.msra.mxu0 0.0
    %3878 = vmatprep.subr.mxu0 0.0
    %3879 = vmatpush1.msra.mxu0 0.0
    %3880 = vmatprep.subr.mxu0 0.0
    %3881 = vmatpush1.msra.mxu0 0.0
    %3882 = vmatprep.subr.mxu0 0.0
    %3883 = vmatpush1.msra.mxu0 0.0
    %3884 = vmatprep.subr.mxu0 0.0
    %3885 = vmatpush1.msra.mxu0 0.0
    %3886 = vmatprep.subr.mxu0 0.0
    %3887 = vmatpush1.msra.mxu0 0.0
    %3888 = vmatprep.subr.mxu0 0.0
    %3889 = vmatpush1.msra.mxu0 0.0
    %3890 = vmatprep.subr.mxu0 0.0
    %3891 = vmatpush1.msra.mxu0 0.0
    %3892 = vmatprep.subr.mxu0 0.0
    %3893 = vmatpush1.msra.mxu0 0.0
    %3894 = vmatprep.subr.mxu0 0.0
    %3895 = vmatpush1.msra.mxu0 0.0
    %3896 = vmatprep.subr.mxu0 0.0
    %3897 = vmatpush1.msra.mxu0 0.0
    %3898 = vmatprep.subr.mxu0 0.0
    %3899 = vmatpush1.msra.mxu0 0.0
    %3900 = vmatprep.subr.mxu0 0.0
    %3901 = vmatpush1.msra.mxu0 0.0
    %3902 = vmatprep.subr.mxu0 0.0
    %3903 = vmatpush1.msra.mxu0 0.0
    %3904 = vmatprep.subr.mxu0 0.0
    %3905 = vmatpush1.msra.mxu0 0.0
    %3906 = vmatprep.subr.mxu0 0.0
    %3907 = vmatpush1.msra.mxu0 0.0
    %3908 = vmatprep.subr.mxu0 0.0
    %3909 = vmatpush1.msra.mxu0 0.0
    %3910 = vmatprep.subr.mxu0 0.0
    %3911 = vmatpush1.msra.mxu0 0.0
    %3912 = vmatprep.subr.mxu0 0.0
    %3913 = vmatpush1.msra.mxu0 0.0
    %3914 = vmatprep.subr.mxu0 0.0
    %3915 = vmatpush1.msra.mxu0 0.0
    %3916 = vmatprep.subr.mxu0 0.0
    %3917 = vmatpush1.msra.mxu0 0.0
    %3918 = vmatprep.subr.mxu0 0.0
    %3919 = vmatpush1.msra.mxu0 0.0
    %3920 = vmatprep.subr.mxu0 0.0
    %3921 = vmatpush1.msra.mxu0 0.0
    %3922 = vmatprep.subr.mxu0 0.0
    %3923 = vmatpush1.msra.mxu0 0.0
    %3924 = vmatprep.subr.mxu0 0.0
    %3925 = vmatpush1.msra.mxu0 0.0
    %3926 = vmatprep.subr.mxu0 0.0
    %3927 = vmatpush1.msra.mxu0 0.0
    %3928 = vmatprep.subr.mxu0 0.0
    %3929 = vmatpush1.msra.mxu0 0.0
    %3930 = vmatprep.subr.mxu0 0.0
    %3931 = vmatpush1.msra.mxu0 0.0
    %3932 = vmatprep.mubr.f32.mxu0 0.0
    %3933 = vmatmul.mubr.f32.gmra.mrb[0].mxu0 %v3793
    %v3934 = vpop.f32.mrb[0].mxu0
    %v3935 = vadd.f32 0.0, %v3934
    %v3936 = vpop.f32.mrb[0].mxu0
    %3937 = vdwg.mxu0
    %3938 = vmatprep.subr.mxu0 0.0
    %3939 = vmatpush1.msra.mxu0 %v54
    %3940 = vmatprep.subr.mxu0 0.0
    %3941 = vmatpush1.msra.mxu0 %v55
    %3942 = vmatprep.subr.mxu0 0.0
    %3943 = vmatpush1.msra.mxu0 %v56
    %3944 = vmatprep.subr.mxu0 0.0
    %3945 = vmatpush1.msra.mxu0 %v57
    %3946 = vmatprep.subr.mxu0 0.0
    %3947 = vmatpush1.msra.mxu0 %v58
    %3948 = vmatprep.subr.mxu0 0.0
    %3949 = vmatpush1.msra.mxu0 %v59
    %3950 = vmatprep.subr.mxu0 0.0
    %3951 = vmatpush1.msra.mxu0 %v60
    %3952 = vmatprep.subr.mxu0 0.0
    %3953 = vmatpush1.msra.mxu0 %v61
    %3954 = vmatprep.subr.mxu0 0.0
    %3955 = vmatpush1.msra.mxu0 %v62
    %3956 = vmatprep.subr.mxu0 0.0
    %3957 = vmatpush1.msra.mxu0 %v63
    %3958 = vmatprep.subr.mxu0 0.0
    %3959 = vmatpush1.msra.mxu0 %v64
    %3960 = vmatprep.subr.mxu0 0.0
    %3961 = vmatpush1.msra.mxu0 %v65
    %3962 = vmatprep.subr.mxu0 0.0
    %3963 = vmatpush1.msra.mxu0 %v66
    %3964 = vmatprep.subr.mxu0 0.0
    %3965 = vmatpush1.msra.mxu0 %v67
    %3966 = vmatprep.subr.mxu0 0.0
    %3967 = vmatpush1.msra.mxu0 %v68
    %3968 = vmatprep.subr.mxu0 0.0
    %3969 = vmatpush1.msra.mxu0 %v69
    %3970 = vmatprep.subr.mxu0 0.0
    %3971 = vmatpush1.msra.mxu0 0.0
    %3972 = vmatprep.subr.mxu0 0.0
    %3973 = vmatpush1.msra.mxu0 0.0
    %3974 = vmatprep.subr.mxu0 0.0
    %3975 = vmatpush1.msra.mxu0 0.0
    %3976 = vmatprep.subr.mxu0 0.0
    %3977 = vmatpush1.msra.mxu0 0.0
    %3978 = vmatprep.subr.mxu0 0.0
    %3979 = vmatpush1.msra.mxu0 0.0
    %3980 = vmatprep.subr.mxu0 0.0
    %3981 = vmatpush1.msra.mxu0 0.0
    %3982 = vmatprep.subr.mxu0 0.0
    %3983 = vmatpush1.msra.mxu0 0.0
    %3984 = vmatprep.subr.mxu0 0.0
    %3985 = vmatpush1.msra.mxu0 0.0
    %3986 = vmatprep.subr.mxu0 0.0
    %3987 = vmatpush1.msra.mxu0 0.0
    %3988 = vmatprep.subr.mxu0 0.0
    %3989 = vmatpush1.msra.mxu0 0.0
    %3990 = vmatprep.subr.mxu0 0.0
    %3991 = vmatpush1.msra.mxu0 0.0
    %3992 = vmatprep.subr.mxu0 0.0
    %3993 = vmatpush1.msra.mxu0 0.0
    %3994 = vmatprep.subr.mxu0 0.0
    %3995 = vmatpush1.msra.mxu0 0.0
    %3996 = vmatprep.subr.mxu0 0.0
    %3997 = vmatpush1.msra.mxu0 0.0
    %3998 = vmatprep.subr.mxu0 0.0
    %3999 = vmatpush1.msra.mxu0 0.0
    %4000 = vmatprep.subr.mxu0 0.0
    %4001 = vmatpush1.msra.mxu0 0.0
    %4002 = vmatprep.mubr.f32.mxu0 0.0
    %4003 = vmatmul.mubr.f32.gmra.mrb[0].mxu0 %v3865
    %v4004 = vpop.f32.mrb[0].mxu0
    %v4005 = vadd.f32 %v3935, %v4004
    %v4006 = vpop.f32.mrb[0].mxu0
    %4007 = vdwg.mxu0
    %v4008 = vadd.f32 %v4005, %v284
    %v4009 = vxor.u32 %v4008, 2147483648
    %v4010 = vmul.f32 %v4009, 1.442695
    %v4011 = vpow.pop %v4010
    %v4012 = vadd.f32 %v4011, 1.0
    %v4013 = vrcp.pop %v4012
    %v4014 = vmul.f32 1.0, %v4013
    %4015 = vmatprep.subr.mxu0 0.0
    %4016 = vmatpush1.msra.mxu0 %v106
    %4017 = vmatprep.subr.mxu0 0.0
    %4018 = vmatpush1.msra.mxu0 %v107
    %4019 = vmatprep.subr.mxu0 0.0
    %4020 = vmatpush1.msra.mxu0 %v108
    %4021 = vmatprep.subr.mxu0 0.0
    %4022 = vmatpush1.msra.mxu0 %v109
    %4023 = vmatprep.subr.mxu0 0.0
    %4024 = vmatpush1.msra.mxu0 0.0
    %4025 = vmatprep.subr.mxu0 0.0
    %4026 = vmatpush1.msra.mxu0 0.0
    %4027 = vmatprep.subr.mxu0 0.0
    %4028 = vmatpush1.msra.mxu0 0.0
    %4029 = vmatprep.subr.mxu0 0.0
    %4030 = vmatpush1.msra.mxu0 0.0
    %4031 = vmatprep.subr.mxu0 0.0
    %4032 = vmatpush1.msra.mxu0 0.0
    %4033 = vmatprep.subr.mxu0 0.0
    %4034 = vmatpush1.msra.mxu0 0.0
    %4035 = vmatprep.subr.mxu0 0.0
    %4036 = vmatpush1.msra.mxu0 0.0
    %4037 = vmatprep.subr.mxu0 0.0
    %4038 = vmatpush1.msra.mxu0 0.0
    %4039 = vmatprep.subr.mxu0 0.0
    %4040 = vmatpush1.msra.mxu0 0.0
    %4041 = vmatprep.subr.mxu0 0.0
    %4042 = vmatpush1.msra.mxu0 0.0
    %4043 = vmatprep.subr.mxu0 0.0
    %4044 = vmatpush1.msra.mxu0 0.0
    %4045 = vmatprep.subr.mxu0 0.0
    %4046 = vmatpush1.msra.mxu0 0.0
    %4047 = vmatprep.subr.mxu0 0.0
    %4048 = vmatpush1.msra.mxu0 0.0
    %4049 = vmatprep.subr.mxu0 0.0
    %4050 = vmatpush1.msra.mxu0 0.0
    %4051 = vmatprep.subr.mxu0 0.0
    %4052 = vmatpush1.msra.mxu0 0.0
    %4053 = vmatprep.subr.mxu0 0.0
    %4054 = vmatpush1.msra.mxu0 0.0
    %4055 = vmatprep.subr.mxu0 0.0
    %4056 = vmatpush1.msra.mxu0 0.0
    %4057 = vmatprep.subr.mxu0 0.0
    %4058 = vmatpush1.msra.mxu0 0.0
    %4059 = vmatprep.subr.mxu0 0.0
    %4060 = vmatpush1.msra.mxu0 0.0
    %4061 = vmatprep.subr.mxu0 0.0
    %4062 = vmatpush1.msra.mxu0 0.0
    %4063 = vmatprep.subr.mxu0 0.0
    %4064 = vmatpush1.msra.mxu0 0.0
    %4065 = vmatprep.subr.mxu0 0.0
    %4066 = vmatpush1.msra.mxu0 0.0
    %4067 = vmatprep.subr.mxu0 0.0
    %4068 = vmatpush1.msra.mxu0 0.0
    %4069 = vmatprep.subr.mxu0 0.0
    %4070 = vmatpush1.msra.mxu0 0.0
    %4071 = vmatprep.subr.mxu0 0.0
    %4072 = vmatpush1.msra.mxu0 0.0
    %4073 = vmatprep.subr.mxu0 0.0
    %4074 = vmatpush1.msra.mxu0 0.0
    %4075 = vmatprep.subr.mxu0 0.0
    %4076 = vmatpush1.msra.mxu0 0.0
    %4077 = vmatprep.subr.mxu0 0.0
    %4078 = vmatpush1.msra.mxu0 0.0
    %4079 = vmatprep.mubr.f32.mxu0 0.0
    %4080 = vmatmul.mubr.f32.gmra.mrb[0].mxu0 %v3793
    %v4081 = vpop.f32.mrb[0].mxu0
    %v4082 = vadd.f32 0.0, %v4081
    %v4083 = vpop.f32.mrb[0].mxu0
    %4084 = vdwg.mxu0
    %4085 = vmatprep.subr.mxu0 0.0
    %4086 = vmatpush1.msra.mxu0 %v70
    %4087 = vmatprep.subr.mxu0 0.0
    %4088 = vmatpush1.msra.mxu0 %v71
    %4089 = vmatprep.subr.mxu0 0.0
    %4090 = vmatpush1.msra.mxu0 %v72
    %4091 = vmatprep.subr.mxu0 0.0
    %4092 = vmatpush1.msra.mxu0 %v73
    %4093 = vmatprep.subr.mxu0 0.0
    %4094 = vmatpush1.msra.mxu0 %v74
    %4095 = vmatprep.subr.mxu0 0.0
    %4096 = vmatpush1.msra.mxu0 %v75
    %4097 = vmatprep.subr.mxu0 0.0
    %4098 = vmatpush1.msra.mxu0 %v76
    %4099 = vmatprep.subr.mxu0 0.0
    %4100 = vmatpush1.msra.mxu0 %v77
    %4101 = vmatprep.subr.mxu0 0.0
    %4102 = vmatpush1.msra.mxu0 %v78
    %4103 = vmatprep.subr.mxu0 0.0
    %4104 = vmatpush1.msra.mxu0 %v79
    %4105 = vmatprep.subr.mxu0 0.0
    %4106 = vmatpush1.msra.mxu0 %v80
    %4107 = vmatprep.subr.mxu0 0.0
    %4108 = vmatpush1.msra.mxu0 %v81
    %4109 = vmatprep.subr.mxu0 0.0
    %4110 = vmatpush1.msra.mxu0 %v82
    %4111 = vmatprep.subr.mxu0 0.0
    %4112 = vmatpush1.msra.mxu0 %v83
    %4113 = vmatprep.subr.mxu0 0.0
    %4114 = vmatpush1.msra.mxu0 %v84
    %4115 = vmatprep.subr.mxu0 0.0
    %4116 = vmatpush1.msra.mxu0 %v85
    %4117 = vmatprep.subr.mxu0 0.0
    %4118 = vmatpush1.msra.mxu0 0.0
    %4119 = vmatprep.subr.mxu0 0.0
    %4120 = vmatpush1.msra.mxu0 0.0
    %4121 = vmatprep.subr.mxu0 0.0
    %4122 = vmatpush1.msra.mxu0 0.0
    %4123 = vmatprep.subr.mxu0 0.0
    %4124 = vmatpush1.msra.mxu0 0.0
    %4125 = vmatprep.subr.mxu0 0.0
    %4126 = vmatpush1.msra.mxu0 0.0
    %4127 = vmatprep.subr.mxu0 0.0
    %4128 = vmatpush1.msra.mxu0 0.0
    %4129 = vmatprep.subr.mxu0 0.0
    %4130 = vmatpush1.msra.mxu0 0.0
    %4131 = vmatprep.subr.mxu0 0.0
    %4132 = vmatpush1.msra.mxu0 0.0
    %4133 = vmatprep.subr.mxu0 0.0
    %4134 = vmatpush1.msra.mxu0 0.0
    %4135 = vmatprep.subr.mxu0 0.0
    %4136 = vmatpush1.msra.mxu0 0.0
    %4137 = vmatprep.subr.mxu0 0.0
    %4138 = vmatpush1.msra.mxu0 0.0
    %4139 = vmatprep.subr.mxu0 0.0
    %4140 = vmatpush1.msra.mxu0 0.0
    %4141 = vmatprep.subr.mxu0 0.0
    %4142 = vmatpush1.msra.mxu0 0.0
    %4143 = vmatprep.subr.mxu0 0.0
    %4144 = vmatpush1.msra.mxu0 0.0
    %4145 = vmatprep.subr.mxu0 0.0
    %4146 = vmatpush1.msra.mxu0 0.0
    %4147 = vmatprep.subr.mxu0 0.0
    %4148 = vmatpush1.msra.mxu0 0.0
    %4149 = vmatprep.mubr.f32.mxu0 0.0
    %4150 = vmatmul.mubr.f32.gmra.mrb[0].mxu0 %v3865
    %v4151 = vpop.f32.mrb[0].mxu0
    %v4152 = vadd.f32 %v4082, %v4151
    %v4153 = vpop.f32.mrb[0].mxu0
    %4154 = vdwg.mxu0
    %v4155 = vadd.f32 %v4152, %v437
    %v4156 = vxor.u32 %v4155, 2147483648
    %v4157 = vmul.f32 %v4156, 1.442695
    %v4158 = vpow.pop %v4157
    %v4159 = vadd.f32 %v4158, 1.0
    %v4160 = vrcp.pop %v4159
    %v4161 = vmul.f32 1.0, %v4160
    %4162 = vmatprep.subr.mxu0 0.0
    %4163 = vmatpush1.msra.mxu0 %v86
    %4164 = vmatprep.subr.mxu0 0.0
    %4165 = vmatpush1.msra.mxu0 %v87
    %4166 = vmatprep.subr.mxu0 0.0
    %4167 = vmatpush1.msra.mxu0 %v88
    %4168 = vmatprep.subr.mxu0 0.0
    %4169 = vmatpush1.msra.mxu0 %v89
    %4170 = vmatprep.subr.mxu0 0.0
    %4171 = vmatpush1.msra.mxu0 %v90
    %4172 = vmatprep.subr.mxu0 0.0
    %4173 = vmatpush1.msra.mxu0 %v91
    %4174 = vmatprep.subr.mxu0 0.0
    %4175 = vmatpush1.msra.mxu0 %v92
    %4176 = vmatprep.subr.mxu0 0.0
    %4177 = vmatpush1.msra.mxu0 %v93
    %4178 = vmatprep.subr.mxu0 0.0
    %4179 = vmatpush1.msra.mxu0 %v94
    %4180 = vmatprep.subr.mxu0 0.0
    %4181 = vmatpush1.msra.mxu0 %v95
    %4182 = vmatprep.subr.mxu0 0.0
    %4183 = vmatpush1.msra.mxu0 %v96
    %4184 = vmatprep.subr.mxu0 0.0
    %4185 = vmatpush1.msra.mxu0 %v97
    %4186 = vmatprep.subr.mxu0 0.0
    %4187 = vmatpush1.msra.mxu0 %v98
    %4188 = vmatprep.subr.mxu0 0.0
    %4189 = vmatpush1.msra.mxu0 %v99
    %4190 = vmatprep.subr.mxu0 0.0
    %4191 = vmatpush1.msra.mxu0 %v100
    %4192 = vmatprep.subr.mxu0 0.0
    %4193 = vmatpush1.msra.mxu0 %v101
    %4194 = vmatprep.subr.mxu0 0.0
    %4195 = vmatpush1.msra.mxu0 0.0
    %4196 = vmatprep.subr.mxu0 0.0
    %4197 = vmatpush1.msra.mxu0 0.0
    %4198 = vmatprep.subr.mxu0 0.0
    %4199 = vmatpush1.msra.mxu0 0.0
    %4200 = vmatprep.subr.mxu0 0.0
    %4201 = vmatpush1.msra.mxu0 0.0
    %4202 = vmatprep.subr.mxu0 0.0
    %4203 = vmatpush1.msra.mxu0 0.0
    %4204 = vmatprep.subr.mxu0 0.0
    %4205 = vmatpush1.msra.mxu0 0.0
    %4206 = vmatprep.subr.mxu0 0.0
    %4207 = vmatpush1.msra.mxu0 0.0
    %4208 = vmatprep.subr.mxu0 0.0
    %4209 = vmatpush1.msra.mxu0 0.0
    %4210 = vmatprep.subr.mxu0 0.0
    %4211 = vmatpush1.msra.mxu0 0.0
    %4212 = vmatprep.subr.mxu0 0.0
    %4213 = vmatpush1.msra.mxu0 0.0
    %4214 = vmatprep.subr.mxu0 0.0
    %4215 = vmatpush1.msra.mxu0 0.0
    %4216 = vmatprep.subr.mxu0 0.0
    %4217 = vmatpush1.msra.mxu0 0.0
    %4218 = vmatprep.subr.mxu0 0.0
    %4219 = vmatpush1.msra.mxu0 0.0
    %4220 = vmatprep.subr.mxu0 0.0
    %4221 = vmatpush1.msra.mxu0 0.0
    %4222 = vmatprep.subr.mxu0 0.0
    %4223 = vmatpush1.msra.mxu0 0.0
    %4224 = vmatprep.subr.mxu0 0.0
    %4225 = vmatpush1.msra.mxu0 0.0
    %4226 = vmatprep.mubr.f32.mxu0 0.0
    %4227 = vmatmul.mubr.f32.gmra.mrb[0].mxu0 %v3865
    %v4228 = vpop.f32.mrb[0].mxu0
    %v4229 = vadd.f32 %v450, %v4228
    %v4230 = vpop.f32.mrb[0].mxu0
    %4231 = vdwg.mxu0
    %4232 = vmatprep.subr.mxu0 0.0
    %4233 = vmatpush1.msra.mxu0 %v110
    %4234 = vmatprep.subr.mxu0 0.0
    %4235 = vmatpush1.msra.mxu0 %v111
    %4236 = vmatprep.subr.mxu0 0.0
    %4237 = vmatpush1.msra.mxu0 %v112
    %4238 = vmatprep.subr.mxu0 0.0
    %4239 = vmatpush1.msra.mxu0 %v113
    %4240 = vmatprep.subr.mxu0 0.0
    %4241 = vmatpush1.msra.mxu0 0.0
    %4242 = vmatprep.subr.mxu0 0.0
    %4243 = vmatpush1.msra.mxu0 0.0
    %4244 = vmatprep.subr.mxu0 0.0
    %4245 = vmatpush1.msra.mxu0 0.0
    %4246 = vmatprep.subr.mxu0 0.0
    %4247 = vmatpush1.msra.mxu0 0.0
    %4248 = vmatprep.subr.mxu0 0.0
    %4249 = vmatpush1.msra.mxu0 0.0
    %4250 = vmatprep.subr.mxu0 0.0
    %4251 = vmatpush1.msra.mxu0 0.0
    %4252 = vmatprep.subr.mxu0 0.0
    %4253 = vmatpush1.msra.mxu0 0.0
    %4254 = vmatprep.subr.mxu0 0.0
    %4255 = vmatpush1.msra.mxu0 0.0
    %4256 = vmatprep.subr.mxu0 0.0
    %4257 = vmatpush1.msra.mxu0 0.0
    %4258 = vmatprep.subr.mxu0 0.0
    %4259 = vmatpush1.msra.mxu0 0.0
    %4260 = vmatprep.subr.mxu0 0.0
    %4261 = vmatpush1.msra.mxu0 0.0
    %4262 = vmatprep.subr.mxu0 0.0
    %4263 = vmatpush1.msra.mxu0 0.0
    %4264 = vmatprep.subr.mxu0 0.0
    %4265 = vmatpush1.msra.mxu0 0.0
    %4266 = vmatprep.subr.mxu0 0.0
    %4267 = vmatpush1.msra.mxu0 0.0
    %4268 = vmatprep.subr.mxu0 0.0
    %4269 = vmatpush1.msra.mxu0 0.0
    %4270 = vmatprep.subr.mxu0 0.0
    %4271 = vmatpush1.msra.mxu0 0.0
    %4272 = vmatprep.subr.mxu0 0.0
    %4273 = vmatpush1.msra.mxu0 0.0
    %4274 = vmatprep.subr.mxu0 0.0
    %4275 = vmatpush1.msra.mxu0 0.0
    %4276 = vmatprep.subr.mxu0 0.0
    %4277 = vmatpush1.msra.mxu0 0.0
    %4278 = vmatprep.subr.mxu0 0.0
    %4279 = vmatpush1.msra.mxu0 0.0
    %4280 = vmatprep.subr.mxu0 0.0
    %4281 = vmatpush1.msra.mxu0 0.0
    %4282 = vmatprep.subr.mxu0 0.0
    %4283 = vmatpush1.msra.mxu0 0.0
    %4284 = vmatprep.subr.mxu0 0.0
    %4285 = vmatpush1.msra.mxu0 0.0
    %4286 = vmatprep.subr.mxu0 0.0
    %4287 = vmatpush1.msra.mxu0 0.0
    %4288 = vmatprep.subr.mxu0 0.0
    %4289 = vmatpush1.msra.mxu0 0.0
    %4290 = vmatprep.subr.mxu0 0.0
    %4291 = vmatpush1.msra.mxu0 0.0
    %4292 = vmatprep.subr.mxu0 0.0
    %4293 = vmatpush1.msra.mxu0 0.0
    %4294 = vmatprep.subr.mxu0 0.0
    %4295 = vmatpush1.msra.mxu0 0.0
    %4296 = vmatprep.mubr.f32.mxu0 0.0
    %4297 = vmatmul.mubr.f32.gmra.mrb[0].mxu0 %v3793
    %v4298 = vpop.f32.mrb[0].mxu0
    %v4299 = vadd.f32 %v526, %v4298
    %v4300 = vpop.f32.mrb[0].mxu0
    %4301 = vdwg.mxu0
    %v4302 = vmul.f32 %v4014, %v4299
    %v4303 = vadd.f32 %v4229, %v4302
    %v4304 = vtanh.pop %v4303
    %v4305 = vsub.f32 1.0, %v4161
    %v4306 = vmul.f32 %v4305, %v4304
    %v4307 = vmul.f32 %v4161, %v3648
    %v4308 = vadd.f32 %v4306, %v4307
    %v4311 = vunpack.c.l.s4 1966171168
    %v4312 = vunpack.c.0.s8 %v4311
    %v4313 = vlaneseq
    %v4314 = vshrl.u32 %v4313, 7
    %v4315 = vsub.s32 %v4312, %v4314
    %v4316 = vrot.slane %v4308, %v4315
    %v4317 = vcombine.high %v4316, %v4316
    %v4319 = vunpack.c.l.s4 1966171168
    %v4320 = vunpack.c.0.s8 %v4319
    %v4321 = vlaneseq
    %v4322 = vshrl.u32 %v4321, 7
    %v4323 = vsub.s32 %v4320, %v4322
    %v4324 = vrot.slane %v4316, %v4323
    %v4326 = vunpack.c.l.s4 1966171168
    %v4327 = vunpack.c.0.s8 %v4326
    %v4328 = vlaneseq
    %v4329 = vshrl.u32 %v4328, 7
    %v4330 = vsub.s32 %v4327, %v4329
    %v4331 = vrot.slane %v4317, %v4330
    %v4332 = vlaneseq
    %v4333 = vshrl.u32 %v4332, 7
    %v4334 = vsub.s32 0, %v4333
    %v4335 = vrot.slane %v4324, %v4334
    %v4336 = vlaneseq
    %v4337 = vshrl.u32 %v4336, 7
    %v4338 = vsub.s32 0, %v4337
    %v4339 = vrot.slane %v4331, %v4338
    %v4342 = vmul.f32 %v118, %v4335
    %v4343 = vmul.f32 %v119, %v4335
    %v4344 = vmul.f32 %v120, %v4339
    %v4345 = vmul.f32 %v121, %v4339
    %v4346 = vsel %vm136, %v4342, 0.0
    %4347 = vadd.xlane.f32.xlu0 %v4346
    %v4348 = vpop.xlane.xlu0 %4347
    %v4349 = vsel %vm2357, %v4343, 0.0
    %4350 = vadd.xlane.f32.xlu0 %v4349
    %v4351 = vpop.xlane.xlu0 %4350
    %v4352 = vsel %vm136, %v4344, 0.0
    %4353 = vadd.xlane.f32.xlu0 %v4352
    %v4354 = vpop.xlane.xlu0 %4353
    %v4355 = vsel %vm2357, %v4345, 0.0
    %4356 = vadd.xlane.f32.xlu0 %v4355
    %v4357 = vpop.xlane.xlu0 %4356
    %v4362 = vlaneseq
    %v4363 = vshrl.u32 %v4362, 7
    %v4364 = vsub.s32 %v132, %v4363
    %v4365 = vrot.slane %v4348, %v4364
    %v4366 = vlaneseq
    %v4367 = vshrl.u32 %v4366, 7
    %v4368 = vsub.s32 %v2375, %v4367
    %v4369 = vrot.slane %v4351, %v4368
    %v4370 = vsel %vm2380, %v4369, %v4365
    %v4371 = vlaneseq
    %v4372 = vshrl.u32 %v4371, 7
    %v4373 = vsub.s32 %v132, %v4372
    %v4374 = vrot.slane %v4354, %v4373
    %v4375 = vlaneseq
    %v4376 = vshrl.u32 %v4375, 7
    %v4377 = vsub.s32 %v2375, %v4376
    %v4378 = vrot.slane %v4357, %v4377
    %v4379 = vsel %vm2380, %v4378, %v4374
    %v4380 = vsel %vm2391, %v4379, %v4370
    %v4382 = vsel %vm133, %v4380, -1e+30
    %v4383 = vsel %vm2395, %v4382, -inf
    %4384 = vmax.xlane.f32.xlu0 %v4383
    %v4385 = vpop.xlane.xlu0 %4384
    %v4386 = vsub.f32 %v4382, %v4385
    %v4387 = vmul.f32 %v4386, 1.442695
    %v4388 = vpow.pop %v4387
    %v4389 = vsel %vm2395, %v4388, 0.0
    %4390 = vadd.xlane.f32.xlu0 %v4389
    %v4391 = vpop.xlane.xlu0 %4390
    %v4392 = vrcp.pop %v4391
    %v4393 = vmul.f32 %v4388, %v4392
    %v4394 = vsel %vm2407, %v4380, -1e+30
    %v4395 = vsel %vm2395, %v4394, -inf
    %4396 = vmax.xlane.f32.xlu0 %v4395
    %v4397 = vpop.xlane.xlu0 %4396
    %v4398 = vsub.f32 %v4394, %v4397
    %v4399 = vmul.f32 %v4398, 1.442695
    %v4400 = vpow.pop %v4399
    %v4401 = vsel %vm2395, %v4400, 0.0
    %4402 = vadd.xlane.f32.xlu0 %v4401
    %v4403 = vpop.xlane.xlu0 %4402
    %v4404 = vrcp.pop %v4403
    %v4405 = vmul.f32 %v4400, %v4404
    %v4406 = vadd.f32 %v4393, %v4405
    %v4407 = vlaneseq
    %v4408 = vshrl.u32 %v4407, 7
    %v4409 = vsub.s32 0, %v4408
    %v4410 = vrot.slane %v4406, %v4409
    %4412 = vbcast.lane.b32.xlu0 %v4410, 256
    %v4413 = vpop.permute.xlu0 %4412
    %s4415 = sor.u32 256, 8
    %4416 = vbcast.lane.b32.xlu0 %v4410, %s4415
    %v4417 = vpop.permute.xlu0 %4416
    %v4418 = vlaneseq
    %v4419 = vshrl.u32 %v4418, 7
    %v4420 = vsub.s32 1, %v4419
    %v4421 = vrot.slane %v4406, %v4420
    %4423 = vbcast.lane.b32.xlu0 %v4421, 256
    %v4424 = vpop.permute.xlu0 %4423
    %s4426 = sor.u32 256, 8
    %4427 = vbcast.lane.b32.xlu0 %v4421, %s4426
    %v4428 = vpop.permute.xlu0 %4427
    %v4429 = vmul.f32 %v122, %v4413
    %v4430 = vmul.f32 %v123, %v4417
    %v4431 = vmul.f32 %v124, %v4424
    %v4432 = vmul.f32 %v125, %v4428
    %v4433 = vsel %vm2447, %v4430, 0.0
    %v4434 = vadd.f32 %v4429, %v4433
    %v4435 = vrot.slane %v4434, 4
    %v4436 = vadd.f32 %v4434, %v4435
    %v4437 = vrot.slane %v4436, 2
    %v4438 = vadd.f32 %v4436, %v4437
    %v4439 = vrot.slane %v4438, 1
    %v4440 = vadd.f32 %v4438, %v4439
    %v4441 = vsel %vm2447, %v4432, 0.0
    %v4442 = vadd.f32 %v4431, %v4441
    %v4443 = vrot.slane %v4442, 4
    %v4444 = vadd.f32 %v4442, %v4443
    %v4445 = vrot.slane %v4444, 2
    %v4446 = vadd.f32 %v4444, %v4445
    %v4447 = vrot.slane %v4446, 1
    %v4448 = vadd.f32 %v4446, %v4447
    %v4451 = vsel %vm2391, %v4448, %v4440
    %v4453 = vsel %vm136, %v4308, 0
    %4455 = vmatprep.subr.mxu0 0.0
    %4456 = vmatpush1.msra.mxu0 %v126
    %4457 = vmatprep.subr.mxu0 0.0
    %4458 = vmatpush1.msra.mxu0 %v127
    %4459 = vmatprep.subr.mxu0 0.0
    %4460 = vmatpush1.msra.mxu0 %v128
    %4461 = vmatprep.subr.mxu0 0.0
    %4462 = vmatpush1.msra.mxu0 %v129
    %4463 = vmatprep.subr.mxu0 0.0
    %4464 = vmatpush1.msra.mxu0 0.0
    %4465 = vmatprep.subr.mxu0 0.0
    %4466 = vmatpush1.msra.mxu0 0.0
    %4467 = vmatprep.subr.mxu0 0.0
    %4468 = vmatpush1.msra.mxu0 0.0
    %4469 = vmatprep.subr.mxu0 0.0
    %4470 = vmatpush1.msra.mxu0 0.0
    %4471 = vmatprep.subr.mxu0 0.0
    %4472 = vmatpush1.msra.mxu0 0.0
    %4473 = vmatprep.subr.mxu0 0.0
    %4474 = vmatpush1.msra.mxu0 0.0
    %4475 = vmatprep.subr.mxu0 0.0
    %4476 = vmatpush1.msra.mxu0 0.0
    %4477 = vmatprep.subr.mxu0 0.0
    %4478 = vmatpush1.msra.mxu0 0.0
    %4479 = vmatprep.subr.mxu0 0.0
    %4480 = vmatpush1.msra.mxu0 0.0
    %4481 = vmatprep.subr.mxu0 0.0
    %4482 = vmatpush1.msra.mxu0 0.0
    %4483 = vmatprep.subr.mxu0 0.0
    %4484 = vmatpush1.msra.mxu0 0.0
    %4485 = vmatprep.subr.mxu0 0.0
    %4486 = vmatpush1.msra.mxu0 0.0
    %4487 = vmatprep.subr.mxu0 0.0
    %4488 = vmatpush1.msra.mxu0 0.0
    %4489 = vmatprep.subr.mxu0 0.0
    %4490 = vmatpush1.msra.mxu0 0.0
    %4491 = vmatprep.subr.mxu0 0.0
    %4492 = vmatpush1.msra.mxu0 0.0
    %4493 = vmatprep.subr.mxu0 0.0
    %4494 = vmatpush1.msra.mxu0 0.0
    %4495 = vmatprep.subr.mxu0 0.0
    %4496 = vmatpush1.msra.mxu0 0.0
    %4497 = vmatprep.subr.mxu0 0.0
    %4498 = vmatpush1.msra.mxu0 0.0
    %4499 = vmatprep.subr.mxu0 0.0
    %4500 = vmatpush1.msra.mxu0 0.0
    %4501 = vmatprep.subr.mxu0 0.0
    %4502 = vmatpush1.msra.mxu0 0.0
    %4503 = vmatprep.subr.mxu0 0.0
    %4504 = vmatpush1.msra.mxu0 0.0
    %4505 = vmatprep.subr.mxu0 0.0
    %4506 = vmatpush1.msra.mxu0 0.0
    %4507 = vmatprep.subr.mxu0 0.0
    %4508 = vmatpush1.msra.mxu0 0.0
    %4509 = vmatprep.subr.mxu0 0.0
    %4510 = vmatpush1.msra.mxu0 0.0
    %4511 = vmatprep.subr.mxu0 0.0
    %4512 = vmatpush1.msra.mxu0 0.0
    %4513 = vmatprep.subr.mxu0 0.0
    %4514 = vmatpush1.msra.mxu0 0.0
    %4515 = vmatprep.subr.mxu0 0.0
    %4516 = vmatpush1.msra.mxu0 0.0
    %4517 = vmatprep.subr.mxu0 0.0
    %4518 = vmatpush1.msra.mxu0 0.0
    %4519 = vmatprep.mubr.f32.mxu0 0.0
    %4520 = vmatmul.mubr.f32.gmra.mrb[0].mxu0 %v4453
    %v4521 = vpop.f32.mrb[0].mxu0
    %v4522 = vadd.f32 %v4451, %v4521
    %v4523 = vpop.f32.mrb[0].mxu0
    %4524 = vdwg.mxu0
    %v4525 = vadd.f32 %v4522, %v2544
    %s4526 = scalar_lea.vmem [#allocation2], 6
    %4527 = vst [vmem:[%s4526] sm:$0x3] %v4525
    %4528 = vmatprep.subr.mxu0 0.0
    %4529 = vmatpush1.msra.mxu0 %v102
    %4530 = vmatprep.subr.mxu0 0.0
    %4531 = vmatpush1.msra.mxu0 %v103
    %4532 = vmatprep.subr.mxu0 0.0
    %4533 = vmatpush1.msra.mxu0 %v104
    %4534 = vmatprep.subr.mxu0 0.0
    %4535 = vmatpush1.msra.mxu0 %v105
    %4536 = vmatprep.subr.mxu0 0.0
    %4537 = vmatpush1.msra.mxu0 0.0
    %4538 = vmatprep.subr.mxu0 0.0
    %4539 = vmatpush1.msra.mxu0 0.0
    %4540 = vmatprep.subr.mxu0 0.0
    %4541 = vmatpush1.msra.mxu0 0.0
    %4542 = vmatprep.subr.mxu0 0.0
    %4543 = vmatpush1.msra.mxu0 0.0
    %4544 = vmatprep.subr.mxu0 0.0
    %4545 = vmatpush1.msra.mxu0 0.0
    %4546 = vmatprep.subr.mxu0 0.0
    %4547 = vmatpush1.msra.mxu0 0.0
    %4548 = vmatprep.subr.mxu0 0.0
    %4549 = vmatpush1.msra.mxu0 0.0
    %4550 = vmatprep.subr.mxu0 0.0
    %4551 = vmatpush1.msra.mxu0 0.0
    %4552 = vmatprep.subr.mxu0 0.0
    %4553 = vmatpush1.msra.mxu0 0.0
    %4554 = vmatprep.subr.mxu0 0.0
    %4555 = vmatpush1.msra.mxu0 0.0
    %4556 = vmatprep.subr.mxu0 0.0
    %4557 = vmatpush1.msra.mxu0 0.0
    %4558 = vmatprep.subr.mxu0 0.0
    %4559 = vmatpush1.msra.mxu0 0.0
    %4560 = vmatprep.subr.mxu0 0.0
    %4561 = vmatpush1.msra.mxu0 0.0
    %4562 = vmatprep.subr.mxu0 0.0
    %4563 = vmatpush1.msra.mxu0 0.0
    %4564 = vmatprep.subr.mxu0 0.0
    %4565 = vmatpush1.msra.mxu0 0.0
    %4566 = vmatprep.subr.mxu0 0.0
    %4567 = vmatpush1.msra.mxu0 0.0
    %4568 = vmatprep.subr.mxu0 0.0
    %4569 = vmatpush1.msra.mxu0 0.0
    %4570 = vmatprep.subr.mxu0 0.0
    %4571 = vmatpush1.msra.mxu0 0.0
    %4572 = vmatprep.subr.mxu0 0.0
    %4573 = vmatpush1.msra.mxu0 0.0
    %4574 = vmatprep.subr.mxu0 0.0
    %4575 = vmatpush1.msra.mxu0 0.0
    %4576 = vmatprep.subr.mxu0 0.0
    %4577 = vmatpush1.msra.mxu0 0.0
    %4578 = vmatprep.subr.mxu0 0.0
    %4579 = vmatpush1.msra.mxu0 0.0
    %4580 = vmatprep.subr.mxu0 0.0
    %4581 = vmatpush1.msra.mxu0 0.0
    %4582 = vmatprep.subr.mxu0 0.0
    %4583 = vmatpush1.msra.mxu0 0.0
    %4584 = vmatprep.subr.mxu0 0.0
    %4585 = vmatpush1.msra.mxu0 0.0
    %4586 = vmatprep.subr.mxu0 0.0
    %4587 = vmatpush1.msra.mxu0 0.0
    %4588 = vmatprep.subr.mxu0 0.0
    %4589 = vmatpush1.msra.mxu0 0.0
    %4590 = vmatprep.subr.mxu0 0.0
    %4591 = vmatpush1.msra.mxu0 0.0
    %4592 = vmatprep.mubr.f32.mxu0 0.0
    %4593 = vmatmul.mubr.f32.gmra.mrb[0].mxu0 %v4453
    %v4594 = vpop.f32.mrb[0].mxu0
    %v4595 = vadd.f32 0.0, %v4594
    %v4596 = vpop.f32.mrb[0].mxu0
    %4597 = vdwg.mxu0
    %4598 = vmatprep.subr.mxu0 0.0
    %4599 = vmatpush1.msra.mxu0 %v54
    %4600 = vmatprep.subr.mxu0 0.0
    %4601 = vmatpush1.msra.mxu0 %v55
    %4602 = vmatprep.subr.mxu0 0.0
    %4603 = vmatpush1.msra.mxu0 %v56
    %4604 = vmatprep.subr.mxu0 0.0
    %4605 = vmatpush1.msra.mxu0 %v57
    %4606 = vmatprep.subr.mxu0 0.0
    %4607 = vmatpush1.msra.mxu0 %v58
    %4608 = vmatprep.subr.mxu0 0.0
    %4609 = vmatpush1.msra.mxu0 %v59
    %4610 = vmatprep.subr.mxu0 0.0
    %4611 = vmatpush1.msra.mxu0 %v60
    %4612 = vmatprep.subr.mxu0 0.0
    %4613 = vmatpush1.msra.mxu0 %v61
    %4614 = vmatprep.subr.mxu0 0.0
    %4615 = vmatpush1.msra.mxu0 %v62
    %4616 = vmatprep.subr.mxu0 0.0
    %4617 = vmatpush1.msra.mxu0 %v63
    %4618 = vmatprep.subr.mxu0 0.0
    %4619 = vmatpush1.msra.mxu0 %v64
    %4620 = vmatprep.subr.mxu0 0.0
    %4621 = vmatpush1.msra.mxu0 %v65
    %4622 = vmatprep.subr.mxu0 0.0
    %4623 = vmatpush1.msra.mxu0 %v66
    %4624 = vmatprep.subr.mxu0 0.0
    %4625 = vmatpush1.msra.mxu0 %v67
    %4626 = vmatprep.subr.mxu0 0.0
    %4627 = vmatpush1.msra.mxu0 %v68
    %4628 = vmatprep.subr.mxu0 0.0
    %4629 = vmatpush1.msra.mxu0 %v69
    %4630 = vmatprep.subr.mxu0 0.0
    %4631 = vmatpush1.msra.mxu0 0.0
    %4632 = vmatprep.subr.mxu0 0.0
    %4633 = vmatpush1.msra.mxu0 0.0
    %4634 = vmatprep.subr.mxu0 0.0
    %4635 = vmatpush1.msra.mxu0 0.0
    %4636 = vmatprep.subr.mxu0 0.0
    %4637 = vmatpush1.msra.mxu0 0.0
    %4638 = vmatprep.subr.mxu0 0.0
    %4639 = vmatpush1.msra.mxu0 0.0
    %4640 = vmatprep.subr.mxu0 0.0
    %4641 = vmatpush1.msra.mxu0 0.0
    %4642 = vmatprep.subr.mxu0 0.0
    %4643 = vmatpush1.msra.mxu0 0.0
    %4644 = vmatprep.subr.mxu0 0.0
    %4645 = vmatpush1.msra.mxu0 0.0
    %4646 = vmatprep.subr.mxu0 0.0
    %4647 = vmatpush1.msra.mxu0 0.0
    %4648 = vmatprep.subr.mxu0 0.0
    %4649 = vmatpush1.msra.mxu0 0.0
    %4650 = vmatprep.subr.mxu0 0.0
    %4651 = vmatpush1.msra.mxu0 0.0
    %4652 = vmatprep.subr.mxu0 0.0
    %4653 = vmatpush1.msra.mxu0 0.0
    %4654 = vmatprep.subr.mxu0 0.0
    %4655 = vmatpush1.msra.mxu0 0.0
    %4656 = vmatprep.subr.mxu0 0.0
    %4657 = vmatpush1.msra.mxu0 0.0
    %4658 = vmatprep.subr.mxu0 0.0
    %4659 = vmatpush1.msra.mxu0 0.0
    %4660 = vmatprep.subr.mxu0 0.0
    %4661 = vmatpush1.msra.mxu0 0.0
    %4662 = vmatprep.mubr.f32.mxu0 0.0
    %4663 = vmatmul.mubr.f32.gmra.mrb[0].mxu0 %v4525
    %v4664 = vpop.f32.mrb[0].mxu0
    %v4665 = vadd.f32 %v4595, %v4664
    %v4666 = vpop.f32.mrb[0].mxu0
    %4667 = vdwg.mxu0
    %v4668 = vadd.f32 %v4665, %v284
    %v4669 = vxor.u32 %v4668, 2147483648
    %v4670 = vmul.f32 %v4669, 1.442695
    %v4671 = vpow.pop %v4670
    %v4672 = vadd.f32 %v4671, 1.0
    %v4673 = vrcp.pop %v4672
    %v4674 = vmul.f32 1.0, %v4673
    %4675 = vmatprep.subr.mxu0 0.0
    %4676 = vmatpush1.msra.mxu0 %v106
    %4677 = vmatprep.subr.mxu0 0.0
    %4678 = vmatpush1.msra.mxu0 %v107
    %4679 = vmatprep.subr.mxu0 0.0
    %4680 = vmatpush1.msra.mxu0 %v108
    %4681 = vmatprep.subr.mxu0 0.0
    %4682 = vmatpush1.msra.mxu0 %v109
    %4683 = vmatprep.subr.mxu0 0.0
    %4684 = vmatpush1.msra.mxu0 0.0
    %4685 = vmatprep.subr.mxu0 0.0
    %4686 = vmatpush1.msra.mxu0 0.0
    %4687 = vmatprep.subr.mxu0 0.0
    %4688 = vmatpush1.msra.mxu0 0.0
    %4689 = vmatprep.subr.mxu0 0.0
    %4690 = vmatpush1.msra.mxu0 0.0
    %4691 = vmatprep.subr.mxu0 0.0
    %4692 = vmatpush1.msra.mxu0 0.0
    %4693 = vmatprep.subr.mxu0 0.0
    %4694 = vmatpush1.msra.mxu0 0.0
    %4695 = vmatprep.subr.mxu0 0.0
    %4696 = vmatpush1.msra.mxu0 0.0
    %4697 = vmatprep.subr.mxu0 0.0
    %4698 = vmatpush1.msra.mxu0 0.0
    %4699 = vmatprep.subr.mxu0 0.0
    %4700 = vmatpush1.msra.mxu0 0.0
    %4701 = vmatprep.subr.mxu0 0.0
    %4702 = vmatpush1.msra.mxu0 0.0
    %4703 = vmatprep.subr.mxu0 0.0
    %4704 = vmatpush1.msra.mxu0 0.0
    %4705 = vmatprep.subr.mxu0 0.0
    %4706 = vmatpush1.msra.mxu0 0.0
    %4707 = vmatprep.subr.mxu0 0.0
    %4708 = vmatpush1.msra.mxu0 0.0
    %4709 = vmatprep.subr.mxu0 0.0
    %4710 = vmatpush1.msra.mxu0 0.0
    %4711 = vmatprep.subr.mxu0 0.0
    %4712 = vmatpush1.msra.mxu0 0.0
    %4713 = vmatprep.subr.mxu0 0.0
    %4714 = vmatpush1.msra.mxu0 0.0
    %4715 = vmatprep.subr.mxu0 0.0
    %4716 = vmatpush1.msra.mxu0 0.0
    %4717 = vmatprep.subr.mxu0 0.0
    %4718 = vmatpush1.msra.mxu0 0.0
    %4719 = vmatprep.subr.mxu0 0.0
    %4720 = vmatpush1.msra.mxu0 0.0
    %4721 = vmatprep.subr.mxu0 0.0
    %4722 = vmatpush1.msra.mxu0 0.0
    %4723 = vmatprep.subr.mxu0 0.0
    %4724 = vmatpush1.msra.mxu0 0.0
    %4725 = vmatprep.subr.mxu0 0.0
    %4726 = vmatpush1.msra.mxu0 0.0
    %4727 = vmatprep.subr.mxu0 0.0
    %4728 = vmatpush1.msra.mxu0 0.0
    %4729 = vmatprep.subr.mxu0 0.0
    %4730 = vmatpush1.msra.mxu0 0.0
    %4731 = vmatprep.subr.mxu0 0.0
    %4732 = vmatpush1.msra.mxu0 0.0
    %4733 = vmatprep.subr.mxu0 0.0
    %4734 = vmatpush1.msra.mxu0 0.0
    %4735 = vmatprep.subr.mxu0 0.0
    %4736 = vmatpush1.msra.mxu0 0.0
    %4737 = vmatprep.subr.mxu0 0.0
    %4738 = vmatpush1.msra.mxu0 0.0
    %4739 = vmatprep.mubr.f32.mxu0 0.0
    %4740 = vmatmul.mubr.f32.gmra.mrb[0].mxu0 %v4453
    %v4741 = vpop.f32.mrb[0].mxu0
    %v4742 = vadd.f32 0.0, %v4741
    %v4743 = vpop.f32.mrb[0].mxu0
    %4744 = vdwg.mxu0
    %4745 = vmatprep.subr.mxu0 0.0
    %4746 = vmatpush1.msra.mxu0 %v70
    %4747 = vmatprep.subr.mxu0 0.0
    %4748 = vmatpush1.msra.mxu0 %v71
    %4749 = vmatprep.subr.mxu0 0.0
    %4750 = vmatpush1.msra.mxu0 %v72
    %4751 = vmatprep.subr.mxu0 0.0
    %4752 = vmatpush1.msra.mxu0 %v73
    %4753 = vmatprep.subr.mxu0 0.0
    %4754 = vmatpush1.msra.mxu0 %v74
    %4755 = vmatprep.subr.mxu0 0.0
    %4756 = vmatpush1.msra.mxu0 %v75
    %4757 = vmatprep.subr.mxu0 0.0
    %4758 = vmatpush1.msra.mxu0 %v76
    %4759 = vmatprep.subr.mxu0 0.0
    %4760 = vmatpush1.msra.mxu0 %v77
    %4761 = vmatprep.subr.mxu0 0.0
    %4762 = vmatpush1.msra.mxu0 %v78
    %4763 = vmatprep.subr.mxu0 0.0
    %4764 = vmatpush1.msra.mxu0 %v79
    %4765 = vmatprep.subr.mxu0 0.0
    %4766 = vmatpush1.msra.mxu0 %v80
    %4767 = vmatprep.subr.mxu0 0.0
    %4768 = vmatpush1.msra.mxu0 %v81
    %4769 = vmatprep.subr.mxu0 0.0
    %4770 = vmatpush1.msra.mxu0 %v82
    %4771 = vmatprep.subr.mxu0 0.0
    %4772 = vmatpush1.msra.mxu0 %v83
    %4773 = vmatprep.subr.mxu0 0.0
    %4774 = vmatpush1.msra.mxu0 %v84
    %4775 = vmatprep.subr.mxu0 0.0
    %4776 = vmatpush1.msra.mxu0 %v85
    %4777 = vmatprep.subr.mxu0 0.0
    %4778 = vmatpush1.msra.mxu0 0.0
    %4779 = vmatprep.subr.mxu0 0.0
    %4780 = vmatpush1.msra.mxu0 0.0
    %4781 = vmatprep.subr.mxu0 0.0
    %4782 = vmatpush1.msra.mxu0 0.0
    %4783 = vmatprep.subr.mxu0 0.0
    %4784 = vmatpush1.msra.mxu0 0.0
    %4785 = vmatprep.subr.mxu0 0.0
    %4786 = vmatpush1.msra.mxu0 0.0
    %4787 = vmatprep.subr.mxu0 0.0
    %4788 = vmatpush1.msra.mxu0 0.0
    %4789 = vmatprep.subr.mxu0 0.0
    %4790 = vmatpush1.msra.mxu0 0.0
    %4791 = vmatprep.subr.mxu0 0.0
    %4792 = vmatpush1.msra.mxu0 0.0
    %4793 = vmatprep.subr.mxu0 0.0
    %4794 = vmatpush1.msra.mxu0 0.0
    %4795 = vmatprep.subr.mxu0 0.0
    %4796 = vmatpush1.msra.mxu0 0.0
    %4797 = vmatprep.subr.mxu0 0.0
    %4798 = vmatpush1.msra.mxu0 0.0
    %4799 = vmatprep.subr.mxu0 0.0
    %4800 = vmatpush1.msra.mxu0 0.0
    %4801 = vmatprep.subr.mxu0 0.0
    %4802 = vmatpush1.msra.mxu0 0.0
    %4803 = vmatprep.subr.mxu0 0.0
    %4804 = vmatpush1.msra.mxu0 0.0
    %4805 = vmatprep.subr.mxu0 0.0
    %4806 = vmatpush1.msra.mxu0 0.0
    %4807 = vmatprep.subr.mxu0 0.0
    %4808 = vmatpush1.msra.mxu0 0.0
    %4809 = vmatprep.mubr.f32.mxu0 0.0
    %4810 = vmatmul.mubr.f32.gmra.mrb[0].mxu0 %v4525
    %v4811 = vpop.f32.mrb[0].mxu0
    %v4812 = vadd.f32 %v4742, %v4811
    %v4813 = vpop.f32.mrb[0].mxu0
    %4814 = vdwg.mxu0
    %v4815 = vadd.f32 %v4812, %v437
    %v4816 = vxor.u32 %v4815, 2147483648
    %v4817 = vmul.f32 %v4816, 1.442695
    %v4818 = vpow.pop %v4817
    %v4819 = vadd.f32 %v4818, 1.0
    %v4820 = vrcp.pop %v4819
    %v4821 = vmul.f32 1.0, %v4820
    %4822 = vmatprep.subr.mxu0 0.0
    %4823 = vmatpush1.msra.mxu0 %v86
    %4824 = vmatprep.subr.mxu0 0.0
    %4825 = vmatpush1.msra.mxu0 %v87
    %4826 = vmatprep.subr.mxu0 0.0
    %4827 = vmatpush1.msra.mxu0 %v88
    %4828 = vmatprep.subr.mxu0 0.0
    %4829 = vmatpush1.msra.mxu0 %v89
    %4830 = vmatprep.subr.mxu0 0.0
    %4831 = vmatpush1.msra.mxu0 %v90
    %4832 = vmatprep.subr.mxu0 0.0
    %4833 = vmatpush1.msra.mxu0 %v91
    %4834 = vmatprep.subr.mxu0 0.0
    %4835 = vmatpush1.msra.mxu0 %v92
    %4836 = vmatprep.subr.mxu0 0.0
    %4837 = vmatpush1.msra.mxu0 %v93
    %4838 = vmatprep.subr.mxu0 0.0
    %4839 = vmatpush1.msra.mxu0 %v94
    %4840 = vmatprep.subr.mxu0 0.0
    %4841 = vmatpush1.msra.mxu0 %v95
    %4842 = vmatprep.subr.mxu0 0.0
    %4843 = vmatpush1.msra.mxu0 %v96
    %4844 = vmatprep.subr.mxu0 0.0
    %4845 = vmatpush1.msra.mxu0 %v97
    %4846 = vmatprep.subr.mxu0 0.0
    %4847 = vmatpush1.msra.mxu0 %v98
    %4848 = vmatprep.subr.mxu0 0.0
    %4849 = vmatpush1.msra.mxu0 %v99
    %4850 = vmatprep.subr.mxu0 0.0
    %4851 = vmatpush1.msra.mxu0 %v100
    %4852 = vmatprep.subr.mxu0 0.0
    %4853 = vmatpush1.msra.mxu0 %v101
    %4854 = vmatprep.subr.mxu0 0.0
    %4855 = vmatpush1.msra.mxu0 0.0
    %4856 = vmatprep.subr.mxu0 0.0
    %4857 = vmatpush1.msra.mxu0 0.0
    %4858 = vmatprep.subr.mxu0 0.0
    %4859 = vmatpush1.msra.mxu0 0.0
    %4860 = vmatprep.subr.mxu0 0.0
    %4861 = vmatpush1.msra.mxu0 0.0
    %4862 = vmatprep.subr.mxu0 0.0
    %4863 = vmatpush1.msra.mxu0 0.0
    %4864 = vmatprep.subr.mxu0 0.0
    %4865 = vmatpush1.msra.mxu0 0.0
    %4866 = vmatprep.subr.mxu0 0.0
    %4867 = vmatpush1.msra.mxu0 0.0
    %4868 = vmatprep.subr.mxu0 0.0
    %4869 = vmatpush1.msra.mxu0 0.0
    %4870 = vmatprep.subr.mxu0 0.0
    %4871 = vmatpush1.msra.mxu0 0.0
    %4872 = vmatprep.subr.mxu0 0.0
    %4873 = vmatpush1.msra.mxu0 0.0
    %4874 = vmatprep.subr.mxu0 0.0
    %4875 = vmatpush1.msra.mxu0 0.0
    %4876 = vmatprep.subr.mxu0 0.0
    %4877 = vmatpush1.msra.mxu0 0.0
    %4878 = vmatprep.subr.mxu0 0.0
    %4879 = vmatpush1.msra.mxu0 0.0
    %4880 = vmatprep.subr.mxu0 0.0
    %4881 = vmatpush1.msra.mxu0 0.0
    %4882 = vmatprep.subr.mxu0 0.0
    %4883 = vmatpush1.msra.mxu0 0.0
    %4884 = vmatprep.subr.mxu0 0.0
    %4885 = vmatpush1.msra.mxu0 0.0
    %4886 = vmatprep.mubr.f32.mxu0 0.0
    %4887 = vmatmul.mubr.f32.gmra.mrb[0].mxu0 %v4525
    %v4888 = vpop.f32.mrb[0].mxu0
    %v4889 = vadd.f32 %v450, %v4888
    %v4890 = vpop.f32.mrb[0].mxu0
    %4891 = vdwg.mxu0
    %4892 = vmatprep.subr.mxu0 0.0
    %4893 = vmatpush1.msra.mxu0 %v110
    %4894 = vmatprep.subr.mxu0 0.0
    %4895 = vmatpush1.msra.mxu0 %v111
    %4896 = vmatprep.subr.mxu0 0.0
    %4897 = vmatpush1.msra.mxu0 %v112
    %4898 = vmatprep.subr.mxu0 0.0
    %4899 = vmatpush1.msra.mxu0 %v113
    %4900 = vmatprep.subr.mxu0 0.0
    %4901 = vmatpush1.msra.mxu0 0.0
    %4902 = vmatprep.subr.mxu0 0.0
    %4903 = vmatpush1.msra.mxu0 0.0
    %4904 = vmatprep.subr.mxu0 0.0
    %4905 = vmatpush1.msra.mxu0 0.0
    %4906 = vmatprep.subr.mxu0 0.0
    %4907 = vmatpush1.msra.mxu0 0.0
    %4908 = vmatprep.subr.mxu0 0.0
    %4909 = vmatpush1.msra.mxu0 0.0
    %4910 = vmatprep.subr.mxu0 0.0
    %4911 = vmatpush1.msra.mxu0 0.0
    %4912 = vmatprep.subr.mxu0 0.0
    %4913 = vmatpush1.msra.mxu0 0.0
    %4914 = vmatprep.subr.mxu0 0.0
    %4915 = vmatpush1.msra.mxu0 0.0
    %4916 = vmatprep.subr.mxu0 0.0
    %4917 = vmatpush1.msra.mxu0 0.0
    %4918 = vmatprep.subr.mxu0 0.0
    %4919 = vmatpush1.msra.mxu0 0.0
    %4920 = vmatprep.subr.mxu0 0.0
    %4921 = vmatpush1.msra.mxu0 0.0
    %4922 = vmatprep.subr.mxu0 0.0
    %4923 = vmatpush1.msra.mxu0 0.0
    %4924 = vmatprep.subr.mxu0 0.0
    %4925 = vmatpush1.msra.mxu0 0.0
    %4926 = vmatprep.subr.mxu0 0.0
    %4927 = vmatpush1.msra.mxu0 0.0
    %4928 = vmatprep.subr.mxu0 0.0
    %4929 = vmatpush1.msra.mxu0 0.0
    %4930 = vmatprep.subr.mxu0 0.0
    %4931 = vmatpush1.msra.mxu0 0.0
    %4932 = vmatprep.subr.mxu0 0.0
    %4933 = vmatpush1.msra.mxu0 0.0
    %4934 = vmatprep.subr.mxu0 0.0
    %4935 = vmatpush1.msra.mxu0 0.0
    %4936 = vmatprep.subr.mxu0 0.0
    %4937 = vmatpush1.msra.mxu0 0.0
    %4938 = vmatprep.subr.mxu0 0.0
    %4939 = vmatpush1.msra.mxu0 0.0
    %4940 = vmatprep.subr.mxu0 0.0
    %4941 = vmatpush1.msra.mxu0 0.0
    %4942 = vmatprep.subr.mxu0 0.0
    %4943 = vmatpush1.msra.mxu0 0.0
    %4944 = vmatprep.subr.mxu0 0.0
    %4945 = vmatpush1.msra.mxu0 0.0
    %4946 = vmatprep.subr.mxu0 0.0
    %4947 = vmatpush1.msra.mxu0 0.0
    %4948 = vmatprep.subr.mxu0 0.0
    %4949 = vmatpush1.msra.mxu0 0.0
    %4950 = vmatprep.subr.mxu0 0.0
    %4951 = vmatpush1.msra.mxu0 0.0
    %4952 = vmatprep.subr.mxu0 0.0
    %4953 = vmatpush1.msra.mxu0 0.0
    %4954 = vmatprep.subr.mxu0 0.0
    %4955 = vmatpush1.msra.mxu0 0.0
    %4956 = vmatprep.mubr.f32.mxu0 0.0
    %4957 = vmatmul.mubr.f32.gmra.mrb[0].mxu0 %v4453
    %v4958 = vpop.f32.mrb[0].mxu0
    %v4959 = vadd.f32 %v526, %v4958
    %v4960 = vpop.f32.mrb[0].mxu0
    %4961 = vdwg.mxu0
    %v4962 = vmul.f32 %v4674, %v4959
    %v4963 = vadd.f32 %v4889, %v4962
    %v4964 = vtanh.pop %v4963
    %v4965 = vsub.f32 1.0, %v4821
    %v4966 = vmul.f32 %v4965, %v4964
    %v4967 = vmul.f32 %v4821, %v4308
    %v4968 = vadd.f32 %v4966, %v4967
    %v4971 = vunpack.c.l.s4 1966171168
    %v4972 = vunpack.c.0.s8 %v4971
    %v4973 = vlaneseq
    %v4974 = vshrl.u32 %v4973, 7
    %v4975 = vsub.s32 %v4972, %v4974
    %v4976 = vrot.slane %v4968, %v4975
    %v4977 = vcombine.high %v4976, %v4976
    %v4979 = vunpack.c.l.s4 1966171168
    %v4980 = vunpack.c.0.s8 %v4979
    %v4981 = vlaneseq
    %v4982 = vshrl.u32 %v4981, 7
    %v4983 = vsub.s32 %v4980, %v4982
    %v4984 = vrot.slane %v4976, %v4983
    %v4986 = vunpack.c.l.s4 1966171168
    %v4987 = vunpack.c.0.s8 %v4986
    %v4988 = vlaneseq
    %v4989 = vshrl.u32 %v4988, 7
    %v4990 = vsub.s32 %v4987, %v4989
    %v4991 = vrot.slane %v4977, %v4990
    %v4992 = vlaneseq
    %v4993 = vshrl.u32 %v4992, 7
    %v4994 = vsub.s32 0, %v4993
    %v4995 = vrot.slane %v4984, %v4994
    %v4996 = vlaneseq
    %v4997 = vshrl.u32 %v4996, 7
    %v4998 = vsub.s32 0, %v4997
    %v4999 = vrot.slane %v4991, %v4998
    %v5002 = vmul.f32 %v118, %v4995
    %v5003 = vmul.f32 %v119, %v4995
    %v5004 = vmul.f32 %v120, %v4999
    %v5005 = vmul.f32 %v121, %v4999
    %v5006 = vsel %vm136, %v5002, 0.0
    %5007 = vadd.xlane.f32.xlu0 %v5006
    %v5008 = vpop.xlane.xlu0 %5007
    %v5009 = vsel %vm2357, %v5003, 0.0
    %5010 = vadd.xlane.f32.xlu0 %v5009
    %v5011 = vpop.xlane.xlu0 %5010
    %v5012 = vsel %vm136, %v5004, 0.0
    %5013 = vadd.xlane.f32.xlu0 %v5012
    %v5014 = vpop.xlane.xlu0 %5013
    %v5015 = vsel %vm2357, %v5005, 0.0
    %5016 = vadd.xlane.f32.xlu0 %v5015
    %v5017 = vpop.xlane.xlu0 %5016
    %v5022 = vlaneseq
    %v5023 = vshrl.u32 %v5022, 7
    %v5024 = vsub.s32 %v132, %v5023
    %v5025 = vrot.slane %v5008, %v5024
    %v5026 = vlaneseq
    %v5027 = vshrl.u32 %v5026, 7
    %v5028 = vsub.s32 %v2375, %v5027
    %v5029 = vrot.slane %v5011, %v5028
    %v5030 = vsel %vm2380, %v5029, %v5025
    %v5031 = vlaneseq
    %v5032 = vshrl.u32 %v5031, 7
    %v5033 = vsub.s32 %v132, %v5032
    %v5034 = vrot.slane %v5014, %v5033
    %v5035 = vlaneseq
    %v5036 = vshrl.u32 %v5035, 7
    %v5037 = vsub.s32 %v2375, %v5036
    %v5038 = vrot.slane %v5017, %v5037
    %v5039 = vsel %vm2380, %v5038, %v5034
    %v5040 = vsel %vm2391, %v5039, %v5030
    %v5042 = vsel %vm133, %v5040, -1e+30
    %v5043 = vsel %vm2395, %v5042, -inf
    %5044 = vmax.xlane.f32.xlu0 %v5043
    %v5045 = vpop.xlane.xlu0 %5044
    %v5046 = vsub.f32 %v5042, %v5045
    %v5047 = vmul.f32 %v5046, 1.442695
    %v5048 = vpow.pop %v5047
    %v5049 = vsel %vm2395, %v5048, 0.0
    %5050 = vadd.xlane.f32.xlu0 %v5049
    %v5051 = vpop.xlane.xlu0 %5050
    %v5052 = vrcp.pop %v5051
    %v5053 = vmul.f32 %v5048, %v5052
    %v5054 = vsel %vm2407, %v5040, -1e+30
    %v5055 = vsel %vm2395, %v5054, -inf
    %5056 = vmax.xlane.f32.xlu0 %v5055
    %v5057 = vpop.xlane.xlu0 %5056
    %v5058 = vsub.f32 %v5054, %v5057
    %v5059 = vmul.f32 %v5058, 1.442695
    %v5060 = vpow.pop %v5059
    %v5061 = vsel %vm2395, %v5060, 0.0
    %5062 = vadd.xlane.f32.xlu0 %v5061
    %v5063 = vpop.xlane.xlu0 %5062
    %v5064 = vrcp.pop %v5063
    %v5065 = vmul.f32 %v5060, %v5064
    %v5066 = vadd.f32 %v5053, %v5065
    %v5067 = vlaneseq
    %v5068 = vshrl.u32 %v5067, 7
    %v5069 = vsub.s32 0, %v5068
    %v5070 = vrot.slane %v5066, %v5069
    %5072 = vbcast.lane.b32.xlu0 %v5070, 256
    %v5073 = vpop.permute.xlu0 %5072
    %s5075 = sor.u32 256, 8
    %5076 = vbcast.lane.b32.xlu0 %v5070, %s5075
    %v5077 = vpop.permute.xlu0 %5076
    %v5078 = vlaneseq
    %v5079 = vshrl.u32 %v5078, 7
    %v5080 = vsub.s32 1, %v5079
    %v5081 = vrot.slane %v5066, %v5080
    %5083 = vbcast.lane.b32.xlu0 %v5081, 256
    %v5084 = vpop.permute.xlu0 %5083
    %s5086 = sor.u32 256, 8
    %5087 = vbcast.lane.b32.xlu0 %v5081, %s5086
    %v5088 = vpop.permute.xlu0 %5087
    %v5089 = vmul.f32 %v122, %v5073
    %v5090 = vmul.f32 %v123, %v5077
    %v5091 = vmul.f32 %v124, %v5084
    %v5092 = vmul.f32 %v125, %v5088
    %v5093 = vsel %vm2447, %v5090, 0.0
    %v5094 = vadd.f32 %v5089, %v5093
    %v5095 = vrot.slane %v5094, 4
    %v5096 = vadd.f32 %v5094, %v5095
    %v5097 = vrot.slane %v5096, 2
    %v5098 = vadd.f32 %v5096, %v5097
    %v5099 = vrot.slane %v5098, 1
    %v5100 = vadd.f32 %v5098, %v5099
    %v5101 = vsel %vm2447, %v5092, 0.0
    %v5102 = vadd.f32 %v5091, %v5101
    %v5103 = vrot.slane %v5102, 4
    %v5104 = vadd.f32 %v5102, %v5103
    %v5105 = vrot.slane %v5104, 2
    %v5106 = vadd.f32 %v5104, %v5105
    %v5107 = vrot.slane %v5106, 1
    %v5108 = vadd.f32 %v5106, %v5107
    %v5111 = vsel %vm2391, %v5108, %v5100
    %v5113 = vsel %vm136, %v4968, 0
    %5115 = vmatprep.subr.mxu0 0.0
    %5116 = vmatpush1.msra.mxu0 %v126
    %5117 = vmatprep.subr.mxu0 0.0
    %5118 = vmatpush1.msra.mxu0 %v127
    %5119 = vmatprep.subr.mxu0 0.0
    %5120 = vmatpush1.msra.mxu0 %v128
    %5121 = vmatprep.subr.mxu0 0.0
    %5122 = vmatpush1.msra.mxu0 %v129
    %5123 = vmatprep.subr.mxu0 0.0
    %5124 = vmatpush1.msra.mxu0 0.0
    %5125 = vmatprep.subr.mxu0 0.0
    %5126 = vmatpush1.msra.mxu0 0.0
    %5127 = vmatprep.subr.mxu0 0.0
    %5128 = vmatpush1.msra.mxu0 0.0
    %5129 = vmatprep.subr.mxu0 0.0
    %5130 = vmatpush1.msra.mxu0 0.0
    %5131 = vmatprep.subr.mxu0 0.0
    %5132 = vmatpush1.msra.mxu0 0.0
    %5133 = vmatprep.subr.mxu0 0.0
    %5134 = vmatpush1.msra.mxu0 0.0
    %5135 = vmatprep.subr.mxu0 0.0
    %5136 = vmatpush1.msra.mxu0 0.0
    %5137 = vmatprep.subr.mxu0 0.0
    %5138 = vmatpush1.msra.mxu0 0.0
    %5139 = vmatprep.subr.mxu0 0.0
    %5140 = vmatpush1.msra.mxu0 0.0
    %5141 = vmatprep.subr.mxu0 0.0
    %5142 = vmatpush1.msra.mxu0 0.0
    %5143 = vmatprep.subr.mxu0 0.0
    %5144 = vmatpush1.msra.mxu0 0.0
    %5145 = vmatprep.subr.mxu0 0.0
    %5146 = vmatpush1.msra.mxu0 0.0
    %5147 = vmatprep.subr.mxu0 0.0
    %5148 = vmatpush1.msra.mxu0 0.0
    %5149 = vmatprep.subr.mxu0 0.0
    %5150 = vmatpush1.msra.mxu0 0.0
    %5151 = vmatprep.subr.mxu0 0.0
    %5152 = vmatpush1.msra.mxu0 0.0
    %5153 = vmatprep.subr.mxu0 0.0
    %5154 = vmatpush1.msra.mxu0 0.0
    %5155 = vmatprep.subr.mxu0 0.0
    %5156 = vmatpush1.msra.mxu0 0.0
    %5157 = vmatprep.subr.mxu0 0.0
    %5158 = vmatpush1.msra.mxu0 0.0
    %5159 = vmatprep.subr.mxu0 0.0
    %5160 = vmatpush1.msra.mxu0 0.0
    %5161 = vmatprep.subr.mxu0 0.0
    %5162 = vmatpush1.msra.mxu0 0.0
    %5163 = vmatprep.subr.mxu0 0.0
    %5164 = vmatpush1.msra.mxu0 0.0
    %5165 = vmatprep.subr.mxu0 0.0
    %5166 = vmatpush1.msra.mxu0 0.0
    %5167 = vmatprep.subr.mxu0 0.0
    %5168 = vmatpush1.msra.mxu0 0.0
    %5169 = vmatprep.subr.mxu0 0.0
    %5170 = vmatpush1.msra.mxu0 0.0
    %5171 = vmatprep.subr.mxu0 0.0
    %5172 = vmatpush1.msra.mxu0 0.0
    %5173 = vmatprep.subr.mxu0 0.0
    %5174 = vmatpush1.msra.mxu0 0.0
    %5175 = vmatprep.subr.mxu0 0.0
    %5176 = vmatpush1.msra.mxu0 0.0
    %5177 = vmatprep.subr.mxu0 0.0
    %5178 = vmatpush1.msra.mxu0 0.0
    %5179 = vmatprep.mubr.f32.mxu0 0.0
    %5180 = vmatmul.mubr.f32.gmra.mrb[0].mxu0 %v5113
    %v5181 = vpop.f32.mrb[0].mxu0
    %v5182 = vadd.f32 %v5111, %v5181
    %v5183 = vpop.f32.mrb[0].mxu0
    %5184 = vdwg.mxu0
    %v5185 = vadd.f32 %v5182, %v2544
    %s5186 = scalar_lea.vmem [#allocation2], 8
    %5187 = vst [vmem:[%s5186] sm:$0x3] %v5185
    // Predicated region
    $region66: #{tpu_custom_call.1} parent=1 // pred_check
      _
    $region67: #{tpu_custom_call.1} parent=1 // pred_check_branch
      %5189 = sbr.rel (0) target = $region69
    $region68: #{tpu_custom_call.1} parent=1 // pred_region
      %s5191 = ssub.s32 160, 160
      %5192 = vsyncadd [#allocation3], %s5191
      %s5193 = sshll.u32 [#allocation2], 4
      %s5194 = int_to_ptr.vmem [resolvable:$true] %s5193
      %5199 = dma.vmem_to_hbm [thread:$0]  %s5194, 160, %s16, [#allocation3], 32, 32, 2
    $region69: #{tpu_custom_call.1} parent=1 // pred_fallthru
      _
    // Predicated region
    $region70: #{tpu_custom_call.1} parent=1 // pred_check
      _
    $region71: #{tpu_custom_call.1} parent=1 // pred_check_branch
      %5201 = sbr.rel (0) target = $region73
    $region72: #{tpu_custom_call.1} parent=1 // pred_region
      %5202 = dma.done [#allocation3], 160
    $region73: #{tpu_custom_call.1} parent=1 // pred_fallthru
      _
    %5203 = vsyncpa [#allocation3], 1

</llo_original>
